<compile_context>
chip_gen: v5e
topology: v5e:2x2
jax: 0.10.0
libtpu: 0.0.40
codegen_flags: <defaults>
</compile_context>

<pallas_src>
import jax
import jax.numpy as jnp
from jax.experimental import pallas as pl
from jax.experimental.pallas import tpu as pltpu


_TAPS = tuple((dy, dx) for dy in range(3) for dx in range(3))


def _fused_double_conv_kernel(x_ref, w1_ref, b1_ref, w2_ref, b2_ref, o_ref,
                              xp_s, p1_s, y1p_s, p2_s):
    """Fused y = conv2(relu(conv1(relu(x)))) for one batch element.

    x_ref : (1, H, W, Cin)       input block (NHWC, unpadded)
    w1_ref: (9*Cin, C1)          conv1 weights, tap-major im2col layout
    b1_ref: (1, C1)              conv1 bias (f32)
    w2_ref: (9*C1, C2)           conv2 weights
    b2_ref: (1, C2)              conv2 bias (f32)
    o_ref : (1, C2, H*W)         channel-major, lane-dense output block
    xp_s  : (H+2, W+2, Cin) f32  zero-padded relu(x)
    p1_s  : (H, W, 9*Cin)        im2col patches for conv1 (compute dtype)
    y1p_s : (H+2, W+2, C1) f32   zero-padded relu(conv1 output)
    p2_s  : (H, W, 9*C1)         im2col patches for conv2 (compute dtype)
    """
    _, H, W, Cin = x_ref.shape
    C1 = y1p_s.shape[-1]
    C2 = o_ref.shape[1]
    cdt = p1_s.dtype                       # MXU compute dtype (f32 or bf16)

    # Re-zero the padded scratches each step: the interior is overwritten
    # below and the 1-pixel halo must stay zero. (Zeroing only at step 0 would
    # break when the "parallel" batch axis is split across megacore TCs.)
    xp_s[...] = jnp.zeros_like(xp_s)
    y1p_s[...] = jnp.zeros_like(y1p_s)

    # ---------------- conv1(relu(x)) ----------------
    # 'same' padding: interior of the padded scratch <- relu(x); relu(0)=0 so
    # the zero halo is exactly the zero padding of the relu'd input.
    xp_s[1:H + 1, 1:W + 1, :] = jnp.maximum(x_ref[0], 0.0).astype(xp_s.dtype)

    # im2col: tap (dy,dx) of the padded image becomes one Cin-wide channel
    # block of the patch matrix, so the whole conv is a single MXU matmul.
    for t, (dy, dx) in enumerate(_TAPS):
        p1_s[:, :, t * Cin:(t + 1) * Cin] = (
            xp_s[dy:dy + H, dx:dx + W, :].astype(cdt))
    y1 = jnp.dot(p1_s[...].reshape(H * W, 9 * Cin), w1_ref[...],
                 preferred_element_type=jnp.float32)
    y1 = y1 + b1_ref[...]                                  # (H*W, C1), f32

    # ---------------- conv2(relu(conv1)) ----------------
    # The conv1 activation never leaves VMEM.
    y1p_s[1:H + 1, 1:W + 1, :] = (
        jnp.maximum(y1, 0.0).reshape(H, W, C1).astype(y1p_s.dtype))
    for t, (dy, dx) in enumerate(_TAPS):
        p2_s[:, :, t * C1:(t + 1) * C1] = (
            y1p_s[dy:dy + H, dx:dx + W, :].astype(cdt))
    y2 = jnp.dot(p2_s[...].reshape(H * W, 9 * C1), w2_ref[...],
                 preferred_element_type=jnp.float32)
    y2 = y2 + b2_ref[...]                                  # (H*W, C2), f32

    # Lane-dense, channel-major store: minor dim is H*W (wide / 128-friendly)
    # instead of C2=4, and NCHW comes back with a free reshape in the wrapper.
    o_ref[...] = y2.T.reshape(1, C2, H * W).astype(o_ref.dtype)


def double_decoder_conv(x_nchw, params, *, compute_dtype=jnp.float32):
    """Forward pass matching the PyTorch module. Input/output are NCHW.

    compute_dtype: dtype fed to the MXU (jnp.float32, or jnp.bfloat16 on
    v6e/v7x for the bf16-native MXU). Accumulation and bias add stay f32.
    """
    w1, b1, w2, b2 = params                 # w: (3,3,Cin,C1) / (3,3,C1,C2)
    N, Cin, H, W = x_nchw.shape
    C1 = w1.shape[-1]
    C2 = w2.shape[-1]

    # NCHW -> NHWC so the channel contraction sits on the minor (lane) dim.
    # TODO(synk): accept NHWC at the API boundary to drop this transpose too.
    x_nhwc = jnp.transpose(x_nchw, (0, 2, 3, 1))

    # Pre-flatten the weights to the im2col layout (tap-major, then Cin) and
    # pre-cast them to the MXU compute dtype once, in the wrapper.
    w1f = w1.reshape(9 * Cin, C1).astype(compute_dtype)
    w2f = w2.reshape(9 * C1, C2).astype(compute_dtype)
    b1r = b1.reshape(1, C1).astype(jnp.float32)
    b2r = b2.reshape(1, C2).astype(jnp.float32)

    out_flat = pl.pallas_call(
        _fused_double_conv_kernel,
        out_shape=jax.ShapeDtypeStruct((N, C2, H * W), x_nchw.dtype),
        grid_spec=pltpu.PrefetchScalarGridSpec(
            num_scalar_prefetch=0,
            grid=(N,),
            in_specs=[
                pl.BlockSpec((1, H, W, Cin), lambda n: (n, 0, 0, 0)),
                pl.BlockSpec((9 * Cin, C1), lambda n: (0, 0)),
                pl.BlockSpec((1, C1), lambda n: (0, 0)),
                pl.BlockSpec((9 * C1, C2), lambda n: (0, 0)),
                pl.BlockSpec((1, C2), lambda n: (0, 0)),
            ],
            out_specs=pl.BlockSpec((1, C2, H * W), lambda n: (n, 0, 0)),
            scratch_shapes=[
                pltpu.VMEM((H + 2, W + 2, Cin), jnp.float32),  # padded relu(x)
                pltpu.VMEM((H, W, 9 * Cin), compute_dtype),    # im2col patches 1
                pltpu.VMEM((H + 2, W + 2, C1), jnp.float32),   # padded relu(conv1)
                pltpu.VMEM((H, W, 9 * C1), compute_dtype),     # im2col patches 2
            ],
        ),
        compiler_params=pltpu.CompilerParams(
            dimension_semantics=("parallel",),     # megacore over the batch
            vmem_limit_bytes=32 * 1024 * 1024,     # raise if tiles get large
        ),
    )(x_nhwc, w1f, b1r, w2f, b2r)

    # (N, C2, H*W) -> (N, C2, H, W): already channel-major, so this is a free
    # reshape (no output-side transpose).
    return out_flat.reshape(N, C2, H, W)


def init_params(key, cin, c1, c2, dtype=jnp.float32):
    """PyTorch-style init; weights stored as (3, 3, Cin, Cout)."""
    k1, k2, k3, k4 = jax.random.split(key, 4)

    def conv_w(k, ci, co):
        bound = 1.0 / jnp.sqrt(ci * 9.0)
        w = jax.random.uniform(k, (co, ci, 3, 3), dtype, -bound, bound)
        return jnp.transpose(w, (2, 3, 1, 0))              # (3,3,Cin,Cout)

    def conv_b(k, ci, co):
        bound = 1.0 / jnp.sqrt(ci * 9.0)
        return jax.random.uniform(k, (co,), dtype, -bound, bound)

    w1 = conv_w(k1, cin, c1); b1 = conv_b(k2, cin, c1)
    w2 = conv_w(k3, c1, c2);  b2 = conv_b(k4, c1, c2)
    return (w1, b1, w2, b2)


if __name__ == "__main__":
    N, Cin, H, W = 2, 4, 16, 16
    C1, C2 = 8, 4

    key = jax.random.PRNGKey(0)
    kx, kp = jax.random.split(key)
    x = jax.random.normal(kx, (N, Cin, H, W), jnp.float32)
    params = init_params(kp, Cin, C1, C2)

    # Plain-JAX reference (lax conv, NCHW, f32).
    def ref_forward(x, params):
        w1, b1, w2, b2 = params

        def conv(x, w, b):                      # w: (3,3,Cin,Cout) -> OIHW
            w_oihw = jnp.transpose(w, (3, 2, 0, 1))
            y = jax.lax.conv_general_dilated(
                x, w_oihw, (1, 1), 'SAME',
                dimension_numbers=('NCHW', 'OIHW', 'NCHW'))
            return y + b[None, :, None, None]

        x = conv(jnp.maximum(x, 0.0), w1, b1)
        x = conv(jnp.maximum(x, 0.0), w2, b2)
        return x

    ref = ref_forward(x, params)

    # f32 MXU path: tight check.
    out = jax.block_until_ready(double_decoder_conv(x, params))
    assert out.shape == (N, C2, H, W)
    assert jnp.allclose(out, ref, atol=1e-4, rtol=1e-4), "f32 path mismatch"

    # bf16 MXU path (preferred on v6e/v7x): f32 accumulation, looser tolerance.
    out_bf16 = jax.block_until_ready(
        double_decoder_conv(x, params, compute_dtype=jnp.bfloat16))
    assert jnp.allclose(out_bf16, ref, atol=5e-2, rtol=5e-2), "bf16 path mismatch"

    print("KERNEL_OK")
</pallas_src>

<mosaic_0001>
module attributes {stable_mosaic.version = 11 : i64} {
  func.func @_fused_double_conv_kernel(%arg0: i32, %arg1: memref<1x16x16x4xf32, #tpu.memory_space<vmem>>, %arg2: memref<36x8xf32, #tpu.memory_space<vmem>>, %arg3: memref<1x8xf32, #tpu.memory_space<vmem>>, %arg4: memref<72x4xf32, #tpu.memory_space<vmem>>, %arg5: memref<1x4xf32, #tpu.memory_space<vmem>>, %arg6: memref<1x4x256xf32, #tpu.memory_space<vmem>>, %arg7: memref<18x18x4xf32, #tpu.memory_space<vmem>>, %arg8: memref<16x16x36xf32, #tpu.memory_space<vmem>>, %arg9: memref<18x18x8xf32, #tpu.memory_space<vmem>>, %arg10: memref<16x16x72xf32, #tpu.memory_space<vmem>>) attributes {dimension_semantics = [#tpu.dimension_semantics<parallel>], iteration_bounds = array<i64: 2>, scalar_prefetch = 0 : i64, scratch_operands = 4 : i64, tpu.core_type = #tpu.core_type<tc>, window_params = [{transform_indices = @transform_0, window_bounds = array<i64: 1, 16, 16, 4>}, {pipeline_mode = #tpu.pipeline_mode<synchronous>, transform_indices = @transform_1, window_bounds = array<i64: 36, 8>}, {pipeline_mode = #tpu.pipeline_mode<synchronous>, transform_indices = @transform_2, window_bounds = array<i64: 1, 8>}, {pipeline_mode = #tpu.pipeline_mode<synchronous>, transform_indices = @transform_3, window_bounds = array<i64: 72, 4>}, {pipeline_mode = #tpu.pipeline_mode<synchronous>, transform_indices = @transform_4, window_bounds = array<i64: 1, 4>}, {transform_indices = @transform_5, window_bounds = array<i64: 1, 4, 256>}]} {
    %cst = arith.constant 0.000000e+00 : f32
    %0 = vector.broadcast %cst : f32 to vector<18x18x4xf32>
    %c0 = arith.constant 0 : index
    %c0_0 = arith.constant 0 : index
    %c0_1 = arith.constant 0 : index
    %1 = vector.load %arg7[%c0, %c0_0, %c0_1] : memref<18x18x4xf32, #tpu.memory_space<vmem>>, vector<18x18x4xf32>
    tpu.vector_store %arg7[%c0, %c0_0, %c0_1], %0 {strides = array<i32>} : memref<18x18x4xf32, #tpu.memory_space<vmem>>, vector<18x18x4xf32>,
    %cst_2 = arith.constant 0.000000e+00 : f32
    %2 = vector.broadcast %cst_2 : f32 to vector<18x18x8xf32>
    %c0_3 = arith.constant 0 : index
    %c0_4 = arith.constant 0 : index
    %c0_5 = arith.constant 0 : index
    %3 = vector.load %arg9[%c0_3, %c0_4, %c0_5] : memref<18x18x8xf32, #tpu.memory_space<vmem>>, vector<18x18x8xf32>
    tpu.vector_store %arg9[%c0_3, %c0_4, %c0_5], %2 {strides = array<i32>} : memref<18x18x8xf32, #tpu.memory_space<vmem>>, vector<18x18x8xf32>,
    %c0_6 = arith.constant 0 : index
    %c0_7 = arith.constant 0 : index
    %c0_8 = arith.constant 0 : index
    %c0_9 = arith.constant 0 : index
    %4 = vector.load %arg1[%c0_6, %c0_7, %c0_8, %c0_9] : memref<1x16x16x4xf32, #tpu.memory_space<vmem>>, vector<1x16x16x4xf32>
    %5 = vector.shape_cast %4 : vector<1x16x16x4xf32> to vector<16x16x4xf32>
    %cst_10 = arith.constant 0.000000e+00 : f32
    %6 = vector.broadcast %cst_10 : f32 to vector<16x16x4xf32>
    %7 = arith.maximumf %5, %6 : vector<16x16x4xf32>
    %c1 = arith.constant 1 : index
    %c1_11 = arith.constant 1 : index
    %c0_12 = arith.constant 0 : index
    %8 = vector.load %arg7[%c1, %c1_11, %c0_12] : memref<18x18x4xf32, #tpu.memory_space<vmem>>, vector<16x16x4xf32>
    tpu.vector_store %arg7[%c1, %c1_11, %c0_12], %7 {strides = array<i32>} : memref<18x18x4xf32, #tpu.memory_space<vmem>>, vector<16x16x4xf32>,
    %c0_13 = arith.constant 0 : index
    %c0_14 = arith.constant 0 : index
    %c0_15 = arith.constant 0 : index
    %9 = vector.load %arg7[%c0_13, %c0_14, %c0_15] : memref<18x18x4xf32, #tpu.memory_space<vmem>>, vector<16x16x4xf32>
    %c0_16 = arith.constant 0 : index
    %c0_17 = arith.constant 0 : index
    %c0_18 = arith.constant 0 : index
    %10 = vector.load %arg8[%c0_16, %c0_17, %c0_18] : memref<16x16x36xf32, #tpu.memory_space<vmem>>, vector<16x16x4xf32>
    tpu.vector_store %arg8[%c0_16, %c0_17, %c0_18], %9 {strides = array<i32>} : memref<16x16x36xf32, #tpu.memory_space<vmem>>, vector<16x16x4xf32>,
    %c0_19 = arith.constant 0 : index
    %c1_20 = arith.constant 1 : index
    %c0_21 = arith.constant 0 : index
    %11 = vector.load %arg7[%c0_19, %c1_20, %c0_21] : memref<18x18x4xf32, #tpu.memory_space<vmem>>, vector<16x16x4xf32>
    %c0_22 = arith.constant 0 : index
    %c0_23 = arith.constant 0 : index
    %c4 = arith.constant 4 : index
    %12 = vector.load %arg8[%c0_22, %c0_23, %c4] : memref<16x16x36xf32, #tpu.memory_space<vmem>>, vector<16x16x4xf32>
    tpu.vector_store %arg8[%c0_22, %c0_23, %c4], %11 {strides = array<i32>} : memref<16x16x36xf32, #tpu.memory_space<vmem>>, vector<16x16x4xf32>,
    %c0_24 = arith.constant 0 : index
    %c2 = arith.constant 2 : index
    %c0_25 = arith.constant 0 : index
    %13 = vector.load %arg7[%c0_24, %c2, %c0_25] : memref<18x18x4xf32, #tpu.memory_space<vmem>>, vector<16x16x4xf32>
    %c0_26 = arith.constant 0 : index
    %c0_27 = arith.constant 0 : index
    %c8 = arith.constant 8 : index
    %14 = vector.load %arg8[%c0_26, %c0_27, %c8] : memref<16x16x36xf32, #tpu.memory_space<vmem>>, vector<16x16x4xf32>
    tpu.vector_store %arg8[%c0_26, %c0_27, %c8], %13 {strides = array<i32>} : memref<16x16x36xf32, #tpu.memory_space<vmem>>, vector<16x16x4xf32>,
    %c1_28 = arith.constant 1 : index
    %c0_29 = arith.constant 0 : index
    %c0_30 = arith.constant 0 : index
    %15 = vector.load %arg7[%c1_28, %c0_29, %c0_30] : memref<18x18x4xf32, #tpu.memory_space<vmem>>, vector<16x16x4xf32>
    %c0_31 = arith.constant 0 : index
    %c0_32 = arith.constant 0 : index
    %c12 = arith.constant 12 : index
    %16 = vector.load %arg8[%c0_31, %c0_32, %c12] : memref<16x16x36xf32, #tpu.memory_space<vmem>>, vector<16x16x4xf32>
    tpu.vector_store %arg8[%c0_31, %c0_32, %c12], %15 {strides = array<i32>} : memref<16x16x36xf32, #tpu.memory_space<vmem>>, vector<16x16x4xf32>,
    %c1_33 = arith.constant 1 : index
    %c1_34 = arith.constant 1 : index
    %c0_35 = arith.constant 0 : index
    %17 = vector.load %arg7[%c1_33, %c1_34, %c0_35] : memref<18x18x4xf32, #tpu.memory_space<vmem>>, vector<16x16x4xf32>
    %c0_36 = arith.constant 0 : index
    %c0_37 = arith.constant 0 : index
    %c16 = arith.constant 16 : index
    %18 = vector.load %arg8[%c0_36, %c0_37, %c16] : memref<16x16x36xf32, #tpu.memory_space<vmem>>, vector<16x16x4xf32>
    tpu.vector_store %arg8[%c0_36, %c0_37, %c16], %17 {strides = array<i32>} : memref<16x16x36xf32, #tpu.memory_space<vmem>>, vector<16x16x4xf32>,
    %c1_38 = arith.constant 1 : index
    %c2_39 = arith.constant 2 : index
    %c0_40 = arith.constant 0 : index
    %19 = vector.load %arg7[%c1_38, %c2_39, %c0_40] : memref<18x18x4xf32, #tpu.memory_space<vmem>>, vector<16x16x4xf32>
    %c0_41 = arith.constant 0 : index
    %c0_42 = arith.constant 0 : index
    %c20 = arith.constant 20 : index
    %20 = vector.load %arg8[%c0_41, %c0_42, %c20] : memref<16x16x36xf32, #tpu.memory_space<vmem>>, vector<16x16x4xf32>
    tpu.vector_store %arg8[%c0_41, %c0_42, %c20], %19 {strides = array<i32>} : memref<16x16x36xf32, #tpu.memory_space<vmem>>, vector<16x16x4xf32>,
    %c2_43 = arith.constant 2 : index
    %c0_44 = arith.constant 0 : index
    %c0_45 = arith.constant 0 : index
    %21 = vector.load %arg7[%c2_43, %c0_44, %c0_45] : memref<18x18x4xf32, #tpu.memory_space<vmem>>, vector<16x16x4xf32>
    %c0_46 = arith.constant 0 : index
    %c0_47 = arith.constant 0 : index
    %c24 = arith.constant 24 : index
    %22 = vector.load %arg8[%c0_46, %c0_47, %c24] : memref<16x16x36xf32, #tpu.memory_space<vmem>>, vector<16x16x4xf32>
    tpu.vector_store %arg8[%c0_46, %c0_47, %c24], %21 {strides = array<i32>} : memref<16x16x36xf32, #tpu.memory_space<vmem>>, vector<16x16x4xf32>,
    %c2_48 = arith.constant 2 : index
    %c1_49 = arith.constant 1 : index
    %c0_50 = arith.constant 0 : index
    %23 = vector.load %arg7[%c2_48, %c1_49, %c0_50] : memref<18x18x4xf32, #tpu.memory_space<vmem>>, vector<16x16x4xf32>
    %c0_51 = arith.constant 0 : index
    %c0_52 = arith.constant 0 : index
    %c28 = arith.constant 28 : index
    %24 = vector.load %arg8[%c0_51, %c0_52, %c28] : memref<16x16x36xf32, #tpu.memory_space<vmem>>, vector<16x16x4xf32>
    tpu.vector_store %arg8[%c0_51, %c0_52, %c28], %23 {strides = array<i32>} : memref<16x16x36xf32, #tpu.memory_space<vmem>>, vector<16x16x4xf32>,
    %c2_53 = arith.constant 2 : index
    %c2_54 = arith.constant 2 : index
    %c0_55 = arith.constant 0 : index
    %25 = vector.load %arg7[%c2_53, %c2_54, %c0_55] : memref<18x18x4xf32, #tpu.memory_space<vmem>>, vector<16x16x4xf32>
    %c0_56 = arith.constant 0 : index
    %c0_57 = arith.constant 0 : index
    %c32 = arith.constant 32 : index
    %26 = vector.load %arg8[%c0_56, %c0_57, %c32] : memref<16x16x36xf32, #tpu.memory_space<vmem>>, vector<16x16x4xf32>
    tpu.vector_store %arg8[%c0_56, %c0_57, %c32], %25 {strides = array<i32>} : memref<16x16x36xf32, #tpu.memory_space<vmem>>, vector<16x16x4xf32>,
    %c0_58 = arith.constant 0 : index
    %c0_59 = arith.constant 0 : index
    %c0_60 = arith.constant 0 : index
    %27 = vector.load %arg8[%c0_58, %c0_59, %c0_60] : memref<16x16x36xf32, #tpu.memory_space<vmem>>, vector<16x16x36xf32>
    %28 = vector.shape_cast %27 : vector<16x16x36xf32> to vector<256x36xf32>
    %c0_61 = arith.constant 0 : index
    %c0_62 = arith.constant 0 : index
    %29 = vector.load %arg2[%c0_61, %c0_62] : memref<36x8xf32, #tpu.memory_space<vmem>>, vector<36x8xf32>
    %cst_63 = arith.constant dense<0.000000e+00> : vector<256x8xf32>
    %30 = tpu.matmul %28, %29, %cst_63 {dimension_numbers = #tpu.dot_dimension_numbers<[1], [0], [0], [1], [0, 0, 1, 1], [], []>} : vector<256x36xf32>, vector<36x8xf32>, vector<256x8xf32> -> vector<256x8xf32>
    %c0_64 = arith.constant 0 : index
    %c0_65 = arith.constant 0 : index
    %31 = vector.load %arg3[%c0_64, %c0_65] : memref<1x8xf32, #tpu.memory_space<vmem>>, vector<1x8xf32>
    %32 = vector.broadcast %31 : vector<1x8xf32> to vector<256x8xf32>
    %33 = arith.addf %30, %32 : vector<256x8xf32>
    %cst_66 = arith.constant 0.000000e+00 : f32
    %34 = vector.broadcast %cst_66 : f32 to vector<256x8xf32>
    %35 = arith.maximumf %33, %34 : vector<256x8xf32>
    %36 = vector.shape_cast %35 : vector<256x8xf32> to vector<16x16x8xf32>
    %c1_67 = arith.constant 1 : index
    %c1_68 = arith.constant 1 : index
    %c0_69 = arith.constant 0 : index
    %37 = vector.load %arg9[%c1_67, %c1_68, %c0_69] : memref<18x18x8xf32, #tpu.memory_space<vmem>>, vector<16x16x8xf32>
    tpu.vector_store %arg9[%c1_67, %c1_68, %c0_69], %36 {strides = array<i32>} : memref<18x18x8xf32, #tpu.memory_space<vmem>>, vector<16x16x8xf32>,
    %c0_70 = arith.constant 0 : index
    %c0_71 = arith.constant 0 : index
    %c0_72 = arith.constant 0 : index
    %38 = vector.load %arg9[%c0_70, %c0_71, %c0_72] : memref<18x18x8xf32, #tpu.memory_space<vmem>>, vector<16x16x8xf32>
    %c0_73 = arith.constant 0 : index
    %c0_74 = arith.constant 0 : index
    %c0_75 = arith.constant 0 : index
    %39 = vector.load %arg10[%c0_73, %c0_74, %c0_75] : memref<16x16x72xf32, #tpu.memory_space<vmem>>, vector<16x16x8xf32>
    tpu.vector_store %arg10[%c0_73, %c0_74, %c0_75], %38 {strides = array<i32>} : memref<16x16x72xf32, #tpu.memory_space<vmem>>, vector<16x16x8xf32>,
    %c0_76 = arith.constant 0 : index
    %c1_77 = arith.constant 1 : index
    %c0_78 = arith.constant 0 : index
    %40 = vector.load %arg9[%c0_76, %c1_77, %c0_78] : memref<18x18x8xf32, #tpu.memory_space<vmem>>, vector<16x16x8xf32>
    %c0_79 = arith.constant 0 : index
    %c0_80 = arith.constant 0 : index
    %c8_81 = arith.constant 8 : index
    %41 = vector.load %arg10[%c0_79, %c0_80, %c8_81] : memref<16x16x72xf32, #tpu.memory_space<vmem>>, vector<16x16x8xf32>
    tpu.vector_store %arg10[%c0_79, %c0_80, %c8_81], %40 {strides = array<i32>} : memref<16x16x72xf32, #tpu.memory_space<vmem>>, vector<16x16x8xf32>,
    %c0_82 = arith.constant 0 : index
    %c2_83 = arith.constant 2 : index
    %c0_84 = arith.constant 0 : index
    %42 = vector.load %arg9[%c0_82, %c2_83, %c0_84] : memref<18x18x8xf32, #tpu.memory_space<vmem>>, vector<16x16x8xf32>
    %c0_85 = arith.constant 0 : index
    %c0_86 = arith.constant 0 : index
    %c16_87 = arith.constant 16 : index
    %43 = vector.load %arg10[%c0_85, %c0_86, %c16_87] : memref<16x16x72xf32, #tpu.memory_space<vmem>>, vector<16x16x8xf32>
    tpu.vector_store %arg10[%c0_85, %c0_86, %c16_87], %42 {strides = array<i32>} : memref<16x16x72xf32, #tpu.memory_space<vmem>>, vector<16x16x8xf32>,
    %c1_88 = arith.constant 1 : index
    %c0_89 = arith.constant 0 : index
    %c0_90 = arith.constant 0 : index
    %44 = vector.load %arg9[%c1_88, %c0_89, %c0_90] : memref<18x18x8xf32, #tpu.memory_space<vmem>>, vector<16x16x8xf32>
    %c0_91 = arith.constant 0 : index
    %c0_92 = arith.constant 0 : index
    %c24_93 = arith.constant 24 : index
    %45 = vector.load %arg10[%c0_91, %c0_92, %c24_93] : memref<16x16x72xf32, #tpu.memory_space<vmem>>, vector<16x16x8xf32>
    tpu.vector_store %arg10[%c0_91, %c0_92, %c24_93], %44 {strides = array<i32>} : memref<16x16x72xf32, #tpu.memory_space<vmem>>, vector<16x16x8xf32>,
    %c1_94 = arith.constant 1 : index
    %c1_95 = arith.constant 1 : index
    %c0_96 = arith.constant 0 : index
    %46 = vector.load %arg9[%c1_94, %c1_95, %c0_96] : memref<18x18x8xf32, #tpu.memory_space<vmem>>, vector<16x16x8xf32>
    %c0_97 = arith.constant 0 : index
    %c0_98 = arith.constant 0 : index
    %c32_99 = arith.constant 32 : index
    %47 = vector.load %arg10[%c0_97, %c0_98, %c32_99] : memref<16x16x72xf32, #tpu.memory_space<vmem>>, vector<16x16x8xf32>
    tpu.vector_store %arg10[%c0_97, %c0_98, %c32_99], %46 {strides = array<i32>} : memref<16x16x72xf32, #tpu.memory_space<vmem>>, vector<16x16x8xf32>,
    %c1_100 = arith.constant 1 : index
    %c2_101 = arith.constant 2 : index
    %c0_102 = arith.constant 0 : index
    %48 = vector.load %arg9[%c1_100, %c2_101, %c0_102] : memref<18x18x8xf32, #tpu.memory_space<vmem>>, vector<16x16x8xf32>
    %c0_103 = arith.constant 0 : index
    %c0_104 = arith.constant 0 : index
    %c40 = arith.constant 40 : index
    %49 = vector.load %arg10[%c0_103, %c0_104, %c40] : memref<16x16x72xf32, #tpu.memory_space<vmem>>, vector<16x16x8xf32>
    tpu.vector_store %arg10[%c0_103, %c0_104, %c40], %48 {strides = array<i32>} : memref<16x16x72xf32, #tpu.memory_space<vmem>>, vector<16x16x8xf32>,
    %c2_105 = arith.constant 2 : index
    %c0_106 = arith.constant 0 : index
    %c0_107 = arith.constant 0 : index
    %50 = vector.load %arg9[%c2_105, %c0_106, %c0_107] : memref<18x18x8xf32, #tpu.memory_space<vmem>>, vector<16x16x8xf32>
    %c0_108 = arith.constant 0 : index
    %c0_109 = arith.constant 0 : index
    %c48 = arith.constant 48 : index
    %51 = vector.load %arg10[%c0_108, %c0_109, %c48] : memref<16x16x72xf32, #tpu.memory_space<vmem>>, vector<16x16x8xf32>
    tpu.vector_store %arg10[%c0_108, %c0_109, %c48], %50 {strides = array<i32>} : memref<16x16x72xf32, #tpu.memory_space<vmem>>, vector<16x16x8xf32>,
    %c2_110 = arith.constant 2 : index
    %c1_111 = arith.constant 1 : index
    %c0_112 = arith.constant 0 : index
    %52 = vector.load %arg9[%c2_110, %c1_111, %c0_112] : memref<18x18x8xf32, #tpu.memory_space<vmem>>, vector<16x16x8xf32>
    %c0_113 = arith.constant 0 : index
    %c0_114 = arith.constant 0 : index
    %c56 = arith.constant 56 : index
    %53 = vector.load %arg10[%c0_113, %c0_114, %c56] : memref<16x16x72xf32, #tpu.memory_space<vmem>>, vector<16x16x8xf32>
    tpu.vector_store %arg10[%c0_113, %c0_114, %c56], %52 {strides = array<i32>} : memref<16x16x72xf32, #tpu.memory_space<vmem>>, vector<16x16x8xf32>,
    %c2_115 = arith.constant 2 : index
    %c2_116 = arith.constant 2 : index
    %c0_117 = arith.constant 0 : index
    %54 = vector.load %arg9[%c2_115, %c2_116, %c0_117] : memref<18x18x8xf32, #tpu.memory_space<vmem>>, vector<16x16x8xf32>
    %c0_118 = arith.constant 0 : index
    %c0_119 = arith.constant 0 : index
    %c64 = arith.constant 64 : index
    %55 = vector.load %arg10[%c0_118, %c0_119, %c64] : memref<16x16x72xf32, #tpu.memory_space<vmem>>, vector<16x16x8xf32>
    tpu.vector_store %arg10[%c0_118, %c0_119, %c64], %54 {strides = array<i32>} : memref<16x16x72xf32, #tpu.memory_space<vmem>>, vector<16x16x8xf32>,
    %c0_120 = arith.constant 0 : index
    %c0_121 = arith.constant 0 : index
    %c0_122 = arith.constant 0 : index
    %56 = vector.load %arg10[%c0_120, %c0_121, %c0_122] : memref<16x16x72xf32, #tpu.memory_space<vmem>>, vector<16x16x72xf32>
    %57 = vector.shape_cast %56 : vector<16x16x72xf32> to vector<256x72xf32>
    %c0_123 = arith.constant 0 : index
    %c0_124 = arith.constant 0 : index
    %58 = vector.load %arg4[%c0_123, %c0_124] : memref<72x4xf32, #tpu.memory_space<vmem>>, vector<72x4xf32>
    %cst_125 = arith.constant dense<0.000000e+00> : vector<256x4xf32>
    %59 = tpu.matmul %57, %58, %cst_125 {dimension_numbers = #tpu.dot_dimension_numbers<[1], [0], [0], [1], [0, 0, 1, 1], [], []>} : vector<256x72xf32>, vector<72x4xf32>, vector<256x4xf32> -> vector<256x4xf32>
    %c0_126 = arith.constant 0 : index
    %c0_127 = arith.constant 0 : index
    %60 = vector.load %arg5[%c0_126, %c0_127] : memref<1x4xf32, #tpu.memory_space<vmem>>, vector<1x4xf32>
    %61 = vector.broadcast %60 : vector<1x4xf32> to vector<256x4xf32>
    %62 = arith.addf %59, %61 : vector<256x4xf32>
    %63 = tpu.transpose %62, [1, 0] : vector<256x4xf32> -> vector<4x256xf32>
    %64 = vector.shape_cast %63 : vector<4x256xf32> to vector<1x4x256xf32>
    %c0_128 = arith.constant 0 : index
    %c0_129 = arith.constant 0 : index
    %c0_130 = arith.constant 0 : index
    %65 = vector.load %arg6[%c0_128, %c0_129, %c0_130] : memref<1x4x256xf32, #tpu.memory_space<vmem>>, vector<1x4x256xf32>
    tpu.vector_store %arg6[%c0_128, %c0_129, %c0_130], %64 {strides = array<i32>} : memref<1x4x256xf32, #tpu.memory_space<vmem>>, vector<1x4x256xf32>,
    return
  }
  func.func @transform_0(%arg0: i32) -> (i32, i32, i32, i32) {
    %c0_i32 = arith.constant 0 : i32
    %c0_i32_0 = arith.constant 0 : i32
    %c0_i32_1 = arith.constant 0 : i32
    %c0_i32_2 = arith.constant 0 : i32
    return %arg0, %c0_i32, %c0_i32_0, %c0_i32_1 : i32, i32, i32, i32
  }
  func.func @transform_1(%arg0: i32) -> (i32, i32) {
    %c0_i32 = arith.constant 0 : i32
    %c0_i32_0 = arith.constant 0 : i32
    %c0_i32_1 = arith.constant 0 : i32
    return %c0_i32, %c0_i32_0 : i32, i32
  }
  func.func @transform_2(%arg0: i32) -> (i32, i32) {
    %c0_i32 = arith.constant 0 : i32
    %c0_i32_0 = arith.constant 0 : i32
    %c0_i32_1 = arith.constant 0 : i32
    return %c0_i32, %c0_i32_0 : i32, i32
  }
  func.func @transform_3(%arg0: i32) -> (i32, i32) {
    %c0_i32 = arith.constant 0 : i32
    %c0_i32_0 = arith.constant 0 : i32
    %c0_i32_1 = arith.constant 0 : i32
    return %c0_i32, %c0_i32_0 : i32, i32
  }
  func.func @transform_4(%arg0: i32) -> (i32, i32) {
    %c0_i32 = arith.constant 0 : i32
    %c0_i32_0 = arith.constant 0 : i32
    %c0_i32_1 = arith.constant 0 : i32
    return %c0_i32, %c0_i32_0 : i32, i32
  }
  func.func @transform_5(%arg0: i32) -> (i32, i32, i32) {
    %c0_i32 = arith.constant 0 : i32
    %c0_i32_0 = arith.constant 0 : i32
    %c0_i32_1 = arith.constant 0 : i32
    return %arg0, %c0_i32, %c0_i32_0 : i32, i32, i32
  }
}

</mosaic_0001>

<llo_original>
// kernel: tpu_custom_call.1
$region0: #{tpu_custom_call.1}
  #allocation0 [shape = 'u32[]', space=smem, size = 0x4, offset = 0x4, fixed_abs, tag = 'smem constant byte address 0x4 - core index']
  #allocation1 [shape = 'u32[72,128]{1,0:T(1,128)}', space=vmem, size = 0x9000, scoped, tag = 'internal scratch']
  #allocation2 [shape = 'f32[18,18,4]{2,1,0:T(8,128)}', space=vmem, size = 0x36000, scoped, tag = 'scratch operand']
  #allocation3 [shape = 'f32[16,16,36]{2,1,0:T(8,128)}', space=vmem, size = 0x20000, scoped, tag = 'scratch operand']
  #allocation4 [shape = 'f32[18,18,8]{2,1,0:T(8,128)}', space=vmem, size = 0x36000, scoped, tag = 'scratch operand']
  #allocation5 [shape = 'f32[16,16,72]{2,1,0:T(8,128)}', space=vmem, size = 0x20000, scoped, tag = 'scratch operand']
  %s0 = inlined_call_operand.vmem [shape: f32[2,16,16,4], index: 0, kind: input, shape index: {}]
  %s1 = inlined_call_operand.vmem [shape: f32[36,8], index: 1, kind: input, shape index: {}]
  %s2 = inlined_call_operand.vmem [shape: f32[1,8], index: 2, kind: input, shape index: {}]
  %s3 = inlined_call_operand.vmem [shape: f32[72,4], index: 3, kind: input, shape index: {}]
  %s4 = inlined_call_operand.vmem [shape: f32[1,4], index: 4, kind: input, shape index: {}]
  %s5 = inlined_call_operand.hbm [shape: f32[2,4,256], index: 5, kind: output, shape index: {}]
  %s6 = sld [smem:[#allocation0]]
  $region53: #{tpu_custom_call.1} parent=0
    _
  %s8 = ssub.s32 1, %s6
  %s9 = scalar_select 0, %s8, %s6
  $region1: #{tpu_custom_call.1} parent=0
    #allocation6 [shape = 'u8[8192]{0}', space=vmem, size = 0x2000, scoped, tag = 'output window, operand 0']
    #allocation7 [shape = 's32[2]{0}', space=sflag, size = 0x8, scoped, tag = 'scoped memory for tpu_custom_call.1']
    %10 = vsyncpa [#allocation7], 0
    %s11 = scalar_lea.sflag [#allocation7], 1
    %12 = vsyncpa %s11, 0
    loop: start=0, step=1, limit=4
    $region2: #{tpu_custom_call.1} parent=1 // loop_pre_header
      _
    $region3: #{tpu_custom_call.1} parent=1 // loop_header
      %s14 = sphi 0, %s18
      %p15 = scmp.ge.s32.totalorder %s14, 4
      %s24 = sphi 0, %s26
      %s27 = sphi 0, %s24
      %s28 = sphi 0, %s27
      %s44 = sphi 0, %s28
      %s48 = sphi 0, %s48
      %s50 = sphi 0, %s48
      %s51 = sphi 0, %s50
      %s65 = sphi 0, %s51
      %s69 = sphi 0, %s69
      %s71 = sphi 0, %s69
      %s72 = sphi 0, %s71
      %s86 = sphi 0, %s72
      %s90 = sphi 0, %s90
      %s92 = sphi 0, %s90
      %s93 = sphi 0, %s92
      %s107 = sphi 0, %s93
      %s111 = sphi 0, %s111
      %s113 = sphi 0, %s111
      %s114 = sphi 0, %s113
      %s128 = sphi 0, %s114
      %s134 = sphi 0, %s136
      %s137 = sphi 0, %s134
      %s138 = sphi 0, %s137
      %s154 = sphi 0, %s138
    $region4: #{tpu_custom_call.1} parent=1 // loop_header_branch
      %17 = sbr.rel (%p15) target = $region8
    $region5: #{tpu_custom_call.1} parent=1 // loop_body
      %s19 = ssub.s32 %s14, 1
      %s20 = ssub.s32 %s14, 2
      %s21 = sadd.s32 %s14, 1
      %s22 = ssub.s32 %s14, %s21
      %p23 = scmp.eq.s32.totalorder %s22, 0
      %s25 = sadd.s32 %s24, 1
      %s26 = scalar_select %p23, %s24, %s25
      %p29 = pneg %p23
      %p30 = scmp.eq.s32.totalorder %s14, 1
      %p31 = por %p29, %p30
      %p32 = scmp.ne.s32.totalorder %s24, %s27
      %p33 = scmp.eq.s32.totalorder %s14, 0
      %p34 = por %p32, %p33
      %p35 = scmp.ne.s32.totalorder %s24, %s27
      %p36 = scmp.eq.s32.totalorder %s19, 1
      %p37 = por %p35, %p36
      %p38 = scmp.ne.s32.totalorder %s27, %s28
      %p39 = scmp.eq.s32.totalorder %s19, 0
      %p40 = por %p38, %p39
      %p41 = scmp.ne.s32.totalorder %s27, %s28
      %p42 = scmp.eq.s32.totalorder %s20, 1
      %p43 = por %p41, %p42
      %p45 = scmp.ne.s32.totalorder %s28, %s44
      %p46 = scmp.eq.s32.totalorder %s20, 0
      %p47 = por %p45, %p46
      %s49 = sadd.s32 %s48, 1
      %p52 = scmp.eq.s32.totalorder %s14, 1
      %p53 = scmp.ne.s32.totalorder %s48, %s50
      %p54 = scmp.eq.s32.totalorder %s14, 0
      %p55 = por %p53, %p54
      %p56 = scmp.ne.s32.totalorder %s48, %s50
      %p57 = scmp.eq.s32.totalorder %s19, 1
      %p58 = por %p56, %p57
      %p59 = scmp.ne.s32.totalorder %s50, %s51
      %p60 = scmp.eq.s32.totalorder %s19, 0
      %p61 = por %p59, %p60
      %p62 = scmp.ne.s32.totalorder %s50, %s51
      %p63 = scmp.eq.s32.totalorder %s20, 1
      %p64 = por %p62, %p63
      %p66 = scmp.ne.s32.totalorder %s51, %s65
      %p67 = scmp.eq.s32.totalorder %s20, 0
      %p68 = por %p66, %p67
      %s70 = sadd.s32 %s69, 1
      %p73 = scmp.eq.s32.totalorder %s14, 1
      %p74 = scmp.ne.s32.totalorder %s69, %s71
      %p75 = scmp.eq.s32.totalorder %s14, 0
      %p76 = por %p74, %p75
      %p77 = scmp.ne.s32.totalorder %s69, %s71
      %p78 = scmp.eq.s32.totalorder %s19, 1
      %p79 = por %p77, %p78
      %p80 = scmp.ne.s32.totalorder %s71, %s72
      %p81 = scmp.eq.s32.totalorder %s19, 0
      %p82 = por %p80, %p81
      %p83 = scmp.ne.s32.totalorder %s71, %s72
      %p84 = scmp.eq.s32.totalorder %s20, 1
      %p85 = por %p83, %p84
      %p87 = scmp.ne.s32.totalorder %s72, %s86
      %p88 = scmp.eq.s32.totalorder %s20, 0
      %p89 = por %p87, %p88
      %s91 = sadd.s32 %s90, 1
      %p94 = scmp.eq.s32.totalorder %s14, 1
      %p95 = scmp.ne.s32.totalorder %s90, %s92
      %p96 = scmp.eq.s32.totalorder %s14, 0
      %p97 = por %p95, %p96
      %p98 = scmp.ne.s32.totalorder %s90, %s92
      %p99 = scmp.eq.s32.totalorder %s19, 1
      %p100 = por %p98, %p99
      %p101 = scmp.ne.s32.totalorder %s92, %s93
      %p102 = scmp.eq.s32.totalorder %s19, 0
      %p103 = por %p101, %p102
      %p104 = scmp.ne.s32.totalorder %s92, %s93
      %p105 = scmp.eq.s32.totalorder %s20, 1
      %p106 = por %p104, %p105
      %p108 = scmp.ne.s32.totalorder %s93, %s107
      %p109 = scmp.eq.s32.totalorder %s20, 0
      %p110 = por %p108, %p109
      %s112 = sadd.s32 %s111, 1
      %p115 = scmp.eq.s32.totalorder %s14, 1
      %p116 = scmp.ne.s32.totalorder %s111, %s113
      %p117 = scmp.eq.s32.totalorder %s14, 0
      %p118 = por %p116, %p117
      %p119 = scmp.ne.s32.totalorder %s111, %s113
      %p120 = scmp.eq.s32.totalorder %s19, 1
      %p121 = por %p119, %p120
      %p122 = scmp.ne.s32.totalorder %s113, %s114
      %p123 = scmp.eq.s32.totalorder %s19, 0
      %p124 = por %p122, %p123
      %p125 = scmp.ne.s32.totalorder %s113, %s114
      %p126 = scmp.eq.s32.totalorder %s20, 1
      %p127 = por %p125, %p126
      %p129 = scmp.ne.s32.totalorder %s114, %s128
      %p130 = scmp.eq.s32.totalorder %s20, 0
      %p131 = por %p129, %p130
      %s132 = ssub.s32 %s14, %s21
      %p133 = scmp.eq.s32.totalorder %s132, 0
      %s135 = sadd.s32 %s134, 1
      %s136 = scalar_select %p133, %s134, %s135
      %p139 = pneg %p133
      %p140 = scmp.eq.s32.totalorder %s14, 1
      %p141 = por %p139, %p140
      %p142 = scmp.ne.s32.totalorder %s134, %s137
      %p143 = scmp.eq.s32.totalorder %s14, 0
      %p144 = por %p142, %p143
      %p145 = scmp.ne.s32.totalorder %s134, %s137
      %p146 = scmp.eq.s32.totalorder %s19, 1
      %p147 = por %p145, %p146
      %p148 = scmp.ne.s32.totalorder %s137, %s138
      %p149 = scmp.eq.s32.totalorder %s19, 0
      %p150 = por %p148, %p149
      %p151 = scmp.ne.s32.totalorder %s137, %s138
      %p152 = scmp.eq.s32.totalorder %s20, 1
      %p153 = por %p151, %p152
      %p155 = scmp.ne.s32.totalorder %s138, %s154
      %p156 = scmp.eq.s32.totalorder %s20, 0
      %p157 = por %p155, %p156
      %p158 = scmp.le.s32.totalorder 1, %s14
      %p159 = scmp.lt.s32.totalorder %s14, 3
      %p160 = pnand %p158, %p159
      %p161 = pneg %p160
      // Predicated region
      $region9: #{tpu_custom_call.1} parent=5 // pred_check
        _
      $region10: #{tpu_custom_call.1} parent=5 // pred_check_branch
        %163 = sbr.rel (%p160) target = $region12
      $region11: #{tpu_custom_call.1} parent=5 // pred_region
        %s164 = ssub.s32 %s14, 1
        // Predicated region
        $region13: #{tpu_custom_call.1} parent=11 // pred_check
          %p165 = pneg %p61
        $region14: #{tpu_custom_call.1} parent=11 // pred_check_branch
          %167 = sbr.rel (%p165) target = $region16
        $region15: #{tpu_custom_call.1} parent=11 // pred_region
          _
        $region16: #{tpu_custom_call.1} parent=11 // pred_fallthru
          _
        // Predicated region
        $region17: #{tpu_custom_call.1} parent=11 // pred_check
          %p168 = pneg %p82
        $region18: #{tpu_custom_call.1} parent=11 // pred_check_branch
          %170 = sbr.rel (%p168) target = $region20
        $region19: #{tpu_custom_call.1} parent=11 // pred_region
          _
        $region20: #{tpu_custom_call.1} parent=11 // pred_fallthru
          _
        // Predicated region
        $region21: #{tpu_custom_call.1} parent=11 // pred_check
          %p171 = pneg %p103
        $region22: #{tpu_custom_call.1} parent=11 // pred_check_branch
          %173 = sbr.rel (%p171) target = $region24
        $region23: #{tpu_custom_call.1} parent=11 // pred_region
          _
        $region24: #{tpu_custom_call.1} parent=11 // pred_fallthru
          _
        // Predicated region
        $region25: #{tpu_custom_call.1} parent=11 // pred_check
          %p174 = pneg %p124
        $region26: #{tpu_custom_call.1} parent=11 // pred_check_branch
          %176 = sbr.rel (%p174) target = $region28
        $region27: #{tpu_custom_call.1} parent=11 // pred_region
          _
        $region28: #{tpu_custom_call.1} parent=11 // pred_fallthru
          _
      $region12: #{tpu_custom_call.1} parent=5 // pred_fallthru
        _
      %p177 = scmp.lt.s32.totalorder %s14, 2
      // Predicated region
      $region29: #{tpu_custom_call.1} parent=5 // pred_check
        %p178 = pneg %p177
      $region30: #{tpu_custom_call.1} parent=5 // pred_check_branch
        %180 = sbr.rel (%p178) target = $region32
      $region31: #{tpu_custom_call.1} parent=5 // pred_region
        // Predicated region
        $region33: #{tpu_custom_call.1} parent=31 // pred_check
          %p181 = pneg %p34
        $region34: #{tpu_custom_call.1} parent=31 // pred_check_branch
          %183 = sbr.rel (%p181) target = $region36
        $region35: #{tpu_custom_call.1} parent=31 // pred_region
          %p184 = scmp.lt.s32.totalorder %s14, 1
          %s185 = scalar_select %p184, %s14, 1
          %s186 = smul.addr %s185, 32
          %s187 = smul.addr %s186, 8
          %s188 = scalar_lea.vmem %s0, %s187
        $region36: #{tpu_custom_call.1} parent=31 // pred_fallthru
          _
      $region32: #{tpu_custom_call.1} parent=5 // pred_fallthru
        _
      %p189 = scmp.le.s32.totalorder 1, %s14
      %p190 = scmp.lt.s32.totalorder %s14, 3
      %p191 = pnand %p189, %p190
      %p192 = pneg %p191
      // Predicated region
      $region37: #{tpu_custom_call.1} parent=5 // pred_check
        _
      $region38: #{tpu_custom_call.1} parent=5 // pred_check_branch
        %194 = sbr.rel (%p191) target = $region40
      $region39: #{tpu_custom_call.1} parent=5 // pred_region
        %s195 = ssub.s32 %s14, 1
        %p196 = scmp.lt.s32.totalorder %s19, 1
        %s197 = scalar_select %p196, %s19, 1
        %s198 = smul.addr %s197, 32
        %s199 = smul.addr %s198, 8
        %s200 = scalar_lea.vmem %s0, %s199
        %p201 = pneg %p40
        %p202 = pneg %p37
        %p203 = pneg %p61
        %p204 = pneg %p58
        %p205 = pneg %p82
        %p206 = pneg %p79
        %p207 = pneg %p103
        %p208 = pneg %p100
        %p209 = pneg %p124
        %p210 = pneg %p121
        %p211 = pneg %p150
        %p212 = pneg %p147
        %s213 = sand.u32 %s137, 1
        %s214 = scalar_lea.sflag [#allocation7], %s213
        %s215 = sand.u32 %s137, 1
        %s216 = smul.addr %s215, 8
        %s217 = scalar_lea.vmem [#allocation6], %s216
        %p218 = scmp.lt.s32.totalorder %s19, 1
        %s219 = scalar_select %p218, %s19, 1
        %s220 = smul.addr %s219, 32
        %s221 = smul.addr %s220, 8
        %s222 = scalar_lea.vmem %s0, %s221
        %vm223 = vcmask 31744
        %224 = vst.msk [vmem:[#allocation2] sm:$0xff] %vm223, 0.0
        %225 = vst.msk [vmem:[#allocation2 + $0x8] sm:$0xff] %vm223, 0.0
        %vm226 = vcmask 25600
        %227 = vst.msk [vmem:[#allocation2 + $0x10] sm:$0x3] %vm226, 0.0
        %228 = vst.msk [vmem:[#allocation2 + $0x18] sm:$0xff] %vm223, 0.0
        %229 = vst.msk [vmem:[#allocation2 + $0x20] sm:$0xff] %vm223, 0.0
        %230 = vst.msk [vmem:[#allocation2 + $0x28] sm:$0x3] %vm226, 0.0
        %231 = vst.msk [vmem:[#allocation2 + $0x30] sm:$0xff] %vm223, 0.0
        %232 = vst.msk [vmem:[#allocation2 + $0x38] sm:$0xff] %vm223, 0.0
        %233 = vst.msk [vmem:[#allocation2 + $0x40] sm:$0x3] %vm226, 0.0
        %234 = vst.msk [vmem:[#allocation2 + $0x48] sm:$0xff] %vm223, 0.0
        %235 = vst.msk [vmem:[#allocation2 + $0x50] sm:$0xff] %vm223, 0.0
        %236 = vst.msk [vmem:[#allocation2 + $0x58] sm:$0x3] %vm226, 0.0
        %237 = vst.msk [vmem:[#allocation2 + $0x60] sm:$0xff] %vm223, 0.0
        %238 = vst.msk [vmem:[#allocation2 + $0x68] sm:$0xff] %vm223, 0.0
        %239 = vst.msk [vmem:[#allocation2 + $0x70] sm:$0x3] %vm226, 0.0
        %240 = vst.msk [vmem:[#allocation2 + $0x78] sm:$0xff] %vm223, 0.0
        %241 = vst.msk [vmem:[#allocation2 + $0x80] sm:$0xff] %vm223, 0.0
        %242 = vst.msk [vmem:[#allocation2 + $0x88] sm:$0x3] %vm226, 0.0
        %243 = vst.msk [vmem:[#allocation2 + $0x90] sm:$0xff] %vm223, 0.0
        %244 = vst.msk [vmem:[#allocation2 + $0x98] sm:$0xff] %vm223, 0.0
        %245 = vst.msk [vmem:[#allocation2 + $0xa0] sm:$0x3] %vm226, 0.0
        %246 = vst.msk [vmem:[#allocation2 + $0xa8] sm:$0xff] %vm223, 0.0
        %247 = vst.msk [vmem:[#allocation2 + $0xb0] sm:$0xff] %vm223, 0.0
        %248 = vst.msk [vmem:[#allocation2 + $0xb8] sm:$0x3] %vm226, 0.0
        %249 = vst.msk [vmem:[#allocation2 + $0xc0] sm:$0xff] %vm223, 0.0
        %250 = vst.msk [vmem:[#allocation2 + $0xc8] sm:$0xff] %vm223, 0.0
        %251 = vst.msk [vmem:[#allocation2 + $0xd0] sm:$0x3] %vm226, 0.0
        %252 = vst.msk [vmem:[#allocation2 + $0xd8] sm:$0xff] %vm223, 0.0
        %253 = vst.msk [vmem:[#allocation2 + $0xe0] sm:$0xff] %vm223, 0.0
        %254 = vst.msk [vmem:[#allocation2 + $0xe8] sm:$0x3] %vm226, 0.0
        %255 = vst.msk [vmem:[#allocation2 + $0xf0] sm:$0xff] %vm223, 0.0
        %256 = vst.msk [vmem:[#allocation2 + $0xf8] sm:$0xff] %vm223, 0.0
        %257 = vst.msk [vmem:[#allocation2 + $0x100] sm:$0x3] %vm226, 0.0
        %258 = vst.msk [vmem:[#allocation2 + $0x108] sm:$0xff] %vm223, 0.0
        %259 = vst.msk [vmem:[#allocation2 + $0x110] sm:$0xff] %vm223, 0.0
        %260 = vst.msk [vmem:[#allocation2 + $0x118] sm:$0x3] %vm226, 0.0
        %261 = vst.msk [vmem:[#allocation2 + $0x120] sm:$0xff] %vm223, 0.0
        %262 = vst.msk [vmem:[#allocation2 + $0x128] sm:$0xff] %vm223, 0.0
        %263 = vst.msk [vmem:[#allocation2 + $0x130] sm:$0x3] %vm226, 0.0
        %264 = vst.msk [vmem:[#allocation2 + $0x138] sm:$0xff] %vm223, 0.0
        %265 = vst.msk [vmem:[#allocation2 + $0x140] sm:$0xff] %vm223, 0.0
        %266 = vst.msk [vmem:[#allocation2 + $0x148] sm:$0x3] %vm226, 0.0
        %267 = vst.msk [vmem:[#allocation2 + $0x150] sm:$0xff] %vm223, 0.0
        %268 = vst.msk [vmem:[#allocation2 + $0x158] sm:$0xff] %vm223, 0.0
        %269 = vst.msk [vmem:[#allocation2 + $0x160] sm:$0x3] %vm226, 0.0
        %270 = vst.msk [vmem:[#allocation2 + $0x168] sm:$0xff] %vm223, 0.0
        %271 = vst.msk [vmem:[#allocation2 + $0x170] sm:$0xff] %vm223, 0.0
        %272 = vst.msk [vmem:[#allocation2 + $0x178] sm:$0x3] %vm226, 0.0
        %273 = vst.msk [vmem:[#allocation2 + $0x180] sm:$0xff] %vm223, 0.0
        %274 = vst.msk [vmem:[#allocation2 + $0x188] sm:$0xff] %vm223, 0.0
        %275 = vst.msk [vmem:[#allocation2 + $0x190] sm:$0x3] %vm226, 0.0
        %276 = vst.msk [vmem:[#allocation2 + $0x198] sm:$0xff] %vm223, 0.0
        %277 = vst.msk [vmem:[#allocation2 + $0x1a0] sm:$0xff] %vm223, 0.0
        %278 = vst.msk [vmem:[#allocation2 + $0x1a8] sm:$0x3] %vm226, 0.0
        %vm279 = vcmask 64512
        %280 = vst.msk [vmem:[#allocation4] sm:$0xff] %vm279, 0.0
        %281 = vst.msk [vmem:[#allocation4 + $0x8] sm:$0xff] %vm279, 0.0
        %vm282 = vcmask 58368
        %283 = vst.msk [vmem:[#allocation4 + $0x10] sm:$0x3] %vm282, 0.0
        %284 = vst.msk [vmem:[#allocation4 + $0x18] sm:$0xff] %vm279, 0.0
        %285 = vst.msk [vmem:[#allocation4 + $0x20] sm:$0xff] %vm279, 0.0
        %286 = vst.msk [vmem:[#allocation4 + $0x28] sm:$0x3] %vm282, 0.0
        %287 = vst.msk [vmem:[#allocation4 + $0x30] sm:$0xff] %vm279, 0.0
        %288 = vst.msk [vmem:[#allocation4 + $0x38] sm:$0xff] %vm279, 0.0
        %289 = vst.msk [vmem:[#allocation4 + $0x40] sm:$0x3] %vm282, 0.0
        %290 = vst.msk [vmem:[#allocation4 + $0x48] sm:$0xff] %vm279, 0.0
        %291 = vst.msk [vmem:[#allocation4 + $0x50] sm:$0xff] %vm279, 0.0
        %292 = vst.msk [vmem:[#allocation4 + $0x58] sm:$0x3] %vm282, 0.0
        %293 = vst.msk [vmem:[#allocation4 + $0x60] sm:$0xff] %vm279, 0.0
        %294 = vst.msk [vmem:[#allocation4 + $0x68] sm:$0xff] %vm279, 0.0
        %295 = vst.msk [vmem:[#allocation4 + $0x70] sm:$0x3] %vm282, 0.0
        %296 = vst.msk [vmem:[#allocation4 + $0x78] sm:$0xff] %vm279, 0.0
        %297 = vst.msk [vmem:[#allocation4 + $0x80] sm:$0xff] %vm279, 0.0
        %298 = vst.msk [vmem:[#allocation4 + $0x88] sm:$0x3] %vm282, 0.0
        %299 = vst.msk [vmem:[#allocation4 + $0x90] sm:$0xff] %vm279, 0.0
        %300 = vst.msk [vmem:[#allocation4 + $0x98] sm:$0xff] %vm279, 0.0
        %301 = vst.msk [vmem:[#allocation4 + $0xa0] sm:$0x3] %vm282, 0.0
        %302 = vst.msk [vmem:[#allocation4 + $0xa8] sm:$0xff] %vm279, 0.0
        %303 = vst.msk [vmem:[#allocation4 + $0xb0] sm:$0xff] %vm279, 0.0
        %304 = vst.msk [vmem:[#allocation4 + $0xb8] sm:$0x3] %vm282, 0.0
        %305 = vst.msk [vmem:[#allocation4 + $0xc0] sm:$0xff] %vm279, 0.0
        %306 = vst.msk [vmem:[#allocation4 + $0xc8] sm:$0xff] %vm279, 0.0
        %307 = vst.msk [vmem:[#allocation4 + $0xd0] sm:$0x3] %vm282, 0.0
        %308 = vst.msk [vmem:[#allocation4 + $0xd8] sm:$0xff] %vm279, 0.0
        %309 = vst.msk [vmem:[#allocation4 + $0xe0] sm:$0xff] %vm279, 0.0
        %310 = vst.msk [vmem:[#allocation4 + $0xe8] sm:$0x3] %vm282, 0.0
        %311 = vst.msk [vmem:[#allocation4 + $0xf0] sm:$0xff] %vm279, 0.0
        %312 = vst.msk [vmem:[#allocation4 + $0xf8] sm:$0xff] %vm279, 0.0
        %313 = vst.msk [vmem:[#allocation4 + $0x100] sm:$0x3] %vm282, 0.0
        %314 = vst.msk [vmem:[#allocation4 + $0x108] sm:$0xff] %vm279, 0.0
        %315 = vst.msk [vmem:[#allocation4 + $0x110] sm:$0xff] %vm279, 0.0
        %316 = vst.msk [vmem:[#allocation4 + $0x118] sm:$0x3] %vm282, 0.0
        %317 = vst.msk [vmem:[#allocation4 + $0x120] sm:$0xff] %vm279, 0.0
        %318 = vst.msk [vmem:[#allocation4 + $0x128] sm:$0xff] %vm279, 0.0
        %319 = vst.msk [vmem:[#allocation4 + $0x130] sm:$0x3] %vm282, 0.0
        %320 = vst.msk [vmem:[#allocation4 + $0x138] sm:$0xff] %vm279, 0.0
        %321 = vst.msk [vmem:[#allocation4 + $0x140] sm:$0xff] %vm279, 0.0
        %322 = vst.msk [vmem:[#allocation4 + $0x148] sm:$0x3] %vm282, 0.0
        %323 = vst.msk [vmem:[#allocation4 + $0x150] sm:$0xff] %vm279, 0.0
        %324 = vst.msk [vmem:[#allocation4 + $0x158] sm:$0xff] %vm279, 0.0
        %325 = vst.msk [vmem:[#allocation4 + $0x160] sm:$0x3] %vm282, 0.0
        %326 = vst.msk [vmem:[#allocation4 + $0x168] sm:$0xff] %vm279, 0.0
        %327 = vst.msk [vmem:[#allocation4 + $0x170] sm:$0xff] %vm279, 0.0
        %328 = vst.msk [vmem:[#allocation4 + $0x178] sm:$0x3] %vm282, 0.0
        %329 = vst.msk [vmem:[#allocation4 + $0x180] sm:$0xff] %vm279, 0.0
        %330 = vst.msk [vmem:[#allocation4 + $0x188] sm:$0xff] %vm279, 0.0
        %331 = vst.msk [vmem:[#allocation4 + $0x190] sm:$0x3] %vm282, 0.0
        %332 = vst.msk [vmem:[#allocation4 + $0x198] sm:$0xff] %vm279, 0.0
        %333 = vst.msk [vmem:[#allocation4 + $0x1a0] sm:$0xff] %vm279, 0.0
        %334 = vst.msk [vmem:[#allocation4 + $0x1a8] sm:$0x3] %vm282, 0.0
        %v335 = vld [vmem:[%s222] sm:$0xff]
        %v336 = vld [vmem:[%s222 + $0x8] sm:$0xff]
        %v337 = vld [vmem:[%s222 + $0x10] sm:$0xff]
        %v338 = vld [vmem:[%s222 + $0x18] sm:$0xff]
        %v339 = vld [vmem:[%s222 + $0x20] sm:$0xff]
        %v340 = vld [vmem:[%s222 + $0x28] sm:$0xff]
        %v341 = vld [vmem:[%s222 + $0x30] sm:$0xff]
        %v342 = vld [vmem:[%s222 + $0x38] sm:$0xff]
        %v343 = vld [vmem:[%s222 + $0x40] sm:$0xff]
        %v344 = vld [vmem:[%s222 + $0x48] sm:$0xff]
        %v345 = vld [vmem:[%s222 + $0x50] sm:$0xff]
        %v346 = vld [vmem:[%s222 + $0x58] sm:$0xff]
        %v347 = vld [vmem:[%s222 + $0x60] sm:$0xff]
        %v348 = vld [vmem:[%s222 + $0x68] sm:$0xff]
        %v349 = vld [vmem:[%s222 + $0x70] sm:$0xff]
        %v350 = vld [vmem:[%s222 + $0x78] sm:$0xff]
        %v351 = vld [vmem:[%s222 + $0x80] sm:$0xff]
        %v352 = vld [vmem:[%s222 + $0x88] sm:$0xff]
        %v353 = vld [vmem:[%s222 + $0x90] sm:$0xff]
        %v354 = vld [vmem:[%s222 + $0x98] sm:$0xff]
        %v355 = vld [vmem:[%s222 + $0xa0] sm:$0xff]
        %v356 = vld [vmem:[%s222 + $0xa8] sm:$0xff]
        %v357 = vld [vmem:[%s222 + $0xb0] sm:$0xff]
        %v358 = vld [vmem:[%s222 + $0xb8] sm:$0xff]
        %v359 = vld [vmem:[%s222 + $0xc0] sm:$0xff]
        %v360 = vld [vmem:[%s222 + $0xc8] sm:$0xff]
        %v361 = vld [vmem:[%s222 + $0xd0] sm:$0xff]
        %v362 = vld [vmem:[%s222 + $0xd8] sm:$0xff]
        %v363 = vld [vmem:[%s222 + $0xe0] sm:$0xff]
        %v364 = vld [vmem:[%s222 + $0xe8] sm:$0xff]
        %v365 = vld [vmem:[%s222 + $0xf0] sm:$0xff]
        %v366 = vld [vmem:[%s222 + $0xf8] sm:$0xff]
        %v367 = vmax.f32 %v335, 0.0
        %v368 = vmax.f32 %v336, 0.0
        %v369 = vmax.f32 %v337, 0.0
        %v370 = vmax.f32 %v338, 0.0
        %v371 = vmax.f32 %v339, 0.0
        %v372 = vmax.f32 %v340, 0.0
        %v373 = vmax.f32 %v341, 0.0
        %v374 = vmax.f32 %v342, 0.0
        %v375 = vmax.f32 %v343, 0.0
        %v376 = vmax.f32 %v344, 0.0
        %v377 = vmax.f32 %v345, 0.0
        %v378 = vmax.f32 %v346, 0.0
        %v379 = vmax.f32 %v347, 0.0
        %v380 = vmax.f32 %v348, 0.0
        %v381 = vmax.f32 %v349, 0.0
        %v382 = vmax.f32 %v350, 0.0
        %v383 = vmax.f32 %v351, 0.0
        %v384 = vmax.f32 %v352, 0.0
        %v385 = vmax.f32 %v353, 0.0
        %v386 = vmax.f32 %v354, 0.0
        %v387 = vmax.f32 %v355, 0.0
        %v388 = vmax.f32 %v356, 0.0
        %v389 = vmax.f32 %v357, 0.0
        %v390 = vmax.f32 %v358, 0.0
        %v391 = vmax.f32 %v359, 0.0
        %v392 = vmax.f32 %v360, 0.0
        %v393 = vmax.f32 %v361, 0.0
        %v394 = vmax.f32 %v362, 0.0
        %v395 = vmax.f32 %v363, 0.0
        %v396 = vmax.f32 %v364, 0.0
        %v397 = vmax.f32 %v365, 0.0
        %v398 = vmax.f32 %v366, 0.0
        %s399 = scalar_lea.vmem [#allocation2], 24
        %400 = vst.msk [vmem:[%s399 + $0x1] sm:$0xff] %vm223, %v367
        %401 = vst.msk [vmem:[%s399 + $0x9] sm:$0xff] %vm223, %v368
        %402 = vst.msk [vmem:[%s399 + $0x19] sm:$0xff] %vm223, %v369
        %403 = vst.msk [vmem:[%s399 + $0x21] sm:$0xff] %vm223, %v370
        %404 = vst.msk [vmem:[%s399 + $0x31] sm:$0xff] %vm223, %v371
        %405 = vst.msk [vmem:[%s399 + $0x39] sm:$0xff] %vm223, %v372
        %406 = vst.msk [vmem:[%s399 + $0x49] sm:$0xff] %vm223, %v373
        %407 = vst.msk [vmem:[%s399 + $0x51] sm:$0xff] %vm223, %v374
        %408 = vst.msk [vmem:[%s399 + $0x61] sm:$0xff] %vm223, %v375
        %409 = vst.msk [vmem:[%s399 + $0x69] sm:$0xff] %vm223, %v376
        %410 = vst.msk [vmem:[%s399 + $0x79] sm:$0xff] %vm223, %v377
        %411 = vst.msk [vmem:[%s399 + $0x81] sm:$0xff] %vm223, %v378
        %412 = vst.msk [vmem:[%s399 + $0x91] sm:$0xff] %vm223, %v379
        %413 = vst.msk [vmem:[%s399 + $0x99] sm:$0xff] %vm223, %v380
        %414 = vst.msk [vmem:[%s399 + $0xa9] sm:$0xff] %vm223, %v381
        %415 = vst.msk [vmem:[%s399 + $0xb1] sm:$0xff] %vm223, %v382
        %416 = vst.msk [vmem:[%s399 + $0xc1] sm:$0xff] %vm223, %v383
        %417 = vst.msk [vmem:[%s399 + $0xc9] sm:$0xff] %vm223, %v384
        %418 = vst.msk [vmem:[%s399 + $0xd9] sm:$0xff] %vm223, %v385
        %419 = vst.msk [vmem:[%s399 + $0xe1] sm:$0xff] %vm223, %v386
        %420 = vst.msk [vmem:[%s399 + $0xf1] sm:$0xff] %vm223, %v387
        %421 = vst.msk [vmem:[%s399 + $0xf9] sm:$0xff] %vm223, %v388
        %422 = vst.msk [vmem:[%s399 + $0x109] sm:$0xff] %vm223, %v389
        %423 = vst.msk [vmem:[%s399 + $0x111] sm:$0xff] %vm223, %v390
        %424 = vst.msk [vmem:[%s399 + $0x121] sm:$0xff] %vm223, %v391
        %425 = vst.msk [vmem:[%s399 + $0x129] sm:$0xff] %vm223, %v392
        %426 = vst.msk [vmem:[%s399 + $0x139] sm:$0xff] %vm223, %v393
        %427 = vst.msk [vmem:[%s399 + $0x141] sm:$0xff] %vm223, %v394
        %428 = vst.msk [vmem:[%s399 + $0x151] sm:$0xff] %vm223, %v395
        %429 = vst.msk [vmem:[%s399 + $0x159] sm:$0xff] %vm223, %v396
        %430 = vst.msk [vmem:[%s399 + $0x169] sm:$0xff] %vm223, %v397
        %431 = vst.msk [vmem:[%s399 + $0x171] sm:$0xff] %vm223, %v398
        %v432 = vld [vmem:[#allocation2] sm:$0xff]
        %v433 = vld [vmem:[#allocation2 + $0x8] sm:$0xff]
        %v434 = vld [vmem:[#allocation2 + $0x18] sm:$0xff]
        %v435 = vld [vmem:[#allocation2 + $0x20] sm:$0xff]
        %v436 = vld [vmem:[#allocation2 + $0x30] sm:$0xff]
        %v437 = vld [vmem:[#allocation2 + $0x38] sm:$0xff]
        %v438 = vld [vmem:[#allocation2 + $0x48] sm:$0xff]
        %v439 = vld [vmem:[#allocation2 + $0x50] sm:$0xff]
        %v440 = vld [vmem:[#allocation2 + $0x60] sm:$0xff]
        %v441 = vld [vmem:[#allocation2 + $0x68] sm:$0xff]
        %v442 = vld [vmem:[#allocation2 + $0x78] sm:$0xff]
        %v443 = vld [vmem:[#allocation2 + $0x80] sm:$0xff]
        %v444 = vld [vmem:[#allocation2 + $0x90] sm:$0xff]
        %v445 = vld [vmem:[#allocation2 + $0x98] sm:$0xff]
        %v446 = vld [vmem:[#allocation2 + $0xa8] sm:$0xff]
        %v447 = vld [vmem:[#allocation2 + $0xb0] sm:$0xff]
        %v448 = vld [vmem:[#allocation2 + $0xc0] sm:$0xff]
        %v449 = vld [vmem:[#allocation2 + $0xc8] sm:$0xff]
        %v450 = vld [vmem:[#allocation2 + $0xd8] sm:$0xff]
        %v451 = vld [vmem:[#allocation2 + $0xe0] sm:$0xff]
        %v452 = vld [vmem:[#allocation2 + $0xf0] sm:$0xff]
        %v453 = vld [vmem:[#allocation2 + $0xf8] sm:$0xff]
        %v454 = vld [vmem:[#allocation2 + $0x108] sm:$0xff]
        %v455 = vld [vmem:[#allocation2 + $0x110] sm:$0xff]
        %v456 = vld [vmem:[#allocation2 + $0x120] sm:$0xff]
        %v457 = vld [vmem:[#allocation2 + $0x128] sm:$0xff]
        %v458 = vld [vmem:[#allocation2 + $0x138] sm:$0xff]
        %v459 = vld [vmem:[#allocation2 + $0x140] sm:$0xff]
        %v460 = vld [vmem:[#allocation2 + $0x150] sm:$0xff]
        %v461 = vld [vmem:[#allocation2 + $0x158] sm:$0xff]
        %v462 = vld [vmem:[#allocation2 + $0x168] sm:$0xff]
        %v463 = vld [vmem:[#allocation2 + $0x170] sm:$0xff]
        %464 = vst.msk [vmem:[#allocation3] sm:$0xff] %vm223, %v432
        %465 = vst.msk [vmem:[#allocation3 + $0x8] sm:$0xff] %vm223, %v433
        %466 = vst.msk [vmem:[#allocation3 + $0x10] sm:$0xff] %vm223, %v434
        %467 = vst.msk [vmem:[#allocation3 + $0x18] sm:$0xff] %vm223, %v435
        %468 = vst.msk [vmem:[#allocation3 + $0x20] sm:$0xff] %vm223, %v436
        %469 = vst.msk [vmem:[#allocation3 + $0x28] sm:$0xff] %vm223, %v437
        %470 = vst.msk [vmem:[#allocation3 + $0x30] sm:$0xff] %vm223, %v438
        %471 = vst.msk [vmem:[#allocation3 + $0x38] sm:$0xff] %vm223, %v439
        %472 = vst.msk [vmem:[#allocation3 + $0x40] sm:$0xff] %vm223, %v440
        %473 = vst.msk [vmem:[#allocation3 + $0x48] sm:$0xff] %vm223, %v441
        %474 = vst.msk [vmem:[#allocation3 + $0x50] sm:$0xff] %vm223, %v442
        %475 = vst.msk [vmem:[#allocation3 + $0x58] sm:$0xff] %vm223, %v443
        %476 = vst.msk [vmem:[#allocation3 + $0x60] sm:$0xff] %vm223, %v444
        %477 = vst.msk [vmem:[#allocation3 + $0x68] sm:$0xff] %vm223, %v445
        %478 = vst.msk [vmem:[#allocation3 + $0x70] sm:$0xff] %vm223, %v446
        %479 = vst.msk [vmem:[#allocation3 + $0x78] sm:$0xff] %vm223, %v447
        %480 = vst.msk [vmem:[#allocation3 + $0x80] sm:$0xff] %vm223, %v448
        %481 = vst.msk [vmem:[#allocation3 + $0x88] sm:$0xff] %vm223, %v449
        %482 = vst.msk [vmem:[#allocation3 + $0x90] sm:$0xff] %vm223, %v450
        %483 = vst.msk [vmem:[#allocation3 + $0x98] sm:$0xff] %vm223, %v451
        %484 = vst.msk [vmem:[#allocation3 + $0xa0] sm:$0xff] %vm223, %v452
        %485 = vst.msk [vmem:[#allocation3 + $0xa8] sm:$0xff] %vm223, %v453
        %486 = vst.msk [vmem:[#allocation3 + $0xb0] sm:$0xff] %vm223, %v454
        %487 = vst.msk [vmem:[#allocation3 + $0xb8] sm:$0xff] %vm223, %v455
        %488 = vst.msk [vmem:[#allocation3 + $0xc0] sm:$0xff] %vm223, %v456
        %489 = vst.msk [vmem:[#allocation3 + $0xc8] sm:$0xff] %vm223, %v457
        %490 = vst.msk [vmem:[#allocation3 + $0xd0] sm:$0xff] %vm223, %v458
        %491 = vst.msk [vmem:[#allocation3 + $0xd8] sm:$0xff] %vm223, %v459
        %492 = vst.msk [vmem:[#allocation3 + $0xe0] sm:$0xff] %vm223, %v460
        %493 = vst.msk [vmem:[#allocation3 + $0xe8] sm:$0xff] %vm223, %v461
        %494 = vst.msk [vmem:[#allocation3 + $0xf0] sm:$0xff] %vm223, %v462
        %495 = vst.msk [vmem:[#allocation3 + $0xf8] sm:$0xff] %vm223, %v463
        %v496 = vld [vmem:[#allocation2 + $0x1] sm:$0xff]
        %v497 = vld [vmem:[#allocation2 + $0x9] sm:$0xff]
        %v498 = vld [vmem:[#allocation2 + $0x19] sm:$0xff]
        %v499 = vld [vmem:[#allocation2 + $0x21] sm:$0xff]
        %v500 = vld [vmem:[#allocation2 + $0x31] sm:$0xff]
        %v501 = vld [vmem:[#allocation2 + $0x39] sm:$0xff]
        %v502 = vld [vmem:[#allocation2 + $0x49] sm:$0xff]
        %v503 = vld [vmem:[#allocation2 + $0x51] sm:$0xff]
        %v504 = vld [vmem:[#allocation2 + $0x61] sm:$0xff]
        %v505 = vld [vmem:[#allocation2 + $0x69] sm:$0xff]
        %v506 = vld [vmem:[#allocation2 + $0x79] sm:$0xff]
        %v507 = vld [vmem:[#allocation2 + $0x81] sm:$0xff]
        %v508 = vld [vmem:[#allocation2 + $0x91] sm:$0xff]
        %v509 = vld [vmem:[#allocation2 + $0x99] sm:$0xff]
        %v510 = vld [vmem:[#allocation2 + $0xa9] sm:$0xff]
        %v511 = vld [vmem:[#allocation2 + $0xb1] sm:$0xff]
        %v512 = vld [vmem:[#allocation2 + $0xc1] sm:$0xff]
        %v513 = vld [vmem:[#allocation2 + $0xc9] sm:$0xff]
        %v514 = vld [vmem:[#allocation2 + $0xd9] sm:$0xff]
        %v515 = vld [vmem:[#allocation2 + $0xe1] sm:$0xff]
        %v516 = vld [vmem:[#allocation2 + $0xf1] sm:$0xff]
        %v517 = vld [vmem:[#allocation2 + $0xf9] sm:$0xff]
        %v518 = vld [vmem:[#allocation2 + $0x109] sm:$0xff]
        %v519 = vld [vmem:[#allocation2 + $0x111] sm:$0xff]
        %v520 = vld [vmem:[#allocation2 + $0x121] sm:$0xff]
        %v521 = vld [vmem:[#allocation2 + $0x129] sm:$0xff]
        %v522 = vld [vmem:[#allocation2 + $0x139] sm:$0xff]
        %v523 = vld [vmem:[#allocation2 + $0x141] sm:$0xff]
        %v524 = vld [vmem:[#allocation2 + $0x151] sm:$0xff]
        %v525 = vld [vmem:[#allocation2 + $0x159] sm:$0xff]
        %v526 = vld [vmem:[#allocation2 + $0x169] sm:$0xff]
        %v527 = vld [vmem:[#allocation2 + $0x171] sm:$0xff]
        %560 = vrot.lane.b32.xlu0 %v496, 4
        %v561 = vpop.permute.xlu0 %560
        %562 = vrot.lane.b32.xlu0 %v497, 4
        %v563 = vpop.permute.xlu0 %562
        %564 = vrot.lane.b32.xlu0 %v498, 4
        %v565 = vpop.permute.xlu0 %564
        %566 = vrot.lane.b32.xlu0 %v499, 4
        %v567 = vpop.permute.xlu0 %566
        %568 = vrot.lane.b32.xlu0 %v500, 4
        %v569 = vpop.permute.xlu0 %568
        %570 = vrot.lane.b32.xlu0 %v501, 4
        %v571 = vpop.permute.xlu0 %570
        %572 = vrot.lane.b32.xlu0 %v502, 4
        %v573 = vpop.permute.xlu0 %572
        %574 = vrot.lane.b32.xlu0 %v503, 4
        %v575 = vpop.permute.xlu0 %574
        %576 = vrot.lane.b32.xlu0 %v504, 4
        %v577 = vpop.permute.xlu0 %576
        %578 = vrot.lane.b32.xlu0 %v505, 4
        %v579 = vpop.permute.xlu0 %578
        %580 = vrot.lane.b32.xlu0 %v506, 4
        %v581 = vpop.permute.xlu0 %580
        %582 = vrot.lane.b32.xlu0 %v507, 4
        %v583 = vpop.permute.xlu0 %582
        %584 = vrot.lane.b32.xlu0 %v508, 4
        %v585 = vpop.permute.xlu0 %584
        %586 = vrot.lane.b32.xlu0 %v509, 4
        %v587 = vpop.permute.xlu0 %586
        %588 = vrot.lane.b32.xlu0 %v510, 4
        %v589 = vpop.permute.xlu0 %588
        %590 = vrot.lane.b32.xlu0 %v511, 4
        %v591 = vpop.permute.xlu0 %590
        %592 = vrot.lane.b32.xlu0 %v512, 4
        %v593 = vpop.permute.xlu0 %592
        %594 = vrot.lane.b32.xlu0 %v513, 4
        %v595 = vpop.permute.xlu0 %594
        %596 = vrot.lane.b32.xlu0 %v514, 4
        %v597 = vpop.permute.xlu0 %596
        %598 = vrot.lane.b32.xlu0 %v515, 4
        %v599 = vpop.permute.xlu0 %598
        %600 = vrot.lane.b32.xlu0 %v516, 4
        %v601 = vpop.permute.xlu0 %600
        %602 = vrot.lane.b32.xlu0 %v517, 4
        %v603 = vpop.permute.xlu0 %602
        %604 = vrot.lane.b32.xlu0 %v518, 4
        %v605 = vpop.permute.xlu0 %604
        %606 = vrot.lane.b32.xlu0 %v519, 4
        %v607 = vpop.permute.xlu0 %606
        %608 = vrot.lane.b32.xlu0 %v520, 4
        %v609 = vpop.permute.xlu0 %608
        %610 = vrot.lane.b32.xlu0 %v521, 4
        %v611 = vpop.permute.xlu0 %610
        %612 = vrot.lane.b32.xlu0 %v522, 4
        %v613 = vpop.permute.xlu0 %612
        %614 = vrot.lane.b32.xlu0 %v523, 4
        %v615 = vpop.permute.xlu0 %614
        %616 = vrot.lane.b32.xlu0 %v524, 4
        %v617 = vpop.permute.xlu0 %616
        %618 = vrot.lane.b32.xlu0 %v525, 4
        %v619 = vpop.permute.xlu0 %618
        %620 = vrot.lane.b32.xlu0 %v526, 4
        %v621 = vpop.permute.xlu0 %620
        %622 = vrot.lane.b32.xlu0 %v527, 4
        %v623 = vpop.permute.xlu0 %622
        %vm656 = vcmask 64544
        %657 = vst.msk [vmem:[#allocation3] sm:$0xff] %vm656, %v561
        %658 = vst.msk [vmem:[#allocation3 + $0x8] sm:$0xff] %vm656, %v563
        %659 = vst.msk [vmem:[#allocation3 + $0x10] sm:$0xff] %vm656, %v565
        %660 = vst.msk [vmem:[#allocation3 + $0x18] sm:$0xff] %vm656, %v567
        %661 = vst.msk [vmem:[#allocation3 + $0x20] sm:$0xff] %vm656, %v569
        %662 = vst.msk [vmem:[#allocation3 + $0x28] sm:$0xff] %vm656, %v571
        %663 = vst.msk [vmem:[#allocation3 + $0x30] sm:$0xff] %vm656, %v573
        %664 = vst.msk [vmem:[#allocation3 + $0x38] sm:$0xff] %vm656, %v575
        %665 = vst.msk [vmem:[#allocation3 + $0x40] sm:$0xff] %vm656, %v577
        %666 = vst.msk [vmem:[#allocation3 + $0x48] sm:$0xff] %vm656, %v579
        %667 = vst.msk [vmem:[#allocation3 + $0x50] sm:$0xff] %vm656, %v581
        %668 = vst.msk [vmem:[#allocation3 + $0x58] sm:$0xff] %vm656, %v583
        %669 = vst.msk [vmem:[#allocation3 + $0x60] sm:$0xff] %vm656, %v585
        %670 = vst.msk [vmem:[#allocation3 + $0x68] sm:$0xff] %vm656, %v587
        %671 = vst.msk [vmem:[#allocation3 + $0x70] sm:$0xff] %vm656, %v589
        %672 = vst.msk [vmem:[#allocation3 + $0x78] sm:$0xff] %vm656, %v591
        %673 = vst.msk [vmem:[#allocation3 + $0x80] sm:$0xff] %vm656, %v593
        %674 = vst.msk [vmem:[#allocation3 + $0x88] sm:$0xff] %vm656, %v595
        %675 = vst.msk [vmem:[#allocation3 + $0x90] sm:$0xff] %vm656, %v597
        %676 = vst.msk [vmem:[#allocation3 + $0x98] sm:$0xff] %vm656, %v599
        %677 = vst.msk [vmem:[#allocation3 + $0xa0] sm:$0xff] %vm656, %v601
        %678 = vst.msk [vmem:[#allocation3 + $0xa8] sm:$0xff] %vm656, %v603
        %679 = vst.msk [vmem:[#allocation3 + $0xb0] sm:$0xff] %vm656, %v605
        %680 = vst.msk [vmem:[#allocation3 + $0xb8] sm:$0xff] %vm656, %v607
        %681 = vst.msk [vmem:[#allocation3 + $0xc0] sm:$0xff] %vm656, %v609
        %682 = vst.msk [vmem:[#allocation3 + $0xc8] sm:$0xff] %vm656, %v611
        %683 = vst.msk [vmem:[#allocation3 + $0xd0] sm:$0xff] %vm656, %v613
        %684 = vst.msk [vmem:[#allocation3 + $0xd8] sm:$0xff] %vm656, %v615
        %685 = vst.msk [vmem:[#allocation3 + $0xe0] sm:$0xff] %vm656, %v617
        %686 = vst.msk [vmem:[#allocation3 + $0xe8] sm:$0xff] %vm656, %v619
        %687 = vst.msk [vmem:[#allocation3 + $0xf0] sm:$0xff] %vm656, %v621
        %688 = vst.msk [vmem:[#allocation3 + $0xf8] sm:$0xff] %vm656, %v623
        %v689 = vld [vmem:[#allocation2 + $0x2] sm:$0xff]
        %v690 = vld [vmem:[#allocation2 + $0xa] sm:$0xff]
        %v691 = vld [vmem:[#allocation2 + $0x1a] sm:$0xff]
        %v692 = vld [vmem:[#allocation2 + $0x22] sm:$0xff]
        %v693 = vld [vmem:[#allocation2 + $0x32] sm:$0xff]
        %v694 = vld [vmem:[#allocation2 + $0x3a] sm:$0xff]
        %v695 = vld [vmem:[#allocation2 + $0x4a] sm:$0xff]
        %v696 = vld [vmem:[#allocation2 + $0x52] sm:$0xff]
        %v697 = vld [vmem:[#allocation2 + $0x62] sm:$0xff]
        %v698 = vld [vmem:[#allocation2 + $0x6a] sm:$0xff]
        %v699 = vld [vmem:[#allocation2 + $0x7a] sm:$0xff]
        %v700 = vld [vmem:[#allocation2 + $0x82] sm:$0xff]
        %v701 = vld [vmem:[#allocation2 + $0x92] sm:$0xff]
        %v702 = vld [vmem:[#allocation2 + $0x9a] sm:$0xff]
        %v703 = vld [vmem:[#allocation2 + $0xaa] sm:$0xff]
        %v704 = vld [vmem:[#allocation2 + $0xb2] sm:$0xff]
        %v705 = vld [vmem:[#allocation2 + $0xc2] sm:$0xff]
        %v706 = vld [vmem:[#allocation2 + $0xca] sm:$0xff]
        %v707 = vld [vmem:[#allocation2 + $0xda] sm:$0xff]
        %v708 = vld [vmem:[#allocation2 + $0xe2] sm:$0xff]
        %v709 = vld [vmem:[#allocation2 + $0xf2] sm:$0xff]
        %v710 = vld [vmem:[#allocation2 + $0xfa] sm:$0xff]
        %v711 = vld [vmem:[#allocation2 + $0x10a] sm:$0xff]
        %v712 = vld [vmem:[#allocation2 + $0x112] sm:$0xff]
        %v713 = vld [vmem:[#allocation2 + $0x122] sm:$0xff]
        %v714 = vld [vmem:[#allocation2 + $0x12a] sm:$0xff]
        %v715 = vld [vmem:[#allocation2 + $0x13a] sm:$0xff]
        %v716 = vld [vmem:[#allocation2 + $0x142] sm:$0xff]
        %v717 = vld [vmem:[#allocation2 + $0x152] sm:$0xff]
        %v718 = vld [vmem:[#allocation2 + $0x15a] sm:$0xff]
        %v719 = vld [vmem:[#allocation2 + $0x16a] sm:$0xff]
        %v720 = vld [vmem:[#allocation2 + $0x172] sm:$0xff]
        %753 = vrot.lane.b32.xlu0 %v689, 8
        %v754 = vpop.permute.xlu0 %753
        %755 = vrot.lane.b32.xlu0 %v690, 8
        %v756 = vpop.permute.xlu0 %755
        %757 = vrot.lane.b32.xlu0 %v691, 8
        %v758 = vpop.permute.xlu0 %757
        %759 = vrot.lane.b32.xlu0 %v692, 8
        %v760 = vpop.permute.xlu0 %759
        %761 = vrot.lane.b32.xlu0 %v693, 8
        %v762 = vpop.permute.xlu0 %761
        %763 = vrot.lane.b32.xlu0 %v694, 8
        %v764 = vpop.permute.xlu0 %763
        %765 = vrot.lane.b32.xlu0 %v695, 8
        %v766 = vpop.permute.xlu0 %765
        %767 = vrot.lane.b32.xlu0 %v696, 8
        %v768 = vpop.permute.xlu0 %767
        %769 = vrot.lane.b32.xlu0 %v697, 8
        %v770 = vpop.permute.xlu0 %769
        %771 = vrot.lane.b32.xlu0 %v698, 8
        %v772 = vpop.permute.xlu0 %771
        %773 = vrot.lane.b32.xlu0 %v699, 8
        %v774 = vpop.permute.xlu0 %773
        %775 = vrot.lane.b32.xlu0 %v700, 8
        %v776 = vpop.permute.xlu0 %775
        %777 = vrot.lane.b32.xlu0 %v701, 8
        %v778 = vpop.permute.xlu0 %777
        %779 = vrot.lane.b32.xlu0 %v702, 8
        %v780 = vpop.permute.xlu0 %779
        %781 = vrot.lane.b32.xlu0 %v703, 8
        %v782 = vpop.permute.xlu0 %781
        %783 = vrot.lane.b32.xlu0 %v704, 8
        %v784 = vpop.permute.xlu0 %783
        %785 = vrot.lane.b32.xlu0 %v705, 8
        %v786 = vpop.permute.xlu0 %785
        %787 = vrot.lane.b32.xlu0 %v706, 8
        %v788 = vpop.permute.xlu0 %787
        %789 = vrot.lane.b32.xlu0 %v707, 8
        %v790 = vpop.permute.xlu0 %789
        %791 = vrot.lane.b32.xlu0 %v708, 8
        %v792 = vpop.permute.xlu0 %791
        %793 = vrot.lane.b32.xlu0 %v709, 8
        %v794 = vpop.permute.xlu0 %793
        %795 = vrot.lane.b32.xlu0 %v710, 8
        %v796 = vpop.permute.xlu0 %795
        %797 = vrot.lane.b32.xlu0 %v711, 8
        %v798 = vpop.permute.xlu0 %797
        %799 = vrot.lane.b32.xlu0 %v712, 8
        %v800 = vpop.permute.xlu0 %799
        %801 = vrot.lane.b32.xlu0 %v713, 8
        %v802 = vpop.permute.xlu0 %801
        %803 = vrot.lane.b32.xlu0 %v714, 8
        %v804 = vpop.permute.xlu0 %803
        %805 = vrot.lane.b32.xlu0 %v715, 8
        %v806 = vpop.permute.xlu0 %805
        %807 = vrot.lane.b32.xlu0 %v716, 8
        %v808 = vpop.permute.xlu0 %807
        %809 = vrot.lane.b32.xlu0 %v717, 8
        %v810 = vpop.permute.xlu0 %809
        %811 = vrot.lane.b32.xlu0 %v718, 8
        %v812 = vpop.permute.xlu0 %811
        %813 = vrot.lane.b32.xlu0 %v719, 8
        %v814 = vpop.permute.xlu0 %813
        %815 = vrot.lane.b32.xlu0 %v720, 8
        %v816 = vpop.permute.xlu0 %815
        %vm849 = vcmask 97344
        %850 = vst.msk [vmem:[#allocation3] sm:$0xff] %vm849, %v754
        %851 = vst.msk [vmem:[#allocation3 + $0x8] sm:$0xff] %vm849, %v756
        %852 = vst.msk [vmem:[#allocation3 + $0x10] sm:$0xff] %vm849, %v758
        %853 = vst.msk [vmem:[#allocation3 + $0x18] sm:$0xff] %vm849, %v760
        %854 = vst.msk [vmem:[#allocation3 + $0x20] sm:$0xff] %vm849, %v762
        %855 = vst.msk [vmem:[#allocation3 + $0x28] sm:$0xff] %vm849, %v764
        %856 = vst.msk [vmem:[#allocation3 + $0x30] sm:$0xff] %vm849, %v766
        %857 = vst.msk [vmem:[#allocation3 + $0x38] sm:$0xff] %vm849, %v768
        %858 = vst.msk [vmem:[#allocation3 + $0x40] sm:$0xff] %vm849, %v770
        %859 = vst.msk [vmem:[#allocation3 + $0x48] sm:$0xff] %vm849, %v772
        %860 = vst.msk [vmem:[#allocation3 + $0x50] sm:$0xff] %vm849, %v774
        %861 = vst.msk [vmem:[#allocation3 + $0x58] sm:$0xff] %vm849, %v776
        %862 = vst.msk [vmem:[#allocation3 + $0x60] sm:$0xff] %vm849, %v778
        %863 = vst.msk [vmem:[#allocation3 + $0x68] sm:$0xff] %vm849, %v780
        %864 = vst.msk [vmem:[#allocation3 + $0x70] sm:$0xff] %vm849, %v782
        %865 = vst.msk [vmem:[#allocation3 + $0x78] sm:$0xff] %vm849, %v784
        %866 = vst.msk [vmem:[#allocation3 + $0x80] sm:$0xff] %vm849, %v786
        %867 = vst.msk [vmem:[#allocation3 + $0x88] sm:$0xff] %vm849, %v788
        %868 = vst.msk [vmem:[#allocation3 + $0x90] sm:$0xff] %vm849, %v790
        %869 = vst.msk [vmem:[#allocation3 + $0x98] sm:$0xff] %vm849, %v792
        %870 = vst.msk [vmem:[#allocation3 + $0xa0] sm:$0xff] %vm849, %v794
        %871 = vst.msk [vmem:[#allocation3 + $0xa8] sm:$0xff] %vm849, %v796
        %872 = vst.msk [vmem:[#allocation3 + $0xb0] sm:$0xff] %vm849, %v798
        %873 = vst.msk [vmem:[#allocation3 + $0xb8] sm:$0xff] %vm849, %v800
        %874 = vst.msk [vmem:[#allocation3 + $0xc0] sm:$0xff] %vm849, %v802
        %875 = vst.msk [vmem:[#allocation3 + $0xc8] sm:$0xff] %vm849, %v804
        %876 = vst.msk [vmem:[#allocation3 + $0xd0] sm:$0xff] %vm849, %v806
        %877 = vst.msk [vmem:[#allocation3 + $0xd8] sm:$0xff] %vm849, %v808
        %878 = vst.msk [vmem:[#allocation3 + $0xe0] sm:$0xff] %vm849, %v810
        %879 = vst.msk [vmem:[#allocation3 + $0xe8] sm:$0xff] %vm849, %v812
        %880 = vst.msk [vmem:[#allocation3 + $0xf0] sm:$0xff] %vm849, %v814
        %881 = vst.msk [vmem:[#allocation3 + $0xf8] sm:$0xff] %vm849, %v816
        %v882 = vld [vmem:[%s399] sm:$0xff]
        %v883 = vld [vmem:[%s399 + $0x8] sm:$0xff]
        %v884 = vld [vmem:[%s399 + $0x18] sm:$0xff]
        %v885 = vld [vmem:[%s399 + $0x20] sm:$0xff]
        %v886 = vld [vmem:[%s399 + $0x30] sm:$0xff]
        %v887 = vld [vmem:[%s399 + $0x38] sm:$0xff]
        %v888 = vld [vmem:[%s399 + $0x48] sm:$0xff]
        %v889 = vld [vmem:[%s399 + $0x50] sm:$0xff]
        %v890 = vld [vmem:[%s399 + $0x60] sm:$0xff]
        %v891 = vld [vmem:[%s399 + $0x68] sm:$0xff]
        %v892 = vld [vmem:[%s399 + $0x78] sm:$0xff]
        %v893 = vld [vmem:[%s399 + $0x80] sm:$0xff]
        %v894 = vld [vmem:[%s399 + $0x90] sm:$0xff]
        %v895 = vld [vmem:[%s399 + $0x98] sm:$0xff]
        %v896 = vld [vmem:[%s399 + $0xa8] sm:$0xff]
        %v897 = vld [vmem:[%s399 + $0xb0] sm:$0xff]
        %v898 = vld [vmem:[%s399 + $0xc0] sm:$0xff]
        %v899 = vld [vmem:[%s399 + $0xc8] sm:$0xff]
        %v900 = vld [vmem:[%s399 + $0xd8] sm:$0xff]
        %v901 = vld [vmem:[%s399 + $0xe0] sm:$0xff]
        %v902 = vld [vmem:[%s399 + $0xf0] sm:$0xff]
        %v903 = vld [vmem:[%s399 + $0xf8] sm:$0xff]
        %v904 = vld [vmem:[%s399 + $0x108] sm:$0xff]
        %v905 = vld [vmem:[%s399 + $0x110] sm:$0xff]
        %v906 = vld [vmem:[%s399 + $0x120] sm:$0xff]
        %v907 = vld [vmem:[%s399 + $0x128] sm:$0xff]
        %v908 = vld [vmem:[%s399 + $0x138] sm:$0xff]
        %v909 = vld [vmem:[%s399 + $0x140] sm:$0xff]
        %v910 = vld [vmem:[%s399 + $0x150] sm:$0xff]
        %v911 = vld [vmem:[%s399 + $0x158] sm:$0xff]
        %v912 = vld [vmem:[%s399 + $0x168] sm:$0xff]
        %v913 = vld [vmem:[%s399 + $0x170] sm:$0xff]
        %946 = vrot.lane.b32.xlu0 %v882, 12
        %v947 = vpop.permute.xlu0 %946
        %948 = vrot.lane.b32.xlu0 %v883, 12
        %v949 = vpop.permute.xlu0 %948
        %950 = vrot.lane.b32.xlu0 %v884, 12
        %v951 = vpop.permute.xlu0 %950
        %952 = vrot.lane.b32.xlu0 %v885, 12
        %v953 = vpop.permute.xlu0 %952
        %954 = vrot.lane.b32.xlu0 %v886, 12
        %v955 = vpop.permute.xlu0 %954
        %956 = vrot.lane.b32.xlu0 %v887, 12
        %v957 = vpop.permute.xlu0 %956
        %958 = vrot.lane.b32.xlu0 %v888, 12
        %v959 = vpop.permute.xlu0 %958
        %960 = vrot.lane.b32.xlu0 %v889, 12
        %v961 = vpop.permute.xlu0 %960
        %962 = vrot.lane.b32.xlu0 %v890, 12
        %v963 = vpop.permute.xlu0 %962
        %964 = vrot.lane.b32.xlu0 %v891, 12
        %v965 = vpop.permute.xlu0 %964
        %966 = vrot.lane.b32.xlu0 %v892, 12
        %v967 = vpop.permute.xlu0 %966
        %968 = vrot.lane.b32.xlu0 %v893, 12
        %v969 = vpop.permute.xlu0 %968
        %970 = vrot.lane.b32.xlu0 %v894, 12
        %v971 = vpop.permute.xlu0 %970
        %972 = vrot.lane.b32.xlu0 %v895, 12
        %v973 = vpop.permute.xlu0 %972
        %974 = vrot.lane.b32.xlu0 %v896, 12
        %v975 = vpop.permute.xlu0 %974
        %976 = vrot.lane.b32.xlu0 %v897, 12
        %v977 = vpop.permute.xlu0 %976
        %978 = vrot.lane.b32.xlu0 %v898, 12
        %v979 = vpop.permute.xlu0 %978
        %980 = vrot.lane.b32.xlu0 %v899, 12
        %v981 = vpop.permute.xlu0 %980
        %982 = vrot.lane.b32.xlu0 %v900, 12
        %v983 = vpop.permute.xlu0 %982
        %984 = vrot.lane.b32.xlu0 %v901, 12
        %v985 = vpop.permute.xlu0 %984
        %986 = vrot.lane.b32.xlu0 %v902, 12
        %v987 = vpop.permute.xlu0 %986
        %988 = vrot.lane.b32.xlu0 %v903, 12
        %v989 = vpop.permute.xlu0 %988
        %990 = vrot.lane.b32.xlu0 %v904, 12
        %v991 = vpop.permute.xlu0 %990
        %992 = vrot.lane.b32.xlu0 %v905, 12
        %v993 = vpop.permute.xlu0 %992
        %994 = vrot.lane.b32.xlu0 %v906, 12
        %v995 = vpop.permute.xlu0 %994
        %996 = vrot.lane.b32.xlu0 %v907, 12
        %v997 = vpop.permute.xlu0 %996
        %998 = vrot.lane.b32.xlu0 %v908, 12
        %v999 = vpop.permute.xlu0 %998
        %1000 = vrot.lane.b32.xlu0 %v909, 12
        %v1001 = vpop.permute.xlu0 %1000
        %1002 = vrot.lane.b32.xlu0 %v910, 12
        %v1003 = vpop.permute.xlu0 %1002
        %1004 = vrot.lane.b32.xlu0 %v911, 12
        %v1005 = vpop.permute.xlu0 %1004
        %1006 = vrot.lane.b32.xlu0 %v912, 12
        %v1007 = vpop.permute.xlu0 %1006
        %1008 = vrot.lane.b32.xlu0 %v913, 12
        %v1009 = vpop.permute.xlu0 %1008
        %vm1042 = vcmask 130144
        %1043 = vst.msk [vmem:[#allocation3] sm:$0xff] %vm1042, %v947
        %1044 = vst.msk [vmem:[#allocation3 + $0x8] sm:$0xff] %vm1042, %v949
        %1045 = vst.msk [vmem:[#allocation3 + $0x10] sm:$0xff] %vm1042, %v951
        %1046 = vst.msk [vmem:[#allocation3 + $0x18] sm:$0xff] %vm1042, %v953
        %1047 = vst.msk [vmem:[#allocation3 + $0x20] sm:$0xff] %vm1042, %v955
        %1048 = vst.msk [vmem:[#allocation3 + $0x28] sm:$0xff] %vm1042, %v957
        %1049 = vst.msk [vmem:[#allocation3 + $0x30] sm:$0xff] %vm1042, %v959
        %1050 = vst.msk [vmem:[#allocation3 + $0x38] sm:$0xff] %vm1042, %v961
        %1051 = vst.msk [vmem:[#allocation3 + $0x40] sm:$0xff] %vm1042, %v963
        %1052 = vst.msk [vmem:[#allocation3 + $0x48] sm:$0xff] %vm1042, %v965
        %1053 = vst.msk [vmem:[#allocation3 + $0x50] sm:$0xff] %vm1042, %v967
        %1054 = vst.msk [vmem:[#allocation3 + $0x58] sm:$0xff] %vm1042, %v969
        %1055 = vst.msk [vmem:[#allocation3 + $0x60] sm:$0xff] %vm1042, %v971
        %1056 = vst.msk [vmem:[#allocation3 + $0x68] sm:$0xff] %vm1042, %v973
        %1057 = vst.msk [vmem:[#allocation3 + $0x70] sm:$0xff] %vm1042, %v975
        %1058 = vst.msk [vmem:[#allocation3 + $0x78] sm:$0xff] %vm1042, %v977
        %1059 = vst.msk [vmem:[#allocation3 + $0x80] sm:$0xff] %vm1042, %v979
        %1060 = vst.msk [vmem:[#allocation3 + $0x88] sm:$0xff] %vm1042, %v981
        %1061 = vst.msk [vmem:[#allocation3 + $0x90] sm:$0xff] %vm1042, %v983
        %1062 = vst.msk [vmem:[#allocation3 + $0x98] sm:$0xff] %vm1042, %v985
        %1063 = vst.msk [vmem:[#allocation3 + $0xa0] sm:$0xff] %vm1042, %v987
        %1064 = vst.msk [vmem:[#allocation3 + $0xa8] sm:$0xff] %vm1042, %v989
        %1065 = vst.msk [vmem:[#allocation3 + $0xb0] sm:$0xff] %vm1042, %v991
        %1066 = vst.msk [vmem:[#allocation3 + $0xb8] sm:$0xff] %vm1042, %v993
        %1067 = vst.msk [vmem:[#allocation3 + $0xc0] sm:$0xff] %vm1042, %v995
        %1068 = vst.msk [vmem:[#allocation3 + $0xc8] sm:$0xff] %vm1042, %v997
        %1069 = vst.msk [vmem:[#allocation3 + $0xd0] sm:$0xff] %vm1042, %v999
        %1070 = vst.msk [vmem:[#allocation3 + $0xd8] sm:$0xff] %vm1042, %v1001
        %1071 = vst.msk [vmem:[#allocation3 + $0xe0] sm:$0xff] %vm1042, %v1003
        %1072 = vst.msk [vmem:[#allocation3 + $0xe8] sm:$0xff] %vm1042, %v1005
        %1073 = vst.msk [vmem:[#allocation3 + $0xf0] sm:$0xff] %vm1042, %v1007
        %1074 = vst.msk [vmem:[#allocation3 + $0xf8] sm:$0xff] %vm1042, %v1009
        %v1075 = vld [vmem:[%s399 + $0x1] sm:$0xff]
        %v1076 = vld [vmem:[%s399 + $0x9] sm:$0xff]
        %v1077 = vld [vmem:[%s399 + $0x19] sm:$0xff]
        %v1078 = vld [vmem:[%s399 + $0x21] sm:$0xff]
        %v1079 = vld [vmem:[%s399 + $0x31] sm:$0xff]
        %v1080 = vld [vmem:[%s399 + $0x39] sm:$0xff]
        %v1081 = vld [vmem:[%s399 + $0x49] sm:$0xff]
        %v1082 = vld [vmem:[%s399 + $0x51] sm:$0xff]
        %v1083 = vld [vmem:[%s399 + $0x61] sm:$0xff]
        %v1084 = vld [vmem:[%s399 + $0x69] sm:$0xff]
        %v1085 = vld [vmem:[%s399 + $0x79] sm:$0xff]
        %v1086 = vld [vmem:[%s399 + $0x81] sm:$0xff]
        %v1087 = vld [vmem:[%s399 + $0x91] sm:$0xff]
        %v1088 = vld [vmem:[%s399 + $0x99] sm:$0xff]
        %v1089 = vld [vmem:[%s399 + $0xa9] sm:$0xff]
        %v1090 = vld [vmem:[%s399 + $0xb1] sm:$0xff]
        %v1091 = vld [vmem:[%s399 + $0xc1] sm:$0xff]
        %v1092 = vld [vmem:[%s399 + $0xc9] sm:$0xff]
        %v1093 = vld [vmem:[%s399 + $0xd9] sm:$0xff]
        %v1094 = vld [vmem:[%s399 + $0xe1] sm:$0xff]
        %v1095 = vld [vmem:[%s399 + $0xf1] sm:$0xff]
        %v1096 = vld [vmem:[%s399 + $0xf9] sm:$0xff]
        %v1097 = vld [vmem:[%s399 + $0x109] sm:$0xff]
        %v1098 = vld [vmem:[%s399 + $0x111] sm:$0xff]
        %v1099 = vld [vmem:[%s399 + $0x121] sm:$0xff]
        %v1100 = vld [vmem:[%s399 + $0x129] sm:$0xff]
        %v1101 = vld [vmem:[%s399 + $0x139] sm:$0xff]
        %v1102 = vld [vmem:[%s399 + $0x141] sm:$0xff]
        %v1103 = vld [vmem:[%s399 + $0x151] sm:$0xff]
        %v1104 = vld [vmem:[%s399 + $0x159] sm:$0xff]
        %v1105 = vld [vmem:[%s399 + $0x169] sm:$0xff]
        %v1106 = vld [vmem:[%s399 + $0x171] sm:$0xff]
        %1139 = vrot.lane.b32.xlu0 %v1075, 16
        %v1140 = vpop.permute.xlu0 %1139
        %1141 = vrot.lane.b32.xlu0 %v1076, 16
        %v1142 = vpop.permute.xlu0 %1141
        %1143 = vrot.lane.b32.xlu0 %v1077, 16
        %v1144 = vpop.permute.xlu0 %1143
        %1145 = vrot.lane.b32.xlu0 %v1078, 16
        %v1146 = vpop.permute.xlu0 %1145
        %1147 = vrot.lane.b32.xlu0 %v1079, 16
        %v1148 = vpop.permute.xlu0 %1147
        %1149 = vrot.lane.b32.xlu0 %v1080, 16
        %v1150 = vpop.permute.xlu0 %1149
        %1151 = vrot.lane.b32.xlu0 %v1081, 16
        %v1152 = vpop.permute.xlu0 %1151
        %1153 = vrot.lane.b32.xlu0 %v1082, 16
        %v1154 = vpop.permute.xlu0 %1153
        %1155 = vrot.lane.b32.xlu0 %v1083, 16
        %v1156 = vpop.permute.xlu0 %1155
        %1157 = vrot.lane.b32.xlu0 %v1084, 16
        %v1158 = vpop.permute.xlu0 %1157
        %1159 = vrot.lane.b32.xlu0 %v1085, 16
        %v1160 = vpop.permute.xlu0 %1159
        %1161 = vrot.lane.b32.xlu0 %v1086, 16
        %v1162 = vpop.permute.xlu0 %1161
        %1163 = vrot.lane.b32.xlu0 %v1087, 16
        %v1164 = vpop.permute.xlu0 %1163
        %1165 = vrot.lane.b32.xlu0 %v1088, 16
        %v1166 = vpop.permute.xlu0 %1165
        %1167 = vrot.lane.b32.xlu0 %v1089, 16
        %v1168 = vpop.permute.xlu0 %1167
        %1169 = vrot.lane.b32.xlu0 %v1090, 16
        %v1170 = vpop.permute.xlu0 %1169
        %1171 = vrot.lane.b32.xlu0 %v1091, 16
        %v1172 = vpop.permute.xlu0 %1171
        %1173 = vrot.lane.b32.xlu0 %v1092, 16
        %v1174 = vpop.permute.xlu0 %1173
        %1175 = vrot.lane.b32.xlu0 %v1093, 16
        %v1176 = vpop.permute.xlu0 %1175
        %1177 = vrot.lane.b32.xlu0 %v1094, 16
        %v1178 = vpop.permute.xlu0 %1177
        %1179 = vrot.lane.b32.xlu0 %v1095, 16
        %v1180 = vpop.permute.xlu0 %1179
        %1181 = vrot.lane.b32.xlu0 %v1096, 16
        %v1182 = vpop.permute.xlu0 %1181
        %1183 = vrot.lane.b32.xlu0 %v1097, 16
        %v1184 = vpop.permute.xlu0 %1183
        %1185 = vrot.lane.b32.xlu0 %v1098, 16
        %v1186 = vpop.permute.xlu0 %1185
        %1187 = vrot.lane.b32.xlu0 %v1099, 16
        %v1188 = vpop.permute.xlu0 %1187
        %1189 = vrot.lane.b32.xlu0 %v1100, 16
        %v1190 = vpop.permute.xlu0 %1189
        %1191 = vrot.lane.b32.xlu0 %v1101, 16
        %v1192 = vpop.permute.xlu0 %1191
        %1193 = vrot.lane.b32.xlu0 %v1102, 16
        %v1194 = vpop.permute.xlu0 %1193
        %1195 = vrot.lane.b32.xlu0 %v1103, 16
        %v1196 = vpop.permute.xlu0 %1195
        %1197 = vrot.lane.b32.xlu0 %v1104, 16
        %v1198 = vpop.permute.xlu0 %1197
        %1199 = vrot.lane.b32.xlu0 %v1105, 16
        %v1200 = vpop.permute.xlu0 %1199
        %1201 = vrot.lane.b32.xlu0 %v1106, 16
        %v1202 = vpop.permute.xlu0 %1201
        %vm1235 = vcmask 162944
        %1236 = vst.msk [vmem:[#allocation3] sm:$0xff] %vm1235, %v1140
        %1237 = vst.msk [vmem:[#allocation3 + $0x8] sm:$0xff] %vm1235, %v1142
        %1238 = vst.msk [vmem:[#allocation3 + $0x10] sm:$0xff] %vm1235, %v1144
        %1239 = vst.msk [vmem:[#allocation3 + $0x18] sm:$0xff] %vm1235, %v1146
        %1240 = vst.msk [vmem:[#allocation3 + $0x20] sm:$0xff] %vm1235, %v1148
        %1241 = vst.msk [vmem:[#allocation3 + $0x28] sm:$0xff] %vm1235, %v1150
        %1242 = vst.msk [vmem:[#allocation3 + $0x30] sm:$0xff] %vm1235, %v1152
        %1243 = vst.msk [vmem:[#allocation3 + $0x38] sm:$0xff] %vm1235, %v1154
        %1244 = vst.msk [vmem:[#allocation3 + $0x40] sm:$0xff] %vm1235, %v1156
        %1245 = vst.msk [vmem:[#allocation3 + $0x48] sm:$0xff] %vm1235, %v1158
        %1246 = vst.msk [vmem:[#allocation3 + $0x50] sm:$0xff] %vm1235, %v1160
        %1247 = vst.msk [vmem:[#allocation3 + $0x58] sm:$0xff] %vm1235, %v1162
        %1248 = vst.msk [vmem:[#allocation3 + $0x60] sm:$0xff] %vm1235, %v1164
        %1249 = vst.msk [vmem:[#allocation3 + $0x68] sm:$0xff] %vm1235, %v1166
        %1250 = vst.msk [vmem:[#allocation3 + $0x70] sm:$0xff] %vm1235, %v1168
        %1251 = vst.msk [vmem:[#allocation3 + $0x78] sm:$0xff] %vm1235, %v1170
        %1252 = vst.msk [vmem:[#allocation3 + $0x80] sm:$0xff] %vm1235, %v1172
        %1253 = vst.msk [vmem:[#allocation3 + $0x88] sm:$0xff] %vm1235, %v1174
        %1254 = vst.msk [vmem:[#allocation3 + $0x90] sm:$0xff] %vm1235, %v1176
        %1255 = vst.msk [vmem:[#allocation3 + $0x98] sm:$0xff] %vm1235, %v1178
        %1256 = vst.msk [vmem:[#allocation3 + $0xa0] sm:$0xff] %vm1235, %v1180
        %1257 = vst.msk [vmem:[#allocation3 + $0xa8] sm:$0xff] %vm1235, %v1182
        %1258 = vst.msk [vmem:[#allocation3 + $0xb0] sm:$0xff] %vm1235, %v1184
        %1259 = vst.msk [vmem:[#allocation3 + $0xb8] sm:$0xff] %vm1235, %v1186
        %1260 = vst.msk [vmem:[#allocation3 + $0xc0] sm:$0xff] %vm1235, %v1188
        %1261 = vst.msk [vmem:[#allocation3 + $0xc8] sm:$0xff] %vm1235, %v1190
        %1262 = vst.msk [vmem:[#allocation3 + $0xd0] sm:$0xff] %vm1235, %v1192
        %1263 = vst.msk [vmem:[#allocation3 + $0xd8] sm:$0xff] %vm1235, %v1194
        %1264 = vst.msk [vmem:[#allocation3 + $0xe0] sm:$0xff] %vm1235, %v1196
        %1265 = vst.msk [vmem:[#allocation3 + $0xe8] sm:$0xff] %vm1235, %v1198
        %1266 = vst.msk [vmem:[#allocation3 + $0xf0] sm:$0xff] %vm1235, %v1200
        %1267 = vst.msk [vmem:[#allocation3 + $0xf8] sm:$0xff] %vm1235, %v1202
        %v1268 = vld [vmem:[%s399 + $0x2] sm:$0xff]
        %v1269 = vld [vmem:[%s399 + $0xa] sm:$0xff]
        %v1270 = vld [vmem:[%s399 + $0x1a] sm:$0xff]
        %v1271 = vld [vmem:[%s399 + $0x22] sm:$0xff]
        %v1272 = vld [vmem:[%s399 + $0x32] sm:$0xff]
        %v1273 = vld [vmem:[%s399 + $0x3a] sm:$0xff]
        %v1274 = vld [vmem:[%s399 + $0x4a] sm:$0xff]
        %v1275 = vld [vmem:[%s399 + $0x52] sm:$0xff]
        %v1276 = vld [vmem:[%s399 + $0x62] sm:$0xff]
        %v1277 = vld [vmem:[%s399 + $0x6a] sm:$0xff]
        %v1278 = vld [vmem:[%s399 + $0x7a] sm:$0xff]
        %v1279 = vld [vmem:[%s399 + $0x82] sm:$0xff]
        %v1280 = vld [vmem:[%s399 + $0x92] sm:$0xff]
        %v1281 = vld [vmem:[%s399 + $0x9a] sm:$0xff]
        %v1282 = vld [vmem:[%s399 + $0xaa] sm:$0xff]
        %v1283 = vld [vmem:[%s399 + $0xb2] sm:$0xff]
        %v1284 = vld [vmem:[%s399 + $0xc2] sm:$0xff]
        %v1285 = vld [vmem:[%s399 + $0xca] sm:$0xff]
        %v1286 = vld [vmem:[%s399 + $0xda] sm:$0xff]
        %v1287 = vld [vmem:[%s399 + $0xe2] sm:$0xff]
        %v1288 = vld [vmem:[%s399 + $0xf2] sm:$0xff]
        %v1289 = vld [vmem:[%s399 + $0xfa] sm:$0xff]
        %v1290 = vld [vmem:[%s399 + $0x10a] sm:$0xff]
        %v1291 = vld [vmem:[%s399 + $0x112] sm:$0xff]
        %v1292 = vld [vmem:[%s399 + $0x122] sm:$0xff]
        %v1293 = vld [vmem:[%s399 + $0x12a] sm:$0xff]
        %v1294 = vld [vmem:[%s399 + $0x13a] sm:$0xff]
        %v1295 = vld [vmem:[%s399 + $0x142] sm:$0xff]
        %v1296 = vld [vmem:[%s399 + $0x152] sm:$0xff]
        %v1297 = vld [vmem:[%s399 + $0x15a] sm:$0xff]
        %v1298 = vld [vmem:[%s399 + $0x16a] sm:$0xff]
        %v1299 = vld [vmem:[%s399 + $0x172] sm:$0xff]
        %1332 = vrot.lane.b32.xlu0 %v1268, 20
        %v1333 = vpop.permute.xlu0 %1332
        %1334 = vrot.lane.b32.xlu0 %v1269, 20
        %v1335 = vpop.permute.xlu0 %1334
        %1336 = vrot.lane.b32.xlu0 %v1270, 20
        %v1337 = vpop.permute.xlu0 %1336
        %1338 = vrot.lane.b32.xlu0 %v1271, 20
        %v1339 = vpop.permute.xlu0 %1338
        %1340 = vrot.lane.b32.xlu0 %v1272, 20
        %v1341 = vpop.permute.xlu0 %1340
        %1342 = vrot.lane.b32.xlu0 %v1273, 20
        %v1343 = vpop.permute.xlu0 %1342
        %1344 = vrot.lane.b32.xlu0 %v1274, 20
        %v1345 = vpop.permute.xlu0 %1344
        %1346 = vrot.lane.b32.xlu0 %v1275, 20
        %v1347 = vpop.permute.xlu0 %1346
        %1348 = vrot.lane.b32.xlu0 %v1276, 20
        %v1349 = vpop.permute.xlu0 %1348
        %1350 = vrot.lane.b32.xlu0 %v1277, 20
        %v1351 = vpop.permute.xlu0 %1350
        %1352 = vrot.lane.b32.xlu0 %v1278, 20
        %v1353 = vpop.permute.xlu0 %1352
        %1354 = vrot.lane.b32.xlu0 %v1279, 20
        %v1355 = vpop.permute.xlu0 %1354
        %1356 = vrot.lane.b32.xlu0 %v1280, 20
        %v1357 = vpop.permute.xlu0 %1356
        %1358 = vrot.lane.b32.xlu0 %v1281, 20
        %v1359 = vpop.permute.xlu0 %1358
        %1360 = vrot.lane.b32.xlu0 %v1282, 20
        %v1361 = vpop.permute.xlu0 %1360
        %1362 = vrot.lane.b32.xlu0 %v1283, 20
        %v1363 = vpop.permute.xlu0 %1362
        %1364 = vrot.lane.b32.xlu0 %v1284, 20
        %v1365 = vpop.permute.xlu0 %1364
        %1366 = vrot.lane.b32.xlu0 %v1285, 20
        %v1367 = vpop.permute.xlu0 %1366
        %1368 = vrot.lane.b32.xlu0 %v1286, 20
        %v1369 = vpop.permute.xlu0 %1368
        %1370 = vrot.lane.b32.xlu0 %v1287, 20
        %v1371 = vpop.permute.xlu0 %1370
        %1372 = vrot.lane.b32.xlu0 %v1288, 20
        %v1373 = vpop.permute.xlu0 %1372
        %1374 = vrot.lane.b32.xlu0 %v1289, 20
        %v1375 = vpop.permute.xlu0 %1374
        %1376 = vrot.lane.b32.xlu0 %v1290, 20
        %v1377 = vpop.permute.xlu0 %1376
        %1378 = vrot.lane.b32.xlu0 %v1291, 20
        %v1379 = vpop.permute.xlu0 %1378
        %1380 = vrot.lane.b32.xlu0 %v1292, 20
        %v1381 = vpop.permute.xlu0 %1380
        %1382 = vrot.lane.b32.xlu0 %v1293, 20
        %v1383 = vpop.permute.xlu0 %1382
        %1384 = vrot.lane.b32.xlu0 %v1294, 20
        %v1385 = vpop.permute.xlu0 %1384
        %1386 = vrot.lane.b32.xlu0 %v1295, 20
        %v1387 = vpop.permute.xlu0 %1386
        %1388 = vrot.lane.b32.xlu0 %v1296, 20
        %v1389 = vpop.permute.xlu0 %1388
        %1390 = vrot.lane.b32.xlu0 %v1297, 20
        %v1391 = vpop.permute.xlu0 %1390
        %1392 = vrot.lane.b32.xlu0 %v1298, 20
        %v1393 = vpop.permute.xlu0 %1392
        %1394 = vrot.lane.b32.xlu0 %v1299, 20
        %v1395 = vpop.permute.xlu0 %1394
        %vm1428 = vcmask 195744
        %1429 = vst.msk [vmem:[#allocation3] sm:$0xff] %vm1428, %v1333
        %1430 = vst.msk [vmem:[#allocation3 + $0x8] sm:$0xff] %vm1428, %v1335
        %1431 = vst.msk [vmem:[#allocation3 + $0x10] sm:$0xff] %vm1428, %v1337
        %1432 = vst.msk [vmem:[#allocation3 + $0x18] sm:$0xff] %vm1428, %v1339
        %1433 = vst.msk [vmem:[#allocation3 + $0x20] sm:$0xff] %vm1428, %v1341
        %1434 = vst.msk [vmem:[#allocation3 + $0x28] sm:$0xff] %vm1428, %v1343
        %1435 = vst.msk [vmem:[#allocation3 + $0x30] sm:$0xff] %vm1428, %v1345
        %1436 = vst.msk [vmem:[#allocation3 + $0x38] sm:$0xff] %vm1428, %v1347
        %1437 = vst.msk [vmem:[#allocation3 + $0x40] sm:$0xff] %vm1428, %v1349
        %1438 = vst.msk [vmem:[#allocation3 + $0x48] sm:$0xff] %vm1428, %v1351
        %1439 = vst.msk [vmem:[#allocation3 + $0x50] sm:$0xff] %vm1428, %v1353
        %1440 = vst.msk [vmem:[#allocation3 + $0x58] sm:$0xff] %vm1428, %v1355
        %1441 = vst.msk [vmem:[#allocation3 + $0x60] sm:$0xff] %vm1428, %v1357
        %1442 = vst.msk [vmem:[#allocation3 + $0x68] sm:$0xff] %vm1428, %v1359
        %1443 = vst.msk [vmem:[#allocation3 + $0x70] sm:$0xff] %vm1428, %v1361
        %1444 = vst.msk [vmem:[#allocation3 + $0x78] sm:$0xff] %vm1428, %v1363
        %1445 = vst.msk [vmem:[#allocation3 + $0x80] sm:$0xff] %vm1428, %v1365
        %1446 = vst.msk [vmem:[#allocation3 + $0x88] sm:$0xff] %vm1428, %v1367
        %1447 = vst.msk [vmem:[#allocation3 + $0x90] sm:$0xff] %vm1428, %v1369
        %1448 = vst.msk [vmem:[#allocation3 + $0x98] sm:$0xff] %vm1428, %v1371
        %1449 = vst.msk [vmem:[#allocation3 + $0xa0] sm:$0xff] %vm1428, %v1373
        %1450 = vst.msk [vmem:[#allocation3 + $0xa8] sm:$0xff] %vm1428, %v1375
        %1451 = vst.msk [vmem:[#allocation3 + $0xb0] sm:$0xff] %vm1428, %v1377
        %1452 = vst.msk [vmem:[#allocation3 + $0xb8] sm:$0xff] %vm1428, %v1379
        %1453 = vst.msk [vmem:[#allocation3 + $0xc0] sm:$0xff] %vm1428, %v1381
        %1454 = vst.msk [vmem:[#allocation3 + $0xc8] sm:$0xff] %vm1428, %v1383
        %1455 = vst.msk [vmem:[#allocation3 + $0xd0] sm:$0xff] %vm1428, %v1385
        %1456 = vst.msk [vmem:[#allocation3 + $0xd8] sm:$0xff] %vm1428, %v1387
        %1457 = vst.msk [vmem:[#allocation3 + $0xe0] sm:$0xff] %vm1428, %v1389
        %1458 = vst.msk [vmem:[#allocation3 + $0xe8] sm:$0xff] %vm1428, %v1391
        %1459 = vst.msk [vmem:[#allocation3 + $0xf0] sm:$0xff] %vm1428, %v1393
        %1460 = vst.msk [vmem:[#allocation3 + $0xf8] sm:$0xff] %vm1428, %v1395
        %s1461 = scalar_lea.vmem [#allocation2], 48
        %v1462 = vld [vmem:[%s1461] sm:$0xff]
        %v1463 = vld [vmem:[%s1461 + $0x8] sm:$0xff]
        %v1464 = vld [vmem:[%s1461 + $0x18] sm:$0xff]
        %v1465 = vld [vmem:[%s1461 + $0x20] sm:$0xff]
        %v1466 = vld [vmem:[%s1461 + $0x30] sm:$0xff]
        %v1467 = vld [vmem:[%s1461 + $0x38] sm:$0xff]
        %v1468 = vld [vmem:[%s1461 + $0x48] sm:$0xff]
        %v1469 = vld [vmem:[%s1461 + $0x50] sm:$0xff]
        %v1470 = vld [vmem:[%s1461 + $0x60] sm:$0xff]
        %v1471 = vld [vmem:[%s1461 + $0x68] sm:$0xff]
        %v1472 = vld [vmem:[%s1461 + $0x78] sm:$0xff]
        %v1473 = vld [vmem:[%s1461 + $0x80] sm:$0xff]
        %v1474 = vld [vmem:[%s1461 + $0x90] sm:$0xff]
        %v1475 = vld [vmem:[%s1461 + $0x98] sm:$0xff]
        %v1476 = vld [vmem:[%s1461 + $0xa8] sm:$0xff]
        %v1477 = vld [vmem:[%s1461 + $0xb0] sm:$0xff]
        %v1478 = vld [vmem:[%s1461 + $0xc0] sm:$0xff]
        %v1479 = vld [vmem:[%s1461 + $0xc8] sm:$0xff]
        %v1480 = vld [vmem:[%s1461 + $0xd8] sm:$0xff]
        %v1481 = vld [vmem:[%s1461 + $0xe0] sm:$0xff]
        %v1482 = vld [vmem:[%s1461 + $0xf0] sm:$0xff]
        %v1483 = vld [vmem:[%s1461 + $0xf8] sm:$0xff]
        %v1484 = vld [vmem:[%s1461 + $0x108] sm:$0xff]
        %v1485 = vld [vmem:[%s1461 + $0x110] sm:$0xff]
        %v1486 = vld [vmem:[%s1461 + $0x120] sm:$0xff]
        %v1487 = vld [vmem:[%s1461 + $0x128] sm:$0xff]
        %v1488 = vld [vmem:[%s1461 + $0x138] sm:$0xff]
        %v1489 = vld [vmem:[%s1461 + $0x140] sm:$0xff]
        %v1490 = vld [vmem:[%s1461 + $0x150] sm:$0xff]
        %v1491 = vld [vmem:[%s1461 + $0x158] sm:$0xff]
        %v1492 = vld [vmem:[%s1461 + $0x168] sm:$0xff]
        %v1493 = vld [vmem:[%s1461 + $0x170] sm:$0xff]
        %1526 = vrot.lane.b32.xlu0 %v1462, 24
        %v1527 = vpop.permute.xlu0 %1526
        %1528 = vrot.lane.b32.xlu0 %v1463, 24
        %v1529 = vpop.permute.xlu0 %1528
        %1530 = vrot.lane.b32.xlu0 %v1464, 24
        %v1531 = vpop.permute.xlu0 %1530
        %1532 = vrot.lane.b32.xlu0 %v1465, 24
        %v1533 = vpop.permute.xlu0 %1532
        %1534 = vrot.lane.b32.xlu0 %v1466, 24
        %v1535 = vpop.permute.xlu0 %1534
        %1536 = vrot.lane.b32.xlu0 %v1467, 24
        %v1537 = vpop.permute.xlu0 %1536
        %1538 = vrot.lane.b32.xlu0 %v1468, 24
        %v1539 = vpop.permute.xlu0 %1538
        %1540 = vrot.lane.b32.xlu0 %v1469, 24
        %v1541 = vpop.permute.xlu0 %1540
        %1542 = vrot.lane.b32.xlu0 %v1470, 24
        %v1543 = vpop.permute.xlu0 %1542
        %1544 = vrot.lane.b32.xlu0 %v1471, 24
        %v1545 = vpop.permute.xlu0 %1544
        %1546 = vrot.lane.b32.xlu0 %v1472, 24
        %v1547 = vpop.permute.xlu0 %1546
        %1548 = vrot.lane.b32.xlu0 %v1473, 24
        %v1549 = vpop.permute.xlu0 %1548
        %1550 = vrot.lane.b32.xlu0 %v1474, 24
        %v1551 = vpop.permute.xlu0 %1550
        %1552 = vrot.lane.b32.xlu0 %v1475, 24
        %v1553 = vpop.permute.xlu0 %1552
        %1554 = vrot.lane.b32.xlu0 %v1476, 24
        %v1555 = vpop.permute.xlu0 %1554
        %1556 = vrot.lane.b32.xlu0 %v1477, 24
        %v1557 = vpop.permute.xlu0 %1556
        %1558 = vrot.lane.b32.xlu0 %v1478, 24
        %v1559 = vpop.permute.xlu0 %1558
        %1560 = vrot.lane.b32.xlu0 %v1479, 24
        %v1561 = vpop.permute.xlu0 %1560
        %1562 = vrot.lane.b32.xlu0 %v1480, 24
        %v1563 = vpop.permute.xlu0 %1562
        %1564 = vrot.lane.b32.xlu0 %v1481, 24
        %v1565 = vpop.permute.xlu0 %1564
        %1566 = vrot.lane.b32.xlu0 %v1482, 24
        %v1567 = vpop.permute.xlu0 %1566
        %1568 = vrot.lane.b32.xlu0 %v1483, 24
        %v1569 = vpop.permute.xlu0 %1568
        %1570 = vrot.lane.b32.xlu0 %v1484, 24
        %v1571 = vpop.permute.xlu0 %1570
        %1572 = vrot.lane.b32.xlu0 %v1485, 24
        %v1573 = vpop.permute.xlu0 %1572
        %1574 = vrot.lane.b32.xlu0 %v1486, 24
        %v1575 = vpop.permute.xlu0 %1574
        %1576 = vrot.lane.b32.xlu0 %v1487, 24
        %v1577 = vpop.permute.xlu0 %1576
        %1578 = vrot.lane.b32.xlu0 %v1488, 24
        %v1579 = vpop.permute.xlu0 %1578
        %1580 = vrot.lane.b32.xlu0 %v1489, 24
        %v1581 = vpop.permute.xlu0 %1580
        %1582 = vrot.lane.b32.xlu0 %v1490, 24
        %v1583 = vpop.permute.xlu0 %1582
        %1584 = vrot.lane.b32.xlu0 %v1491, 24
        %v1585 = vpop.permute.xlu0 %1584
        %1586 = vrot.lane.b32.xlu0 %v1492, 24
        %v1587 = vpop.permute.xlu0 %1586
        %1588 = vrot.lane.b32.xlu0 %v1493, 24
        %v1589 = vpop.permute.xlu0 %1588
        %vm1622 = vcmask 228544
        %1623 = vst.msk [vmem:[#allocation3] sm:$0xff] %vm1622, %v1527
        %1624 = vst.msk [vmem:[#allocation3 + $0x8] sm:$0xff] %vm1622, %v1529
        %1625 = vst.msk [vmem:[#allocation3 + $0x10] sm:$0xff] %vm1622, %v1531
        %1626 = vst.msk [vmem:[#allocation3 + $0x18] sm:$0xff] %vm1622, %v1533
        %1627 = vst.msk [vmem:[#allocation3 + $0x20] sm:$0xff] %vm1622, %v1535
        %1628 = vst.msk [vmem:[#allocation3 + $0x28] sm:$0xff] %vm1622, %v1537
        %1629 = vst.msk [vmem:[#allocation3 + $0x30] sm:$0xff] %vm1622, %v1539
        %1630 = vst.msk [vmem:[#allocation3 + $0x38] sm:$0xff] %vm1622, %v1541
        %1631 = vst.msk [vmem:[#allocation3 + $0x40] sm:$0xff] %vm1622, %v1543
        %1632 = vst.msk [vmem:[#allocation3 + $0x48] sm:$0xff] %vm1622, %v1545
        %1633 = vst.msk [vmem:[#allocation3 + $0x50] sm:$0xff] %vm1622, %v1547
        %1634 = vst.msk [vmem:[#allocation3 + $0x58] sm:$0xff] %vm1622, %v1549
        %1635 = vst.msk [vmem:[#allocation3 + $0x60] sm:$0xff] %vm1622, %v1551
        %1636 = vst.msk [vmem:[#allocation3 + $0x68] sm:$0xff] %vm1622, %v1553
        %1637 = vst.msk [vmem:[#allocation3 + $0x70] sm:$0xff] %vm1622, %v1555
        %1638 = vst.msk [vmem:[#allocation3 + $0x78] sm:$0xff] %vm1622, %v1557
        %1639 = vst.msk [vmem:[#allocation3 + $0x80] sm:$0xff] %vm1622, %v1559
        %1640 = vst.msk [vmem:[#allocation3 + $0x88] sm:$0xff] %vm1622, %v1561
        %1641 = vst.msk [vmem:[#allocation3 + $0x90] sm:$0xff] %vm1622, %v1563
        %1642 = vst.msk [vmem:[#allocation3 + $0x98] sm:$0xff] %vm1622, %v1565
        %1643 = vst.msk [vmem:[#allocation3 + $0xa0] sm:$0xff] %vm1622, %v1567
        %1644 = vst.msk [vmem:[#allocation3 + $0xa8] sm:$0xff] %vm1622, %v1569
        %1645 = vst.msk [vmem:[#allocation3 + $0xb0] sm:$0xff] %vm1622, %v1571
        %1646 = vst.msk [vmem:[#allocation3 + $0xb8] sm:$0xff] %vm1622, %v1573
        %1647 = vst.msk [vmem:[#allocation3 + $0xc0] sm:$0xff] %vm1622, %v1575
        %1648 = vst.msk [vmem:[#allocation3 + $0xc8] sm:$0xff] %vm1622, %v1577
        %1649 = vst.msk [vmem:[#allocation3 + $0xd0] sm:$0xff] %vm1622, %v1579
        %1650 = vst.msk [vmem:[#allocation3 + $0xd8] sm:$0xff] %vm1622, %v1581
        %1651 = vst.msk [vmem:[#allocation3 + $0xe0] sm:$0xff] %vm1622, %v1583
        %1652 = vst.msk [vmem:[#allocation3 + $0xe8] sm:$0xff] %vm1622, %v1585
        %1653 = vst.msk [vmem:[#allocation3 + $0xf0] sm:$0xff] %vm1622, %v1587
        %1654 = vst.msk [vmem:[#allocation3 + $0xf8] sm:$0xff] %vm1622, %v1589
        %v1655 = vld [vmem:[%s1461 + $0x1] sm:$0xff]
        %v1656 = vld [vmem:[%s1461 + $0x9] sm:$0xff]
        %v1657 = vld [vmem:[%s1461 + $0x19] sm:$0xff]
        %v1658 = vld [vmem:[%s1461 + $0x21] sm:$0xff]
        %v1659 = vld [vmem:[%s1461 + $0x31] sm:$0xff]
        %v1660 = vld [vmem:[%s1461 + $0x39] sm:$0xff]
        %v1661 = vld [vmem:[%s1461 + $0x49] sm:$0xff]
        %v1662 = vld [vmem:[%s1461 + $0x51] sm:$0xff]
        %v1663 = vld [vmem:[%s1461 + $0x61] sm:$0xff]
        %v1664 = vld [vmem:[%s1461 + $0x69] sm:$0xff]
        %v1665 = vld [vmem:[%s1461 + $0x79] sm:$0xff]
        %v1666 = vld [vmem:[%s1461 + $0x81] sm:$0xff]
        %v1667 = vld [vmem:[%s1461 + $0x91] sm:$0xff]
        %v1668 = vld [vmem:[%s1461 + $0x99] sm:$0xff]
        %v1669 = vld [vmem:[%s1461 + $0xa9] sm:$0xff]
        %v1670 = vld [vmem:[%s1461 + $0xb1] sm:$0xff]
        %v1671 = vld [vmem:[%s1461 + $0xc1] sm:$0xff]
        %v1672 = vld [vmem:[%s1461 + $0xc9] sm:$0xff]
        %v1673 = vld [vmem:[%s1461 + $0xd9] sm:$0xff]
        %v1674 = vld [vmem:[%s1461 + $0xe1] sm:$0xff]
        %v1675 = vld [vmem:[%s1461 + $0xf1] sm:$0xff]
        %v1676 = vld [vmem:[%s1461 + $0xf9] sm:$0xff]
        %v1677 = vld [vmem:[%s1461 + $0x109] sm:$0xff]
        %v1678 = vld [vmem:[%s1461 + $0x111] sm:$0xff]
        %v1679 = vld [vmem:[%s1461 + $0x121] sm:$0xff]
        %v1680 = vld [vmem:[%s1461 + $0x129] sm:$0xff]
        %v1681 = vld [vmem:[%s1461 + $0x139] sm:$0xff]
        %v1682 = vld [vmem:[%s1461 + $0x141] sm:$0xff]
        %v1683 = vld [vmem:[%s1461 + $0x151] sm:$0xff]
        %v1684 = vld [vmem:[%s1461 + $0x159] sm:$0xff]
        %v1685 = vld [vmem:[%s1461 + $0x169] sm:$0xff]
        %v1686 = vld [vmem:[%s1461 + $0x171] sm:$0xff]
        %1719 = vrot.lane.b32.xlu0 %v1655, 28
        %v1720 = vpop.permute.xlu0 %1719
        %1721 = vrot.lane.b32.xlu0 %v1656, 28
        %v1722 = vpop.permute.xlu0 %1721
        %1723 = vrot.lane.b32.xlu0 %v1657, 28
        %v1724 = vpop.permute.xlu0 %1723
        %1725 = vrot.lane.b32.xlu0 %v1658, 28
        %v1726 = vpop.permute.xlu0 %1725
        %1727 = vrot.lane.b32.xlu0 %v1659, 28
        %v1728 = vpop.permute.xlu0 %1727
        %1729 = vrot.lane.b32.xlu0 %v1660, 28
        %v1730 = vpop.permute.xlu0 %1729
        %1731 = vrot.lane.b32.xlu0 %v1661, 28
        %v1732 = vpop.permute.xlu0 %1731
        %1733 = vrot.lane.b32.xlu0 %v1662, 28
        %v1734 = vpop.permute.xlu0 %1733
        %1735 = vrot.lane.b32.xlu0 %v1663, 28
        %v1736 = vpop.permute.xlu0 %1735
        %1737 = vrot.lane.b32.xlu0 %v1664, 28
        %v1738 = vpop.permute.xlu0 %1737
        %1739 = vrot.lane.b32.xlu0 %v1665, 28
        %v1740 = vpop.permute.xlu0 %1739
        %1741 = vrot.lane.b32.xlu0 %v1666, 28
        %v1742 = vpop.permute.xlu0 %1741
        %1743 = vrot.lane.b32.xlu0 %v1667, 28
        %v1744 = vpop.permute.xlu0 %1743
        %1745 = vrot.lane.b32.xlu0 %v1668, 28
        %v1746 = vpop.permute.xlu0 %1745
        %1747 = vrot.lane.b32.xlu0 %v1669, 28
        %v1748 = vpop.permute.xlu0 %1747
        %1749 = vrot.lane.b32.xlu0 %v1670, 28
        %v1750 = vpop.permute.xlu0 %1749
        %1751 = vrot.lane.b32.xlu0 %v1671, 28
        %v1752 = vpop.permute.xlu0 %1751
        %1753 = vrot.lane.b32.xlu0 %v1672, 28
        %v1754 = vpop.permute.xlu0 %1753
        %1755 = vrot.lane.b32.xlu0 %v1673, 28
        %v1756 = vpop.permute.xlu0 %1755
        %1757 = vrot.lane.b32.xlu0 %v1674, 28
        %v1758 = vpop.permute.xlu0 %1757
        %1759 = vrot.lane.b32.xlu0 %v1675, 28
        %v1760 = vpop.permute.xlu0 %1759
        %1761 = vrot.lane.b32.xlu0 %v1676, 28
        %v1762 = vpop.permute.xlu0 %1761
        %1763 = vrot.lane.b32.xlu0 %v1677, 28
        %v1764 = vpop.permute.xlu0 %1763
        %1765 = vrot.lane.b32.xlu0 %v1678, 28
        %v1766 = vpop.permute.xlu0 %1765
        %1767 = vrot.lane.b32.xlu0 %v1679, 28
        %v1768 = vpop.permute.xlu0 %1767
        %1769 = vrot.lane.b32.xlu0 %v1680, 28
        %v1770 = vpop.permute.xlu0 %1769
        %1771 = vrot.lane.b32.xlu0 %v1681, 28
        %v1772 = vpop.permute.xlu0 %1771
        %1773 = vrot.lane.b32.xlu0 %v1682, 28
        %v1774 = vpop.permute.xlu0 %1773
        %1775 = vrot.lane.b32.xlu0 %v1683, 28
        %v1776 = vpop.permute.xlu0 %1775
        %1777 = vrot.lane.b32.xlu0 %v1684, 28
        %v1778 = vpop.permute.xlu0 %1777
        %1779 = vrot.lane.b32.xlu0 %v1685, 28
        %v1780 = vpop.permute.xlu0 %1779
        %1781 = vrot.lane.b32.xlu0 %v1686, 28
        %v1782 = vpop.permute.xlu0 %1781
        %vm1815 = vcmask 261344
        %1816 = vst.msk [vmem:[#allocation3] sm:$0xff] %vm1815, %v1720
        %1817 = vst.msk [vmem:[#allocation3 + $0x8] sm:$0xff] %vm1815, %v1722
        %1818 = vst.msk [vmem:[#allocation3 + $0x10] sm:$0xff] %vm1815, %v1724
        %1819 = vst.msk [vmem:[#allocation3 + $0x18] sm:$0xff] %vm1815, %v1726
        %1820 = vst.msk [vmem:[#allocation3 + $0x20] sm:$0xff] %vm1815, %v1728
        %1821 = vst.msk [vmem:[#allocation3 + $0x28] sm:$0xff] %vm1815, %v1730
        %1822 = vst.msk [vmem:[#allocation3 + $0x30] sm:$0xff] %vm1815, %v1732
        %1823 = vst.msk [vmem:[#allocation3 + $0x38] sm:$0xff] %vm1815, %v1734
        %1824 = vst.msk [vmem:[#allocation3 + $0x40] sm:$0xff] %vm1815, %v1736
        %1825 = vst.msk [vmem:[#allocation3 + $0x48] sm:$0xff] %vm1815, %v1738
        %1826 = vst.msk [vmem:[#allocation3 + $0x50] sm:$0xff] %vm1815, %v1740
        %1827 = vst.msk [vmem:[#allocation3 + $0x58] sm:$0xff] %vm1815, %v1742
        %1828 = vst.msk [vmem:[#allocation3 + $0x60] sm:$0xff] %vm1815, %v1744
        %1829 = vst.msk [vmem:[#allocation3 + $0x68] sm:$0xff] %vm1815, %v1746
        %1830 = vst.msk [vmem:[#allocation3 + $0x70] sm:$0xff] %vm1815, %v1748
        %1831 = vst.msk [vmem:[#allocation3 + $0x78] sm:$0xff] %vm1815, %v1750
        %1832 = vst.msk [vmem:[#allocation3 + $0x80] sm:$0xff] %vm1815, %v1752
        %1833 = vst.msk [vmem:[#allocation3 + $0x88] sm:$0xff] %vm1815, %v1754
        %1834 = vst.msk [vmem:[#allocation3 + $0x90] sm:$0xff] %vm1815, %v1756
        %1835 = vst.msk [vmem:[#allocation3 + $0x98] sm:$0xff] %vm1815, %v1758
        %1836 = vst.msk [vmem:[#allocation3 + $0xa0] sm:$0xff] %vm1815, %v1760
        %1837 = vst.msk [vmem:[#allocation3 + $0xa8] sm:$0xff] %vm1815, %v1762
        %1838 = vst.msk [vmem:[#allocation3 + $0xb0] sm:$0xff] %vm1815, %v1764
        %1839 = vst.msk [vmem:[#allocation3 + $0xb8] sm:$0xff] %vm1815, %v1766
        %1840 = vst.msk [vmem:[#allocation3 + $0xc0] sm:$0xff] %vm1815, %v1768
        %1841 = vst.msk [vmem:[#allocation3 + $0xc8] sm:$0xff] %vm1815, %v1770
        %1842 = vst.msk [vmem:[#allocation3 + $0xd0] sm:$0xff] %vm1815, %v1772
        %1843 = vst.msk [vmem:[#allocation3 + $0xd8] sm:$0xff] %vm1815, %v1774
        %1844 = vst.msk [vmem:[#allocation3 + $0xe0] sm:$0xff] %vm1815, %v1776
        %1845 = vst.msk [vmem:[#allocation3 + $0xe8] sm:$0xff] %vm1815, %v1778
        %1846 = vst.msk [vmem:[#allocation3 + $0xf0] sm:$0xff] %vm1815, %v1780
        %1847 = vst.msk [vmem:[#allocation3 + $0xf8] sm:$0xff] %vm1815, %v1782
        %v1848 = vld [vmem:[%s1461 + $0x2] sm:$0xff]
        %v1849 = vld [vmem:[%s1461 + $0xa] sm:$0xff]
        %v1850 = vld [vmem:[%s1461 + $0x1a] sm:$0xff]
        %v1851 = vld [vmem:[%s1461 + $0x22] sm:$0xff]
        %v1852 = vld [vmem:[%s1461 + $0x32] sm:$0xff]
        %v1853 = vld [vmem:[%s1461 + $0x3a] sm:$0xff]
        %v1854 = vld [vmem:[%s1461 + $0x4a] sm:$0xff]
        %v1855 = vld [vmem:[%s1461 + $0x52] sm:$0xff]
        %v1856 = vld [vmem:[%s1461 + $0x62] sm:$0xff]
        %v1857 = vld [vmem:[%s1461 + $0x6a] sm:$0xff]
        %v1858 = vld [vmem:[%s1461 + $0x7a] sm:$0xff]
        %v1859 = vld [vmem:[%s1461 + $0x82] sm:$0xff]
        %v1860 = vld [vmem:[%s1461 + $0x92] sm:$0xff]
        %v1861 = vld [vmem:[%s1461 + $0x9a] sm:$0xff]
        %v1862 = vld [vmem:[%s1461 + $0xaa] sm:$0xff]
        %v1863 = vld [vmem:[%s1461 + $0xb2] sm:$0xff]
        %v1864 = vld [vmem:[%s1461 + $0xc2] sm:$0xff]
        %v1865 = vld [vmem:[%s1461 + $0xca] sm:$0xff]
        %v1866 = vld [vmem:[%s1461 + $0xda] sm:$0xff]
        %v1867 = vld [vmem:[%s1461 + $0xe2] sm:$0xff]
        %v1868 = vld [vmem:[%s1461 + $0xf2] sm:$0xff]
        %v1869 = vld [vmem:[%s1461 + $0xfa] sm:$0xff]
        %v1870 = vld [vmem:[%s1461 + $0x10a] sm:$0xff]
        %v1871 = vld [vmem:[%s1461 + $0x112] sm:$0xff]
        %v1872 = vld [vmem:[%s1461 + $0x122] sm:$0xff]
        %v1873 = vld [vmem:[%s1461 + $0x12a] sm:$0xff]
        %v1874 = vld [vmem:[%s1461 + $0x13a] sm:$0xff]
        %v1875 = vld [vmem:[%s1461 + $0x142] sm:$0xff]
        %v1876 = vld [vmem:[%s1461 + $0x152] sm:$0xff]
        %v1877 = vld [vmem:[%s1461 + $0x15a] sm:$0xff]
        %v1878 = vld [vmem:[%s1461 + $0x16a] sm:$0xff]
        %v1879 = vld [vmem:[%s1461 + $0x172] sm:$0xff]
        %1912 = vrot.lane.b32.xlu0 %v1848, 32
        %v1913 = vpop.permute.xlu0 %1912
        %1914 = vrot.lane.b32.xlu0 %v1849, 32
        %v1915 = vpop.permute.xlu0 %1914
        %1916 = vrot.lane.b32.xlu0 %v1850, 32
        %v1917 = vpop.permute.xlu0 %1916
        %1918 = vrot.lane.b32.xlu0 %v1851, 32
        %v1919 = vpop.permute.xlu0 %1918
        %1920 = vrot.lane.b32.xlu0 %v1852, 32
        %v1921 = vpop.permute.xlu0 %1920
        %1922 = vrot.lane.b32.xlu0 %v1853, 32
        %v1923 = vpop.permute.xlu0 %1922
        %1924 = vrot.lane.b32.xlu0 %v1854, 32
        %v1925 = vpop.permute.xlu0 %1924
        %1926 = vrot.lane.b32.xlu0 %v1855, 32
        %v1927 = vpop.permute.xlu0 %1926
        %1928 = vrot.lane.b32.xlu0 %v1856, 32
        %v1929 = vpop.permute.xlu0 %1928
        %1930 = vrot.lane.b32.xlu0 %v1857, 32
        %v1931 = vpop.permute.xlu0 %1930
        %1932 = vrot.lane.b32.xlu0 %v1858, 32
        %v1933 = vpop.permute.xlu0 %1932
        %1934 = vrot.lane.b32.xlu0 %v1859, 32
        %v1935 = vpop.permute.xlu0 %1934
        %1936 = vrot.lane.b32.xlu0 %v1860, 32
        %v1937 = vpop.permute.xlu0 %1936
        %1938 = vrot.lane.b32.xlu0 %v1861, 32
        %v1939 = vpop.permute.xlu0 %1938
        %1940 = vrot.lane.b32.xlu0 %v1862, 32
        %v1941 = vpop.permute.xlu0 %1940
        %1942 = vrot.lane.b32.xlu0 %v1863, 32
        %v1943 = vpop.permute.xlu0 %1942
        %1944 = vrot.lane.b32.xlu0 %v1864, 32
        %v1945 = vpop.permute.xlu0 %1944
        %1946 = vrot.lane.b32.xlu0 %v1865, 32
        %v1947 = vpop.permute.xlu0 %1946
        %1948 = vrot.lane.b32.xlu0 %v1866, 32
        %v1949 = vpop.permute.xlu0 %1948
        %1950 = vrot.lane.b32.xlu0 %v1867, 32
        %v1951 = vpop.permute.xlu0 %1950
        %1952 = vrot.lane.b32.xlu0 %v1868, 32
        %v1953 = vpop.permute.xlu0 %1952
        %1954 = vrot.lane.b32.xlu0 %v1869, 32
        %v1955 = vpop.permute.xlu0 %1954
        %1956 = vrot.lane.b32.xlu0 %v1870, 32
        %v1957 = vpop.permute.xlu0 %1956
        %1958 = vrot.lane.b32.xlu0 %v1871, 32
        %v1959 = vpop.permute.xlu0 %1958
        %1960 = vrot.lane.b32.xlu0 %v1872, 32
        %v1961 = vpop.permute.xlu0 %1960
        %1962 = vrot.lane.b32.xlu0 %v1873, 32
        %v1963 = vpop.permute.xlu0 %1962
        %1964 = vrot.lane.b32.xlu0 %v1874, 32
        %v1965 = vpop.permute.xlu0 %1964
        %1966 = vrot.lane.b32.xlu0 %v1875, 32
        %v1967 = vpop.permute.xlu0 %1966
        %1968 = vrot.lane.b32.xlu0 %v1876, 32
        %v1969 = vpop.permute.xlu0 %1968
        %1970 = vrot.lane.b32.xlu0 %v1877, 32
        %v1971 = vpop.permute.xlu0 %1970
        %1972 = vrot.lane.b32.xlu0 %v1878, 32
        %v1973 = vpop.permute.xlu0 %1972
        %1974 = vrot.lane.b32.xlu0 %v1879, 32
        %v1975 = vpop.permute.xlu0 %1974
        %vm2008 = vcmask 294144
        %2009 = vst.msk [vmem:[#allocation3] sm:$0xff] %vm2008, %v1913
        %2010 = vst.msk [vmem:[#allocation3 + $0x8] sm:$0xff] %vm2008, %v1915
        %2011 = vst.msk [vmem:[#allocation3 + $0x10] sm:$0xff] %vm2008, %v1917
        %2012 = vst.msk [vmem:[#allocation3 + $0x18] sm:$0xff] %vm2008, %v1919
        %2013 = vst.msk [vmem:[#allocation3 + $0x20] sm:$0xff] %vm2008, %v1921
        %2014 = vst.msk [vmem:[#allocation3 + $0x28] sm:$0xff] %vm2008, %v1923
        %2015 = vst.msk [vmem:[#allocation3 + $0x30] sm:$0xff] %vm2008, %v1925
        %2016 = vst.msk [vmem:[#allocation3 + $0x38] sm:$0xff] %vm2008, %v1927
        %2017 = vst.msk [vmem:[#allocation3 + $0x40] sm:$0xff] %vm2008, %v1929
        %2018 = vst.msk [vmem:[#allocation3 + $0x48] sm:$0xff] %vm2008, %v1931
        %2019 = vst.msk [vmem:[#allocation3 + $0x50] sm:$0xff] %vm2008, %v1933
        %2020 = vst.msk [vmem:[#allocation3 + $0x58] sm:$0xff] %vm2008, %v1935
        %2021 = vst.msk [vmem:[#allocation3 + $0x60] sm:$0xff] %vm2008, %v1937
        %2022 = vst.msk [vmem:[#allocation3 + $0x68] sm:$0xff] %vm2008, %v1939
        %2023 = vst.msk [vmem:[#allocation3 + $0x70] sm:$0xff] %vm2008, %v1941
        %2024 = vst.msk [vmem:[#allocation3 + $0x78] sm:$0xff] %vm2008, %v1943
        %2025 = vst.msk [vmem:[#allocation3 + $0x80] sm:$0xff] %vm2008, %v1945
        %2026 = vst.msk [vmem:[#allocation3 + $0x88] sm:$0xff] %vm2008, %v1947
        %2027 = vst.msk [vmem:[#allocation3 + $0x90] sm:$0xff] %vm2008, %v1949
        %2028 = vst.msk [vmem:[#allocation3 + $0x98] sm:$0xff] %vm2008, %v1951
        %2029 = vst.msk [vmem:[#allocation3 + $0xa0] sm:$0xff] %vm2008, %v1953
        %2030 = vst.msk [vmem:[#allocation3 + $0xa8] sm:$0xff] %vm2008, %v1955
        %2031 = vst.msk [vmem:[#allocation3 + $0xb0] sm:$0xff] %vm2008, %v1957
        %2032 = vst.msk [vmem:[#allocation3 + $0xb8] sm:$0xff] %vm2008, %v1959
        %2033 = vst.msk [vmem:[#allocation3 + $0xc0] sm:$0xff] %vm2008, %v1961
        %2034 = vst.msk [vmem:[#allocation3 + $0xc8] sm:$0xff] %vm2008, %v1963
        %2035 = vst.msk [vmem:[#allocation3 + $0xd0] sm:$0xff] %vm2008, %v1965
        %2036 = vst.msk [vmem:[#allocation3 + $0xd8] sm:$0xff] %vm2008, %v1967
        %2037 = vst.msk [vmem:[#allocation3 + $0xe0] sm:$0xff] %vm2008, %v1969
        %2038 = vst.msk [vmem:[#allocation3 + $0xe8] sm:$0xff] %vm2008, %v1971
        %2039 = vst.msk [vmem:[#allocation3 + $0xf0] sm:$0xff] %vm2008, %v1973
        %2040 = vst.msk [vmem:[#allocation3 + $0xf8] sm:$0xff] %vm2008, %v1975
        %v2041 = vld [vmem:[#allocation3] sm:$0xff]
        %v2042 = vld [vmem:[#allocation3 + $0x8] sm:$0xff]
        %v2043 = vld [vmem:[#allocation3 + $0x10] sm:$0xff]
        %v2044 = vld [vmem:[#allocation3 + $0x18] sm:$0xff]
        %v2045 = vld [vmem:[#allocation3 + $0x20] sm:$0xff]
        %v2046 = vld [vmem:[#allocation3 + $0x28] sm:$0xff]
        %v2047 = vld [vmem:[#allocation3 + $0x30] sm:$0xff]
        %v2048 = vld [vmem:[#allocation3 + $0x38] sm:$0xff]
        %v2049 = vld [vmem:[#allocation3 + $0x40] sm:$0xff]
        %v2050 = vld [vmem:[#allocation3 + $0x48] sm:$0xff]
        %v2051 = vld [vmem:[#allocation3 + $0x50] sm:$0xff]
        %v2052 = vld [vmem:[#allocation3 + $0x58] sm:$0xff]
        %v2053 = vld [vmem:[#allocation3 + $0x60] sm:$0xff]
        %v2054 = vld [vmem:[#allocation3 + $0x68] sm:$0xff]
        %v2055 = vld [vmem:[#allocation3 + $0x70] sm:$0xff]
        %v2056 = vld [vmem:[#allocation3 + $0x78] sm:$0xff]
        %v2057 = vld [vmem:[#allocation3 + $0x80] sm:$0xff]
        %v2058 = vld [vmem:[#allocation3 + $0x88] sm:$0xff]
        %v2059 = vld [vmem:[#allocation3 + $0x90] sm:$0xff]
        %v2060 = vld [vmem:[#allocation3 + $0x98] sm:$0xff]
        %v2061 = vld [vmem:[#allocation3 + $0xa0] sm:$0xff]
        %v2062 = vld [vmem:[#allocation3 + $0xa8] sm:$0xff]
        %v2063 = vld [vmem:[#allocation3 + $0xb0] sm:$0xff]
        %v2064 = vld [vmem:[#allocation3 + $0xb8] sm:$0xff]
        %v2065 = vld [vmem:[#allocation3 + $0xc0] sm:$0xff]
        %v2066 = vld [vmem:[#allocation3 + $0xc8] sm:$0xff]
        %v2067 = vld [vmem:[#allocation3 + $0xd0] sm:$0xff]
        %v2068 = vld [vmem:[#allocation3 + $0xd8] sm:$0xff]
        %v2069 = vld [vmem:[#allocation3 + $0xe0] sm:$0xff]
        %v2070 = vld [vmem:[#allocation3 + $0xe8] sm:$0xff]
        %v2071 = vld [vmem:[#allocation3 + $0xf0] sm:$0xff]
        %v2072 = vld [vmem:[#allocation3 + $0xf8] sm:$0xff]
        %v2073 = vld [vmem:[%s1] sm:$0xff]
        %v2074 = vld [vmem:[%s1 + $0x8] sm:$0xff]
        %v2075 = vld [vmem:[%s1 + $0x10] sm:$0xff]
        %v2076 = vld [vmem:[%s1 + $0x18] sm:$0xff]
        %v2077 = vld [vmem:[%s1 + $0x20] sm:$0xf]
        %v2078 = vld [vmem:[%s2] sm:$0x1]
        %v2080 = vperm.slane %v2078, 0
        %vm2082 = vcmask 293888
        %v2084 = vsel %vm2082, %v2041, 0
        %v2087 = vsel %vm2082, %v2042, 0
        %v2090 = vsel %vm2082, %v2043, 0
        %v2093 = vsel %vm2082, %v2044, 0
        %v2096 = vsel %vm2082, %v2045, 0
        %v2099 = vsel %vm2082, %v2046, 0
        %v2102 = vsel %vm2082, %v2047, 0
        %v2105 = vsel %vm2082, %v2048, 0
        %v2108 = vsel %vm2082, %v2049, 0
        %v2111 = vsel %vm2082, %v2050, 0
        %v2114 = vsel %vm2082, %v2051, 0
        %v2117 = vsel %vm2082, %v2052, 0
        %v2120 = vsel %vm2082, %v2053, 0
        %v2123 = vsel %vm2082, %v2054, 0
        %v2126 = vsel %vm2082, %v2055, 0
        %v2129 = vsel %vm2082, %v2056, 0
        %v2132 = vsel %vm2082, %v2057, 0
        %v2135 = vsel %vm2082, %v2058, 0
        %v2138 = vsel %vm2082, %v2059, 0
        %v2141 = vsel %vm2082, %v2060, 0
        %v2144 = vsel %vm2082, %v2061, 0
        %v2147 = vsel %vm2082, %v2062, 0
        %v2150 = vsel %vm2082, %v2063, 0
        %v2153 = vsel %vm2082, %v2064, 0
        %v2156 = vsel %vm2082, %v2065, 0
        %v2159 = vsel %vm2082, %v2066, 0
        %v2162 = vsel %vm2082, %v2067, 0
        %v2165 = vsel %vm2082, %v2068, 0
        %v2168 = vsel %vm2082, %v2069, 0
        %v2171 = vsel %vm2082, %v2070, 0
        %v2174 = vsel %vm2082, %v2071, 0
        %v2177 = vsel %vm2082, %v2072, 0
        %vm2179 = vcmask 1043456
        %v2181 = vsel %vm2179, %v2077, 0
        %2183 = vmatpush.msra.mxu0 0.0
        %2184 = vmatpush.msra.mxu0 0.0
        %2185 = vmatpush.msra.mxu0 0.0
        %2186 = vmatpush.msra.mxu0 0.0
        %2187 = vmatpush.msra.mxu0 0.0
        %2188 = vmatpush.msra.mxu0 0.0
        %2189 = vmatpush.msra.mxu0 0.0
        %2190 = vmatpush.msra.mxu0 0.0
        %2191 = vmatpush.msra.mxu0 0.0
        %2192 = vmatpush.msra.mxu0 0.0
        %2193 = vmatpush.msra.mxu0 0.0
        %2194 = vmatpush.msra.mxu0 %v2181
        %2195 = vmatpush.msra.mxu0 %v2076
        %2196 = vmatpush.msra.mxu0 %v2075
        %2197 = vmatpush.msra.mxu0 %v2074
        %2198 = vmatpush.msra.mxu0 %v2073
        %2199 = vmatmul.f32.gmra.mxu0 %v2084
        %v2200 = vpop.f32.mrf.mxu0
        %v2201 = vadd.f32 %v2080, %v2200
        %2202 = vmatmul.f32.gmra.mxu0 %v2087
        %v2203 = vpop.f32.mrf.mxu0
        %v2204 = vadd.f32 %v2080, %v2203
        %2205 = vmatmul.f32.gmra.mxu0 %v2090
        %v2206 = vpop.f32.mrf.mxu0
        %v2207 = vadd.f32 %v2080, %v2206
        %2208 = vmatmul.f32.gmra.mxu0 %v2093
        %v2209 = vpop.f32.mrf.mxu0
        %v2210 = vadd.f32 %v2080, %v2209
        %2211 = vmatmul.f32.gmra.mxu0 %v2096
        %v2212 = vpop.f32.mrf.mxu0
        %v2213 = vadd.f32 %v2080, %v2212
        %2214 = vmatmul.f32.gmra.mxu0 %v2099
        %v2215 = vpop.f32.mrf.mxu0
        %v2216 = vadd.f32 %v2080, %v2215
        %2217 = vmatmul.f32.gmra.mxu0 %v2102
        %v2218 = vpop.f32.mrf.mxu0
        %v2219 = vadd.f32 %v2080, %v2218
        %2220 = vmatmul.f32.gmra.mxu0 %v2105
        %v2221 = vpop.f32.mrf.mxu0
        %v2222 = vadd.f32 %v2080, %v2221
        %2223 = vmatmul.f32.gmra.mxu0 %v2108
        %v2224 = vpop.f32.mrf.mxu0
        %v2225 = vadd.f32 %v2080, %v2224
        %2226 = vmatmul.f32.gmra.mxu0 %v2111
        %v2227 = vpop.f32.mrf.mxu0
        %v2228 = vadd.f32 %v2080, %v2227
        %2229 = vmatmul.f32.gmra.mxu0 %v2114
        %v2230 = vpop.f32.mrf.mxu0
        %v2231 = vadd.f32 %v2080, %v2230
        %2232 = vmatmul.f32.gmra.mxu0 %v2117
        %v2233 = vpop.f32.mrf.mxu0
        %v2234 = vadd.f32 %v2080, %v2233
        %2235 = vmatmul.f32.gmra.mxu0 %v2120
        %v2236 = vpop.f32.mrf.mxu0
        %v2237 = vadd.f32 %v2080, %v2236
        %2238 = vmatmul.f32.gmra.mxu0 %v2123
        %v2239 = vpop.f32.mrf.mxu0
        %v2240 = vadd.f32 %v2080, %v2239
        %2241 = vmatmul.f32.gmra.mxu0 %v2126
        %v2242 = vpop.f32.mrf.mxu0
        %v2243 = vadd.f32 %v2080, %v2242
        %2244 = vmatmul.f32.gmra.mxu0 %v2129
        %v2245 = vpop.f32.mrf.mxu0
        %v2246 = vadd.f32 %v2080, %v2245
        %2247 = vmatmul.f32.gmra.mxu0 %v2132
        %v2248 = vpop.f32.mrf.mxu0
        %v2249 = vadd.f32 %v2080, %v2248
        %2250 = vmatmul.f32.gmra.mxu0 %v2135
        %v2251 = vpop.f32.mrf.mxu0
        %v2252 = vadd.f32 %v2080, %v2251
        %2253 = vmatmul.f32.gmra.mxu0 %v2138
        %v2254 = vpop.f32.mrf.mxu0
        %v2255 = vadd.f32 %v2080, %v2254
        %2256 = vmatmul.f32.gmra.mxu0 %v2141
        %v2257 = vpop.f32.mrf.mxu0
        %v2258 = vadd.f32 %v2080, %v2257
        %2259 = vmatmul.f32.gmra.mxu0 %v2144
        %v2260 = vpop.f32.mrf.mxu0
        %v2261 = vadd.f32 %v2080, %v2260
        %2262 = vmatmul.f32.gmra.mxu0 %v2147
        %v2263 = vpop.f32.mrf.mxu0
        %v2264 = vadd.f32 %v2080, %v2263
        %2265 = vmatmul.f32.gmra.mxu0 %v2150
        %v2266 = vpop.f32.mrf.mxu0
        %v2267 = vadd.f32 %v2080, %v2266
        %2268 = vmatmul.f32.gmra.mxu0 %v2153
        %v2269 = vpop.f32.mrf.mxu0
        %v2270 = vadd.f32 %v2080, %v2269
        %2271 = vmatmul.f32.gmra.mxu0 %v2156
        %v2272 = vpop.f32.mrf.mxu0
        %v2273 = vadd.f32 %v2080, %v2272
        %2274 = vmatmul.f32.gmra.mxu0 %v2159
        %v2275 = vpop.f32.mrf.mxu0
        %v2276 = vadd.f32 %v2080, %v2275
        %2277 = vmatmul.f32.gmra.mxu0 %v2162
        %v2278 = vpop.f32.mrf.mxu0
        %v2279 = vadd.f32 %v2080, %v2278
        %2280 = vmatmul.f32.gmra.mxu0 %v2165
        %v2281 = vpop.f32.mrf.mxu0
        %v2282 = vadd.f32 %v2080, %v2281
        %2283 = vmatmul.f32.gmra.mxu0 %v2168
        %v2284 = vpop.f32.mrf.mxu0
        %v2285 = vadd.f32 %v2080, %v2284
        %2286 = vmatmul.f32.gmra.mxu0 %v2171
        %v2287 = vpop.f32.mrf.mxu0
        %v2288 = vadd.f32 %v2080, %v2287
        %2289 = vmatmul.f32.gmra.mxu0 %v2174
        %v2290 = vpop.f32.mrf.mxu0
        %v2291 = vadd.f32 %v2080, %v2290
        %2292 = vmatmul.f32.gmra.mxu0 %v2177
        %v2293 = vpop.f32.mrf.mxu0
        %v2294 = vadd.f32 %v2080, %v2293
        %2295 = vdwg.mxu0
        %v2296 = vmax.f32 %v2201, 0.0
        %v2297 = vmax.f32 %v2204, 0.0
        %v2298 = vmax.f32 %v2207, 0.0
        %v2299 = vmax.f32 %v2210, 0.0
        %v2300 = vmax.f32 %v2213, 0.0
        %v2301 = vmax.f32 %v2216, 0.0
        %v2302 = vmax.f32 %v2219, 0.0
        %v2303 = vmax.f32 %v2222, 0.0
        %v2304 = vmax.f32 %v2225, 0.0
        %v2305 = vmax.f32 %v2228, 0.0
        %v2306 = vmax.f32 %v2231, 0.0
        %v2307 = vmax.f32 %v2234, 0.0
        %v2308 = vmax.f32 %v2237, 0.0
        %v2309 = vmax.f32 %v2240, 0.0
        %v2310 = vmax.f32 %v2243, 0.0
        %v2311 = vmax.f32 %v2246, 0.0
        %v2312 = vmax.f32 %v2249, 0.0
        %v2313 = vmax.f32 %v2252, 0.0
        %v2314 = vmax.f32 %v2255, 0.0
        %v2315 = vmax.f32 %v2258, 0.0
        %v2316 = vmax.f32 %v2261, 0.0
        %v2317 = vmax.f32 %v2264, 0.0
        %v2318 = vmax.f32 %v2267, 0.0
        %v2319 = vmax.f32 %v2270, 0.0
        %v2320 = vmax.f32 %v2273, 0.0
        %v2321 = vmax.f32 %v2276, 0.0
        %v2322 = vmax.f32 %v2279, 0.0
        %v2323 = vmax.f32 %v2282, 0.0
        %v2324 = vmax.f32 %v2285, 0.0
        %v2325 = vmax.f32 %v2288, 0.0
        %v2326 = vmax.f32 %v2291, 0.0
        %v2327 = vmax.f32 %v2294, 0.0
        %s2328 = scalar_lea.vmem [#allocation4], 24
        %2329 = vst.msk [vmem:[%s2328 + $0x1] sm:$0xff] %vm279, %v2296
        %2330 = vst.msk [vmem:[%s2328 + $0x9] sm:$0xff] %vm279, %v2297
        %2331 = vst.msk [vmem:[%s2328 + $0x19] sm:$0xff] %vm279, %v2298
        %2332 = vst.msk [vmem:[%s2328 + $0x21] sm:$0xff] %vm279, %v2299
        %2333 = vst.msk [vmem:[%s2328 + $0x31] sm:$0xff] %vm279, %v2300
        %2334 = vst.msk [vmem:[%s2328 + $0x39] sm:$0xff] %vm279, %v2301
        %2335 = vst.msk [vmem:[%s2328 + $0x49] sm:$0xff] %vm279, %v2302
        %2336 = vst.msk [vmem:[%s2328 + $0x51] sm:$0xff] %vm279, %v2303
        %2337 = vst.msk [vmem:[%s2328 + $0x61] sm:$0xff] %vm279, %v2304
        %2338 = vst.msk [vmem:[%s2328 + $0x69] sm:$0xff] %vm279, %v2305
        %2339 = vst.msk [vmem:[%s2328 + $0x79] sm:$0xff] %vm279, %v2306
        %2340 = vst.msk [vmem:[%s2328 + $0x81] sm:$0xff] %vm279, %v2307
        %2341 = vst.msk [vmem:[%s2328 + $0x91] sm:$0xff] %vm279, %v2308
        %2342 = vst.msk [vmem:[%s2328 + $0x99] sm:$0xff] %vm279, %v2309
        %2343 = vst.msk [vmem:[%s2328 + $0xa9] sm:$0xff] %vm279, %v2310
        %2344 = vst.msk [vmem:[%s2328 + $0xb1] sm:$0xff] %vm279, %v2311
        %2345 = vst.msk [vmem:[%s2328 + $0xc1] sm:$0xff] %vm279, %v2312
        %2346 = vst.msk [vmem:[%s2328 + $0xc9] sm:$0xff] %vm279, %v2313
        %2347 = vst.msk [vmem:[%s2328 + $0xd9] sm:$0xff] %vm279, %v2314
        %2348 = vst.msk [vmem:[%s2328 + $0xe1] sm:$0xff] %vm279, %v2315
        %2349 = vst.msk [vmem:[%s2328 + $0xf1] sm:$0xff] %vm279, %v2316
        %2350 = vst.msk [vmem:[%s2328 + $0xf9] sm:$0xff] %vm279, %v2317
        %2351 = vst.msk [vmem:[%s2328 + $0x109] sm:$0xff] %vm279, %v2318
        %2352 = vst.msk [vmem:[%s2328 + $0x111] sm:$0xff] %vm279, %v2319
        %2353 = vst.msk [vmem:[%s2328 + $0x121] sm:$0xff] %vm279, %v2320
        %2354 = vst.msk [vmem:[%s2328 + $0x129] sm:$0xff] %vm279, %v2321
        %2355 = vst.msk [vmem:[%s2328 + $0x139] sm:$0xff] %vm279, %v2322
        %2356 = vst.msk [vmem:[%s2328 + $0x141] sm:$0xff] %vm279, %v2323
        %2357 = vst.msk [vmem:[%s2328 + $0x151] sm:$0xff] %vm279, %v2324
        %2358 = vst.msk [vmem:[%s2328 + $0x159] sm:$0xff] %vm279, %v2325
        %2359 = vst.msk [vmem:[%s2328 + $0x169] sm:$0xff] %vm279, %v2326
        %2360 = vst.msk [vmem:[%s2328 + $0x171] sm:$0xff] %vm279, %v2327
        %v2361 = vld [vmem:[#allocation4] sm:$0xff]
        %v2362 = vld [vmem:[#allocation4 + $0x8] sm:$0xff]
        %v2363 = vld [vmem:[#allocation4 + $0x18] sm:$0xff]
        %v2364 = vld [vmem:[#allocation4 + $0x20] sm:$0xff]
        %v2365 = vld [vmem:[#allocation4 + $0x30] sm:$0xff]
        %v2366 = vld [vmem:[#allocation4 + $0x38] sm:$0xff]
        %v2367 = vld [vmem:[#allocation4 + $0x48] sm:$0xff]
        %v2368 = vld [vmem:[#allocation4 + $0x50] sm:$0xff]
        %v2369 = vld [vmem:[#allocation4 + $0x60] sm:$0xff]
        %v2370 = vld [vmem:[#allocation4 + $0x68] sm:$0xff]
        %v2371 = vld [vmem:[#allocation4 + $0x78] sm:$0xff]
        %v2372 = vld [vmem:[#allocation4 + $0x80] sm:$0xff]
        %v2373 = vld [vmem:[#allocation4 + $0x90] sm:$0xff]
        %v2374 = vld [vmem:[#allocation4 + $0x98] sm:$0xff]
        %v2375 = vld [vmem:[#allocation4 + $0xa8] sm:$0xff]
        %v2376 = vld [vmem:[#allocation4 + $0xb0] sm:$0xff]
        %v2377 = vld [vmem:[#allocation4 + $0xc0] sm:$0xff]
        %v2378 = vld [vmem:[#allocation4 + $0xc8] sm:$0xff]
        %v2379 = vld [vmem:[#allocation4 + $0xd8] sm:$0xff]
        %v2380 = vld [vmem:[#allocation4 + $0xe0] sm:$0xff]
        %v2381 = vld [vmem:[#allocation4 + $0xf0] sm:$0xff]
        %v2382 = vld [vmem:[#allocation4 + $0xf8] sm:$0xff]
        %v2383 = vld [vmem:[#allocation4 + $0x108] sm:$0xff]
        %v2384 = vld [vmem:[#allocation4 + $0x110] sm:$0xff]
        %v2385 = vld [vmem:[#allocation4 + $0x120] sm:$0xff]
        %v2386 = vld [vmem:[#allocation4 + $0x128] sm:$0xff]
        %v2387 = vld [vmem:[#allocation4 + $0x138] sm:$0xff]
        %v2388 = vld [vmem:[#allocation4 + $0x140] sm:$0xff]
        %v2389 = vld [vmem:[#allocation4 + $0x150] sm:$0xff]
        %v2390 = vld [vmem:[#allocation4 + $0x158] sm:$0xff]
        %v2391 = vld [vmem:[#allocation4 + $0x168] sm:$0xff]
        %v2392 = vld [vmem:[#allocation4 + $0x170] sm:$0xff]
        %2393 = vst.msk [vmem:[#allocation5] sm:$0xff] %vm279, %v2361
        %2394 = vst.msk [vmem:[#allocation5 + $0x8] sm:$0xff] %vm279, %v2362
        %2395 = vst.msk [vmem:[#allocation5 + $0x10] sm:$0xff] %vm279, %v2363
        %2396 = vst.msk [vmem:[#allocation5 + $0x18] sm:$0xff] %vm279, %v2364
        %2397 = vst.msk [vmem:[#allocation5 + $0x20] sm:$0xff] %vm279, %v2365
        %2398 = vst.msk [vmem:[#allocation5 + $0x28] sm:$0xff] %vm279, %v2366
        %2399 = vst.msk [vmem:[#allocation5 + $0x30] sm:$0xff] %vm279, %v2367
        %2400 = vst.msk [vmem:[#allocation5 + $0x38] sm:$0xff] %vm279, %v2368
        %2401 = vst.msk [vmem:[#allocation5 + $0x40] sm:$0xff] %vm279, %v2369
        %2402 = vst.msk [vmem:[#allocation5 + $0x48] sm:$0xff] %vm279, %v2370
        %2403 = vst.msk [vmem:[#allocation5 + $0x50] sm:$0xff] %vm279, %v2371
        %2404 = vst.msk [vmem:[#allocation5 + $0x58] sm:$0xff] %vm279, %v2372
        %2405 = vst.msk [vmem:[#allocation5 + $0x60] sm:$0xff] %vm279, %v2373
        %2406 = vst.msk [vmem:[#allocation5 + $0x68] sm:$0xff] %vm279, %v2374
        %2407 = vst.msk [vmem:[#allocation5 + $0x70] sm:$0xff] %vm279, %v2375
        %2408 = vst.msk [vmem:[#allocation5 + $0x78] sm:$0xff] %vm279, %v2376
        %2409 = vst.msk [vmem:[#allocation5 + $0x80] sm:$0xff] %vm279, %v2377
        %2410 = vst.msk [vmem:[#allocation5 + $0x88] sm:$0xff] %vm279, %v2378
        %2411 = vst.msk [vmem:[#allocation5 + $0x90] sm:$0xff] %vm279, %v2379
        %2412 = vst.msk [vmem:[#allocation5 + $0x98] sm:$0xff] %vm279, %v2380
        %2413 = vst.msk [vmem:[#allocation5 + $0xa0] sm:$0xff] %vm279, %v2381
        %2414 = vst.msk [vmem:[#allocation5 + $0xa8] sm:$0xff] %vm279, %v2382
        %2415 = vst.msk [vmem:[#allocation5 + $0xb0] sm:$0xff] %vm279, %v2383
        %2416 = vst.msk [vmem:[#allocation5 + $0xb8] sm:$0xff] %vm279, %v2384
        %2417 = vst.msk [vmem:[#allocation5 + $0xc0] sm:$0xff] %vm279, %v2385
        %2418 = vst.msk [vmem:[#allocation5 + $0xc8] sm:$0xff] %vm279, %v2386
        %2419 = vst.msk [vmem:[#allocation5 + $0xd0] sm:$0xff] %vm279, %v2387
        %2420 = vst.msk [vmem:[#allocation5 + $0xd8] sm:$0xff] %vm279, %v2388
        %2421 = vst.msk [vmem:[#allocation5 + $0xe0] sm:$0xff] %vm279, %v2389
        %2422 = vst.msk [vmem:[#allocation5 + $0xe8] sm:$0xff] %vm279, %v2390
        %2423 = vst.msk [vmem:[#allocation5 + $0xf0] sm:$0xff] %vm279, %v2391
        %2424 = vst.msk [vmem:[#allocation5 + $0xf8] sm:$0xff] %vm279, %v2392
        %v2425 = vld [vmem:[#allocation4 + $0x1] sm:$0xff]
        %v2426 = vld [vmem:[#allocation4 + $0x9] sm:$0xff]
        %v2427 = vld [vmem:[#allocation4 + $0x19] sm:$0xff]
        %v2428 = vld [vmem:[#allocation4 + $0x21] sm:$0xff]
        %v2429 = vld [vmem:[#allocation4 + $0x31] sm:$0xff]
        %v2430 = vld [vmem:[#allocation4 + $0x39] sm:$0xff]
        %v2431 = vld [vmem:[#allocation4 + $0x49] sm:$0xff]
        %v2432 = vld [vmem:[#allocation4 + $0x51] sm:$0xff]
        %v2433 = vld [vmem:[#allocation4 + $0x61] sm:$0xff]
        %v2434 = vld [vmem:[#allocation4 + $0x69] sm:$0xff]
        %v2435 = vld [vmem:[#allocation4 + $0x79] sm:$0xff]
        %v2436 = vld [vmem:[#allocation4 + $0x81] sm:$0xff]
        %v2437 = vld [vmem:[#allocation4 + $0x91] sm:$0xff]
        %v2438 = vld [vmem:[#allocation4 + $0x99] sm:$0xff]
        %v2439 = vld [vmem:[#allocation4 + $0xa9] sm:$0xff]
        %v2440 = vld [vmem:[#allocation4 + $0xb1] sm:$0xff]
        %v2441 = vld [vmem:[#allocation4 + $0xc1] sm:$0xff]
        %v2442 = vld [vmem:[#allocation4 + $0xc9] sm:$0xff]
        %v2443 = vld [vmem:[#allocation4 + $0xd9] sm:$0xff]
        %v2444 = vld [vmem:[#allocation4 + $0xe1] sm:$0xff]
        %v2445 = vld [vmem:[#allocation4 + $0xf1] sm:$0xff]
        %v2446 = vld [vmem:[#allocation4 + $0xf9] sm:$0xff]
        %v2447 = vld [vmem:[#allocation4 + $0x109] sm:$0xff]
        %v2448 = vld [vmem:[#allocation4 + $0x111] sm:$0xff]
        %v2449 = vld [vmem:[#allocation4 + $0x121] sm:$0xff]
        %v2450 = vld [vmem:[#allocation4 + $0x129] sm:$0xff]
        %v2451 = vld [vmem:[#allocation4 + $0x139] sm:$0xff]
        %v2452 = vld [vmem:[#allocation4 + $0x141] sm:$0xff]
        %v2453 = vld [vmem:[#allocation4 + $0x151] sm:$0xff]
        %v2454 = vld [vmem:[#allocation4 + $0x159] sm:$0xff]
        %v2455 = vld [vmem:[#allocation4 + $0x169] sm:$0xff]
        %v2456 = vld [vmem:[#allocation4 + $0x171] sm:$0xff]
        %2489 = vrot.lane.b32.xlu0 %v2425, 8
        %v2490 = vpop.permute.xlu0 %2489
        %2491 = vrot.lane.b32.xlu0 %v2426, 8
        %v2492 = vpop.permute.xlu0 %2491
        %2493 = vrot.lane.b32.xlu0 %v2427, 8
        %v2494 = vpop.permute.xlu0 %2493
        %2495 = vrot.lane.b32.xlu0 %v2428, 8
        %v2496 = vpop.permute.xlu0 %2495
        %2497 = vrot.lane.b32.xlu0 %v2429, 8
        %v2498 = vpop.permute.xlu0 %2497
        %2499 = vrot.lane.b32.xlu0 %v2430, 8
        %v2500 = vpop.permute.xlu0 %2499
        %2501 = vrot.lane.b32.xlu0 %v2431, 8
        %v2502 = vpop.permute.xlu0 %2501
        %2503 = vrot.lane.b32.xlu0 %v2432, 8
        %v2504 = vpop.permute.xlu0 %2503
        %2505 = vrot.lane.b32.xlu0 %v2433, 8
        %v2506 = vpop.permute.xlu0 %2505
        %2507 = vrot.lane.b32.xlu0 %v2434, 8
        %v2508 = vpop.permute.xlu0 %2507
        %2509 = vrot.lane.b32.xlu0 %v2435, 8
        %v2510 = vpop.permute.xlu0 %2509
        %2511 = vrot.lane.b32.xlu0 %v2436, 8
        %v2512 = vpop.permute.xlu0 %2511
        %2513 = vrot.lane.b32.xlu0 %v2437, 8
        %v2514 = vpop.permute.xlu0 %2513
        %2515 = vrot.lane.b32.xlu0 %v2438, 8
        %v2516 = vpop.permute.xlu0 %2515
        %2517 = vrot.lane.b32.xlu0 %v2439, 8
        %v2518 = vpop.permute.xlu0 %2517
        %2519 = vrot.lane.b32.xlu0 %v2440, 8
        %v2520 = vpop.permute.xlu0 %2519
        %2521 = vrot.lane.b32.xlu0 %v2441, 8
        %v2522 = vpop.permute.xlu0 %2521
        %2523 = vrot.lane.b32.xlu0 %v2442, 8
        %v2524 = vpop.permute.xlu0 %2523
        %2525 = vrot.lane.b32.xlu0 %v2443, 8
        %v2526 = vpop.permute.xlu0 %2525
        %2527 = vrot.lane.b32.xlu0 %v2444, 8
        %v2528 = vpop.permute.xlu0 %2527
        %2529 = vrot.lane.b32.xlu0 %v2445, 8
        %v2530 = vpop.permute.xlu0 %2529
        %2531 = vrot.lane.b32.xlu0 %v2446, 8
        %v2532 = vpop.permute.xlu0 %2531
        %2533 = vrot.lane.b32.xlu0 %v2447, 8
        %v2534 = vpop.permute.xlu0 %2533
        %2535 = vrot.lane.b32.xlu0 %v2448, 8
        %v2536 = vpop.permute.xlu0 %2535
        %2537 = vrot.lane.b32.xlu0 %v2449, 8
        %v2538 = vpop.permute.xlu0 %2537
        %2539 = vrot.lane.b32.xlu0 %v2450, 8
        %v2540 = vpop.permute.xlu0 %2539
        %2541 = vrot.lane.b32.xlu0 %v2451, 8
        %v2542 = vpop.permute.xlu0 %2541
        %2543 = vrot.lane.b32.xlu0 %v2452, 8
        %v2544 = vpop.permute.xlu0 %2543
        %2545 = vrot.lane.b32.xlu0 %v2453, 8
        %v2546 = vpop.permute.xlu0 %2545
        %2547 = vrot.lane.b32.xlu0 %v2454, 8
        %v2548 = vpop.permute.xlu0 %2547
        %2549 = vrot.lane.b32.xlu0 %v2455, 8
        %v2550 = vpop.permute.xlu0 %2549
        %2551 = vrot.lane.b32.xlu0 %v2456, 8
        %v2552 = vpop.permute.xlu0 %2551
        %vm2585 = vcmask 130112
        %2586 = vst.msk [vmem:[#allocation5] sm:$0xff] %vm2585, %v2490
        %2587 = vst.msk [vmem:[#allocation5 + $0x8] sm:$0xff] %vm2585, %v2492
        %2588 = vst.msk [vmem:[#allocation5 + $0x10] sm:$0xff] %vm2585, %v2494
        %2589 = vst.msk [vmem:[#allocation5 + $0x18] sm:$0xff] %vm2585, %v2496
        %2590 = vst.msk [vmem:[#allocation5 + $0x20] sm:$0xff] %vm2585, %v2498
        %2591 = vst.msk [vmem:[#allocation5 + $0x28] sm:$0xff] %vm2585, %v2500
        %2592 = vst.msk [vmem:[#allocation5 + $0x30] sm:$0xff] %vm2585, %v2502
        %2593 = vst.msk [vmem:[#allocation5 + $0x38] sm:$0xff] %vm2585, %v2504
        %2594 = vst.msk [vmem:[#allocation5 + $0x40] sm:$0xff] %vm2585, %v2506
        %2595 = vst.msk [vmem:[#allocation5 + $0x48] sm:$0xff] %vm2585, %v2508
        %2596 = vst.msk [vmem:[#allocation5 + $0x50] sm:$0xff] %vm2585, %v2510
        %2597 = vst.msk [vmem:[#allocation5 + $0x58] sm:$0xff] %vm2585, %v2512
        %2598 = vst.msk [vmem:[#allocation5 + $0x60] sm:$0xff] %vm2585, %v2514
        %2599 = vst.msk [vmem:[#allocation5 + $0x68] sm:$0xff] %vm2585, %v2516
        %2600 = vst.msk [vmem:[#allocation5 + $0x70] sm:$0xff] %vm2585, %v2518
        %2601 = vst.msk [vmem:[#allocation5 + $0x78] sm:$0xff] %vm2585, %v2520
        %2602 = vst.msk [vmem:[#allocation5 + $0x80] sm:$0xff] %vm2585, %v2522
        %2603 = vst.msk [vmem:[#allocation5 + $0x88] sm:$0xff] %vm2585, %v2524
        %2604 = vst.msk [vmem:[#allocation5 + $0x90] sm:$0xff] %vm2585, %v2526
        %2605 = vst.msk [vmem:[#allocation5 + $0x98] sm:$0xff] %vm2585, %v2528
        %2606 = vst.msk [vmem:[#allocation5 + $0xa0] sm:$0xff] %vm2585, %v2530
        %2607 = vst.msk [vmem:[#allocation5 + $0xa8] sm:$0xff] %vm2585, %v2532
        %2608 = vst.msk [vmem:[#allocation5 + $0xb0] sm:$0xff] %vm2585, %v2534
        %2609 = vst.msk [vmem:[#allocation5 + $0xb8] sm:$0xff] %vm2585, %v2536
        %2610 = vst.msk [vmem:[#allocation5 + $0xc0] sm:$0xff] %vm2585, %v2538
        %2611 = vst.msk [vmem:[#allocation5 + $0xc8] sm:$0xff] %vm2585, %v2540
        %2612 = vst.msk [vmem:[#allocation5 + $0xd0] sm:$0xff] %vm2585, %v2542
        %2613 = vst.msk [vmem:[#allocation5 + $0xd8] sm:$0xff] %vm2585, %v2544
        %2614 = vst.msk [vmem:[#allocation5 + $0xe0] sm:$0xff] %vm2585, %v2546
        %2615 = vst.msk [vmem:[#allocation5 + $0xe8] sm:$0xff] %vm2585, %v2548
        %2616 = vst.msk [vmem:[#allocation5 + $0xf0] sm:$0xff] %vm2585, %v2550
        %2617 = vst.msk [vmem:[#allocation5 + $0xf8] sm:$0xff] %vm2585, %v2552
        %v2618 = vld [vmem:[#allocation4 + $0x2] sm:$0xff]
        %v2619 = vld [vmem:[#allocation4 + $0xa] sm:$0xff]
        %v2620 = vld [vmem:[#allocation4 + $0x1a] sm:$0xff]
        %v2621 = vld [vmem:[#allocation4 + $0x22] sm:$0xff]
        %v2622 = vld [vmem:[#allocation4 + $0x32] sm:$0xff]
        %v2623 = vld [vmem:[#allocation4 + $0x3a] sm:$0xff]
        %v2624 = vld [vmem:[#allocation4 + $0x4a] sm:$0xff]
        %v2625 = vld [vmem:[#allocation4 + $0x52] sm:$0xff]
        %v2626 = vld [vmem:[#allocation4 + $0x62] sm:$0xff]
        %v2627 = vld [vmem:[#allocation4 + $0x6a] sm:$0xff]
        %v2628 = vld [vmem:[#allocation4 + $0x7a] sm:$0xff]
        %v2629 = vld [vmem:[#allocation4 + $0x82] sm:$0xff]
        %v2630 = vld [vmem:[#allocation4 + $0x92] sm:$0xff]
        %v2631 = vld [vmem:[#allocation4 + $0x9a] sm:$0xff]
        %v2632 = vld [vmem:[#allocation4 + $0xaa] sm:$0xff]
        %v2633 = vld [vmem:[#allocation4 + $0xb2] sm:$0xff]
        %v2634 = vld [vmem:[#allocation4 + $0xc2] sm:$0xff]
        %v2635 = vld [vmem:[#allocation4 + $0xca] sm:$0xff]
        %v2636 = vld [vmem:[#allocation4 + $0xda] sm:$0xff]
        %v2637 = vld [vmem:[#allocation4 + $0xe2] sm:$0xff]
        %v2638 = vld [vmem:[#allocation4 + $0xf2] sm:$0xff]
        %v2639 = vld [vmem:[#allocation4 + $0xfa] sm:$0xff]
        %v2640 = vld [vmem:[#allocation4 + $0x10a] sm:$0xff]
        %v2641 = vld [vmem:[#allocation4 + $0x112] sm:$0xff]
        %v2642 = vld [vmem:[#allocation4 + $0x122] sm:$0xff]
        %v2643 = vld [vmem:[#allocation4 + $0x12a] sm:$0xff]
        %v2644 = vld [vmem:[#allocation4 + $0x13a] sm:$0xff]
        %v2645 = vld [vmem:[#allocation4 + $0x142] sm:$0xff]
        %v2646 = vld [vmem:[#allocation4 + $0x152] sm:$0xff]
        %v2647 = vld [vmem:[#allocation4 + $0x15a] sm:$0xff]
        %v2648 = vld [vmem:[#allocation4 + $0x16a] sm:$0xff]
        %v2649 = vld [vmem:[#allocation4 + $0x172] sm:$0xff]
        %2682 = vrot.lane.b32.xlu0 %v2618, 16
        %v2683 = vpop.permute.xlu0 %2682
        %2684 = vrot.lane.b32.xlu0 %v2619, 16
        %v2685 = vpop.permute.xlu0 %2684
        %2686 = vrot.lane.b32.xlu0 %v2620, 16
        %v2687 = vpop.permute.xlu0 %2686
        %2688 = vrot.lane.b32.xlu0 %v2621, 16
        %v2689 = vpop.permute.xlu0 %2688
        %2690 = vrot.lane.b32.xlu0 %v2622, 16
        %v2691 = vpop.permute.xlu0 %2690
        %2692 = vrot.lane.b32.xlu0 %v2623, 16
        %v2693 = vpop.permute.xlu0 %2692
        %2694 = vrot.lane.b32.xlu0 %v2624, 16
        %v2695 = vpop.permute.xlu0 %2694
        %2696 = vrot.lane.b32.xlu0 %v2625, 16
        %v2697 = vpop.permute.xlu0 %2696
        %2698 = vrot.lane.b32.xlu0 %v2626, 16
        %v2699 = vpop.permute.xlu0 %2698
        %2700 = vrot.lane.b32.xlu0 %v2627, 16
        %v2701 = vpop.permute.xlu0 %2700
        %2702 = vrot.lane.b32.xlu0 %v2628, 16
        %v2703 = vpop.permute.xlu0 %2702
        %2704 = vrot.lane.b32.xlu0 %v2629, 16
        %v2705 = vpop.permute.xlu0 %2704
        %2706 = vrot.lane.b32.xlu0 %v2630, 16
        %v2707 = vpop.permute.xlu0 %2706
        %2708 = vrot.lane.b32.xlu0 %v2631, 16
        %v2709 = vpop.permute.xlu0 %2708
        %2710 = vrot.lane.b32.xlu0 %v2632, 16
        %v2711 = vpop.permute.xlu0 %2710
        %2712 = vrot.lane.b32.xlu0 %v2633, 16
        %v2713 = vpop.permute.xlu0 %2712
        %2714 = vrot.lane.b32.xlu0 %v2634, 16
        %v2715 = vpop.permute.xlu0 %2714
        %2716 = vrot.lane.b32.xlu0 %v2635, 16
        %v2717 = vpop.permute.xlu0 %2716
        %2718 = vrot.lane.b32.xlu0 %v2636, 16
        %v2719 = vpop.permute.xlu0 %2718
        %2720 = vrot.lane.b32.xlu0 %v2637, 16
        %v2721 = vpop.permute.xlu0 %2720
        %2722 = vrot.lane.b32.xlu0 %v2638, 16
        %v2723 = vpop.permute.xlu0 %2722
        %2724 = vrot.lane.b32.xlu0 %v2639, 16
        %v2725 = vpop.permute.xlu0 %2724
        %2726 = vrot.lane.b32.xlu0 %v2640, 16
        %v2727 = vpop.permute.xlu0 %2726
        %2728 = vrot.lane.b32.xlu0 %v2641, 16
        %v2729 = vpop.permute.xlu0 %2728
        %2730 = vrot.lane.b32.xlu0 %v2642, 16
        %v2731 = vpop.permute.xlu0 %2730
        %2732 = vrot.lane.b32.xlu0 %v2643, 16
        %v2733 = vpop.permute.xlu0 %2732
        %2734 = vrot.lane.b32.xlu0 %v2644, 16
        %v2735 = vpop.permute.xlu0 %2734
        %2736 = vrot.lane.b32.xlu0 %v2645, 16
        %v2737 = vpop.permute.xlu0 %2736
        %2738 = vrot.lane.b32.xlu0 %v2646, 16
        %v2739 = vpop.permute.xlu0 %2738
        %2740 = vrot.lane.b32.xlu0 %v2647, 16
        %v2741 = vpop.permute.xlu0 %2740
        %2742 = vrot.lane.b32.xlu0 %v2648, 16
        %v2743 = vpop.permute.xlu0 %2742
        %2744 = vrot.lane.b32.xlu0 %v2649, 16
        %v2745 = vpop.permute.xlu0 %2744
        %vm2778 = vcmask 195712
        %2779 = vst.msk [vmem:[#allocation5] sm:$0xff] %vm2778, %v2683
        %2780 = vst.msk [vmem:[#allocation5 + $0x8] sm:$0xff] %vm2778, %v2685
        %2781 = vst.msk [vmem:[#allocation5 + $0x10] sm:$0xff] %vm2778, %v2687
        %2782 = vst.msk [vmem:[#allocation5 + $0x18] sm:$0xff] %vm2778, %v2689
        %2783 = vst.msk [vmem:[#allocation5 + $0x20] sm:$0xff] %vm2778, %v2691
        %2784 = vst.msk [vmem:[#allocation5 + $0x28] sm:$0xff] %vm2778, %v2693
        %2785 = vst.msk [vmem:[#allocation5 + $0x30] sm:$0xff] %vm2778, %v2695
        %2786 = vst.msk [vmem:[#allocation5 + $0x38] sm:$0xff] %vm2778, %v2697
        %2787 = vst.msk [vmem:[#allocation5 + $0x40] sm:$0xff] %vm2778, %v2699
        %2788 = vst.msk [vmem:[#allocation5 + $0x48] sm:$0xff] %vm2778, %v2701
        %2789 = vst.msk [vmem:[#allocation5 + $0x50] sm:$0xff] %vm2778, %v2703
        %2790 = vst.msk [vmem:[#allocation5 + $0x58] sm:$0xff] %vm2778, %v2705
        %2791 = vst.msk [vmem:[#allocation5 + $0x60] sm:$0xff] %vm2778, %v2707
        %2792 = vst.msk [vmem:[#allocation5 + $0x68] sm:$0xff] %vm2778, %v2709
        %2793 = vst.msk [vmem:[#allocation5 + $0x70] sm:$0xff] %vm2778, %v2711
        %2794 = vst.msk [vmem:[#allocation5 + $0x78] sm:$0xff] %vm2778, %v2713
        %2795 = vst.msk [vmem:[#allocation5 + $0x80] sm:$0xff] %vm2778, %v2715
        %2796 = vst.msk [vmem:[#allocation5 + $0x88] sm:$0xff] %vm2778, %v2717
        %2797 = vst.msk [vmem:[#allocation5 + $0x90] sm:$0xff] %vm2778, %v2719
        %2798 = vst.msk [vmem:[#allocation5 + $0x98] sm:$0xff] %vm2778, %v2721
        %2799 = vst.msk [vmem:[#allocation5 + $0xa0] sm:$0xff] %vm2778, %v2723
        %2800 = vst.msk [vmem:[#allocation5 + $0xa8] sm:$0xff] %vm2778, %v2725
        %2801 = vst.msk [vmem:[#allocation5 + $0xb0] sm:$0xff] %vm2778, %v2727
        %2802 = vst.msk [vmem:[#allocation5 + $0xb8] sm:$0xff] %vm2778, %v2729
        %2803 = vst.msk [vmem:[#allocation5 + $0xc0] sm:$0xff] %vm2778, %v2731
        %2804 = vst.msk [vmem:[#allocation5 + $0xc8] sm:$0xff] %vm2778, %v2733
        %2805 = vst.msk [vmem:[#allocation5 + $0xd0] sm:$0xff] %vm2778, %v2735
        %2806 = vst.msk [vmem:[#allocation5 + $0xd8] sm:$0xff] %vm2778, %v2737
        %2807 = vst.msk [vmem:[#allocation5 + $0xe0] sm:$0xff] %vm2778, %v2739
        %2808 = vst.msk [vmem:[#allocation5 + $0xe8] sm:$0xff] %vm2778, %v2741
        %2809 = vst.msk [vmem:[#allocation5 + $0xf0] sm:$0xff] %vm2778, %v2743
        %2810 = vst.msk [vmem:[#allocation5 + $0xf8] sm:$0xff] %vm2778, %v2745
        %v2811 = vld [vmem:[%s2328] sm:$0xff]
        %v2812 = vld [vmem:[%s2328 + $0x8] sm:$0xff]
        %v2813 = vld [vmem:[%s2328 + $0x18] sm:$0xff]
        %v2814 = vld [vmem:[%s2328 + $0x20] sm:$0xff]
        %v2815 = vld [vmem:[%s2328 + $0x30] sm:$0xff]
        %v2816 = vld [vmem:[%s2328 + $0x38] sm:$0xff]
        %v2817 = vld [vmem:[%s2328 + $0x48] sm:$0xff]
        %v2818 = vld [vmem:[%s2328 + $0x50] sm:$0xff]
        %v2819 = vld [vmem:[%s2328 + $0x60] sm:$0xff]
        %v2820 = vld [vmem:[%s2328 + $0x68] sm:$0xff]
        %v2821 = vld [vmem:[%s2328 + $0x78] sm:$0xff]
        %v2822 = vld [vmem:[%s2328 + $0x80] sm:$0xff]
        %v2823 = vld [vmem:[%s2328 + $0x90] sm:$0xff]
        %v2824 = vld [vmem:[%s2328 + $0x98] sm:$0xff]
        %v2825 = vld [vmem:[%s2328 + $0xa8] sm:$0xff]
        %v2826 = vld [vmem:[%s2328 + $0xb0] sm:$0xff]
        %v2827 = vld [vmem:[%s2328 + $0xc0] sm:$0xff]
        %v2828 = vld [vmem:[%s2328 + $0xc8] sm:$0xff]
        %v2829 = vld [vmem:[%s2328 + $0xd8] sm:$0xff]
        %v2830 = vld [vmem:[%s2328 + $0xe0] sm:$0xff]
        %v2831 = vld [vmem:[%s2328 + $0xf0] sm:$0xff]
        %v2832 = vld [vmem:[%s2328 + $0xf8] sm:$0xff]
        %v2833 = vld [vmem:[%s2328 + $0x108] sm:$0xff]
        %v2834 = vld [vmem:[%s2328 + $0x110] sm:$0xff]
        %v2835 = vld [vmem:[%s2328 + $0x120] sm:$0xff]
        %v2836 = vld [vmem:[%s2328 + $0x128] sm:$0xff]
        %v2837 = vld [vmem:[%s2328 + $0x138] sm:$0xff]
        %v2838 = vld [vmem:[%s2328 + $0x140] sm:$0xff]
        %v2839 = vld [vmem:[%s2328 + $0x150] sm:$0xff]
        %v2840 = vld [vmem:[%s2328 + $0x158] sm:$0xff]
        %v2841 = vld [vmem:[%s2328 + $0x168] sm:$0xff]
        %v2842 = vld [vmem:[%s2328 + $0x170] sm:$0xff]
        %2875 = vrot.lane.b32.xlu0 %v2811, 24
        %v2876 = vpop.permute.xlu0 %2875
        %2877 = vrot.lane.b32.xlu0 %v2812, 24
        %v2878 = vpop.permute.xlu0 %2877
        %2879 = vrot.lane.b32.xlu0 %v2813, 24
        %v2880 = vpop.permute.xlu0 %2879
        %2881 = vrot.lane.b32.xlu0 %v2814, 24
        %v2882 = vpop.permute.xlu0 %2881
        %2883 = vrot.lane.b32.xlu0 %v2815, 24
        %v2884 = vpop.permute.xlu0 %2883
        %2885 = vrot.lane.b32.xlu0 %v2816, 24
        %v2886 = vpop.permute.xlu0 %2885
        %2887 = vrot.lane.b32.xlu0 %v2817, 24
        %v2888 = vpop.permute.xlu0 %2887
        %2889 = vrot.lane.b32.xlu0 %v2818, 24
        %v2890 = vpop.permute.xlu0 %2889
        %2891 = vrot.lane.b32.xlu0 %v2819, 24
        %v2892 = vpop.permute.xlu0 %2891
        %2893 = vrot.lane.b32.xlu0 %v2820, 24
        %v2894 = vpop.permute.xlu0 %2893
        %2895 = vrot.lane.b32.xlu0 %v2821, 24
        %v2896 = vpop.permute.xlu0 %2895
        %2897 = vrot.lane.b32.xlu0 %v2822, 24
        %v2898 = vpop.permute.xlu0 %2897
        %2899 = vrot.lane.b32.xlu0 %v2823, 24
        %v2900 = vpop.permute.xlu0 %2899
        %2901 = vrot.lane.b32.xlu0 %v2824, 24
        %v2902 = vpop.permute.xlu0 %2901
        %2903 = vrot.lane.b32.xlu0 %v2825, 24
        %v2904 = vpop.permute.xlu0 %2903
        %2905 = vrot.lane.b32.xlu0 %v2826, 24
        %v2906 = vpop.permute.xlu0 %2905
        %2907 = vrot.lane.b32.xlu0 %v2827, 24
        %v2908 = vpop.permute.xlu0 %2907
        %2909 = vrot.lane.b32.xlu0 %v2828, 24
        %v2910 = vpop.permute.xlu0 %2909
        %2911 = vrot.lane.b32.xlu0 %v2829, 24
        %v2912 = vpop.permute.xlu0 %2911
        %2913 = vrot.lane.b32.xlu0 %v2830, 24
        %v2914 = vpop.permute.xlu0 %2913
        %2915 = vrot.lane.b32.xlu0 %v2831, 24
        %v2916 = vpop.permute.xlu0 %2915
        %2917 = vrot.lane.b32.xlu0 %v2832, 24
        %v2918 = vpop.permute.xlu0 %2917
        %2919 = vrot.lane.b32.xlu0 %v2833, 24
        %v2920 = vpop.permute.xlu0 %2919
        %2921 = vrot.lane.b32.xlu0 %v2834, 24
        %v2922 = vpop.permute.xlu0 %2921
        %2923 = vrot.lane.b32.xlu0 %v2835, 24
        %v2924 = vpop.permute.xlu0 %2923
        %2925 = vrot.lane.b32.xlu0 %v2836, 24
        %v2926 = vpop.permute.xlu0 %2925
        %2927 = vrot.lane.b32.xlu0 %v2837, 24
        %v2928 = vpop.permute.xlu0 %2927
        %2929 = vrot.lane.b32.xlu0 %v2838, 24
        %v2930 = vpop.permute.xlu0 %2929
        %2931 = vrot.lane.b32.xlu0 %v2839, 24
        %v2932 = vpop.permute.xlu0 %2931
        %2933 = vrot.lane.b32.xlu0 %v2840, 24
        %v2934 = vpop.permute.xlu0 %2933
        %2935 = vrot.lane.b32.xlu0 %v2841, 24
        %v2936 = vpop.permute.xlu0 %2935
        %2937 = vrot.lane.b32.xlu0 %v2842, 24
        %v2938 = vpop.permute.xlu0 %2937
        %vm2971 = vcmask 261312
        %2972 = vst.msk [vmem:[#allocation5] sm:$0xff] %vm2971, %v2876
        %2973 = vst.msk [vmem:[#allocation5 + $0x8] sm:$0xff] %vm2971, %v2878
        %2974 = vst.msk [vmem:[#allocation5 + $0x10] sm:$0xff] %vm2971, %v2880
        %2975 = vst.msk [vmem:[#allocation5 + $0x18] sm:$0xff] %vm2971, %v2882
        %2976 = vst.msk [vmem:[#allocation5 + $0x20] sm:$0xff] %vm2971, %v2884
        %2977 = vst.msk [vmem:[#allocation5 + $0x28] sm:$0xff] %vm2971, %v2886
        %2978 = vst.msk [vmem:[#allocation5 + $0x30] sm:$0xff] %vm2971, %v2888
        %2979 = vst.msk [vmem:[#allocation5 + $0x38] sm:$0xff] %vm2971, %v2890
        %2980 = vst.msk [vmem:[#allocation5 + $0x40] sm:$0xff] %vm2971, %v2892
        %2981 = vst.msk [vmem:[#allocation5 + $0x48] sm:$0xff] %vm2971, %v2894
        %2982 = vst.msk [vmem:[#allocation5 + $0x50] sm:$0xff] %vm2971, %v2896
        %2983 = vst.msk [vmem:[#allocation5 + $0x58] sm:$0xff] %vm2971, %v2898
        %2984 = vst.msk [vmem:[#allocation5 + $0x60] sm:$0xff] %vm2971, %v2900
        %2985 = vst.msk [vmem:[#allocation5 + $0x68] sm:$0xff] %vm2971, %v2902
        %2986 = vst.msk [vmem:[#allocation5 + $0x70] sm:$0xff] %vm2971, %v2904
        %2987 = vst.msk [vmem:[#allocation5 + $0x78] sm:$0xff] %vm2971, %v2906
        %2988 = vst.msk [vmem:[#allocation5 + $0x80] sm:$0xff] %vm2971, %v2908
        %2989 = vst.msk [vmem:[#allocation5 + $0x88] sm:$0xff] %vm2971, %v2910
        %2990 = vst.msk [vmem:[#allocation5 + $0x90] sm:$0xff] %vm2971, %v2912
        %2991 = vst.msk [vmem:[#allocation5 + $0x98] sm:$0xff] %vm2971, %v2914
        %2992 = vst.msk [vmem:[#allocation5 + $0xa0] sm:$0xff] %vm2971, %v2916
        %2993 = vst.msk [vmem:[#allocation5 + $0xa8] sm:$0xff] %vm2971, %v2918
        %2994 = vst.msk [vmem:[#allocation5 + $0xb0] sm:$0xff] %vm2971, %v2920
        %2995 = vst.msk [vmem:[#allocation5 + $0xb8] sm:$0xff] %vm2971, %v2922
        %2996 = vst.msk [vmem:[#allocation5 + $0xc0] sm:$0xff] %vm2971, %v2924
        %2997 = vst.msk [vmem:[#allocation5 + $0xc8] sm:$0xff] %vm2971, %v2926
        %2998 = vst.msk [vmem:[#allocation5 + $0xd0] sm:$0xff] %vm2971, %v2928
        %2999 = vst.msk [vmem:[#allocation5 + $0xd8] sm:$0xff] %vm2971, %v2930
        %3000 = vst.msk [vmem:[#allocation5 + $0xe0] sm:$0xff] %vm2971, %v2932
        %3001 = vst.msk [vmem:[#allocation5 + $0xe8] sm:$0xff] %vm2971, %v2934
        %3002 = vst.msk [vmem:[#allocation5 + $0xf0] sm:$0xff] %vm2971, %v2936
        %3003 = vst.msk [vmem:[#allocation5 + $0xf8] sm:$0xff] %vm2971, %v2938
        %v3004 = vld [vmem:[%s2328 + $0x1] sm:$0xff]
        %v3005 = vld [vmem:[%s2328 + $0x9] sm:$0xff]
        %v3006 = vld [vmem:[%s2328 + $0x19] sm:$0xff]
        %v3007 = vld [vmem:[%s2328 + $0x21] sm:$0xff]
        %v3008 = vld [vmem:[%s2328 + $0x31] sm:$0xff]
        %v3009 = vld [vmem:[%s2328 + $0x39] sm:$0xff]
        %v3010 = vld [vmem:[%s2328 + $0x49] sm:$0xff]
        %v3011 = vld [vmem:[%s2328 + $0x51] sm:$0xff]
        %v3012 = vld [vmem:[%s2328 + $0x61] sm:$0xff]
        %v3013 = vld [vmem:[%s2328 + $0x69] sm:$0xff]
        %v3014 = vld [vmem:[%s2328 + $0x79] sm:$0xff]
        %v3015 = vld [vmem:[%s2328 + $0x81] sm:$0xff]
        %v3016 = vld [vmem:[%s2328 + $0x91] sm:$0xff]
        %v3017 = vld [vmem:[%s2328 + $0x99] sm:$0xff]
        %v3018 = vld [vmem:[%s2328 + $0xa9] sm:$0xff]
        %v3019 = vld [vmem:[%s2328 + $0xb1] sm:$0xff]
        %v3020 = vld [vmem:[%s2328 + $0xc1] sm:$0xff]
        %v3021 = vld [vmem:[%s2328 + $0xc9] sm:$0xff]
        %v3022 = vld [vmem:[%s2328 + $0xd9] sm:$0xff]
        %v3023 = vld [vmem:[%s2328 + $0xe1] sm:$0xff]
        %v3024 = vld [vmem:[%s2328 + $0xf1] sm:$0xff]
        %v3025 = vld [vmem:[%s2328 + $0xf9] sm:$0xff]
        %v3026 = vld [vmem:[%s2328 + $0x109] sm:$0xff]
        %v3027 = vld [vmem:[%s2328 + $0x111] sm:$0xff]
        %v3028 = vld [vmem:[%s2328 + $0x121] sm:$0xff]
        %v3029 = vld [vmem:[%s2328 + $0x129] sm:$0xff]
        %v3030 = vld [vmem:[%s2328 + $0x139] sm:$0xff]
        %v3031 = vld [vmem:[%s2328 + $0x141] sm:$0xff]
        %v3032 = vld [vmem:[%s2328 + $0x151] sm:$0xff]
        %v3033 = vld [vmem:[%s2328 + $0x159] sm:$0xff]
        %v3034 = vld [vmem:[%s2328 + $0x169] sm:$0xff]
        %v3035 = vld [vmem:[%s2328 + $0x171] sm:$0xff]
        %3068 = vrot.lane.b32.xlu0 %v3004, 32
        %v3069 = vpop.permute.xlu0 %3068
        %3070 = vrot.lane.b32.xlu0 %v3005, 32
        %v3071 = vpop.permute.xlu0 %3070
        %3072 = vrot.lane.b32.xlu0 %v3006, 32
        %v3073 = vpop.permute.xlu0 %3072
        %3074 = vrot.lane.b32.xlu0 %v3007, 32
        %v3075 = vpop.permute.xlu0 %3074
        %3076 = vrot.lane.b32.xlu0 %v3008, 32
        %v3077 = vpop.permute.xlu0 %3076
        %3078 = vrot.lane.b32.xlu0 %v3009, 32
        %v3079 = vpop.permute.xlu0 %3078
        %3080 = vrot.lane.b32.xlu0 %v3010, 32
        %v3081 = vpop.permute.xlu0 %3080
        %3082 = vrot.lane.b32.xlu0 %v3011, 32
        %v3083 = vpop.permute.xlu0 %3082
        %3084 = vrot.lane.b32.xlu0 %v3012, 32
        %v3085 = vpop.permute.xlu0 %3084
        %3086 = vrot.lane.b32.xlu0 %v3013, 32
        %v3087 = vpop.permute.xlu0 %3086
        %3088 = vrot.lane.b32.xlu0 %v3014, 32
        %v3089 = vpop.permute.xlu0 %3088
        %3090 = vrot.lane.b32.xlu0 %v3015, 32
        %v3091 = vpop.permute.xlu0 %3090
        %3092 = vrot.lane.b32.xlu0 %v3016, 32
        %v3093 = vpop.permute.xlu0 %3092
        %3094 = vrot.lane.b32.xlu0 %v3017, 32
        %v3095 = vpop.permute.xlu0 %3094
        %3096 = vrot.lane.b32.xlu0 %v3018, 32
        %v3097 = vpop.permute.xlu0 %3096
        %3098 = vrot.lane.b32.xlu0 %v3019, 32
        %v3099 = vpop.permute.xlu0 %3098
        %3100 = vrot.lane.b32.xlu0 %v3020, 32
        %v3101 = vpop.permute.xlu0 %3100
        %3102 = vrot.lane.b32.xlu0 %v3021, 32
        %v3103 = vpop.permute.xlu0 %3102
        %3104 = vrot.lane.b32.xlu0 %v3022, 32
        %v3105 = vpop.permute.xlu0 %3104
        %3106 = vrot.lane.b32.xlu0 %v3023, 32
        %v3107 = vpop.permute.xlu0 %3106
        %3108 = vrot.lane.b32.xlu0 %v3024, 32
        %v3109 = vpop.permute.xlu0 %3108
        %3110 = vrot.lane.b32.xlu0 %v3025, 32
        %v3111 = vpop.permute.xlu0 %3110
        %3112 = vrot.lane.b32.xlu0 %v3026, 32
        %v3113 = vpop.permute.xlu0 %3112
        %3114 = vrot.lane.b32.xlu0 %v3027, 32
        %v3115 = vpop.permute.xlu0 %3114
        %3116 = vrot.lane.b32.xlu0 %v3028, 32
        %v3117 = vpop.permute.xlu0 %3116
        %3118 = vrot.lane.b32.xlu0 %v3029, 32
        %v3119 = vpop.permute.xlu0 %3118
        %3120 = vrot.lane.b32.xlu0 %v3030, 32
        %v3121 = vpop.permute.xlu0 %3120
        %3122 = vrot.lane.b32.xlu0 %v3031, 32
        %v3123 = vpop.permute.xlu0 %3122
        %3124 = vrot.lane.b32.xlu0 %v3032, 32
        %v3125 = vpop.permute.xlu0 %3124
        %3126 = vrot.lane.b32.xlu0 %v3033, 32
        %v3127 = vpop.permute.xlu0 %3126
        %3128 = vrot.lane.b32.xlu0 %v3034, 32
        %v3129 = vpop.permute.xlu0 %3128
        %3130 = vrot.lane.b32.xlu0 %v3035, 32
        %v3131 = vpop.permute.xlu0 %3130
        %vm3164 = vcmask 326912
        %3165 = vst.msk [vmem:[#allocation5] sm:$0xff] %vm3164, %v3069
        %3166 = vst.msk [vmem:[#allocation5 + $0x8] sm:$0xff] %vm3164, %v3071
        %3167 = vst.msk [vmem:[#allocation5 + $0x10] sm:$0xff] %vm3164, %v3073
        %3168 = vst.msk [vmem:[#allocation5 + $0x18] sm:$0xff] %vm3164, %v3075
        %3169 = vst.msk [vmem:[#allocation5 + $0x20] sm:$0xff] %vm3164, %v3077
        %3170 = vst.msk [vmem:[#allocation5 + $0x28] sm:$0xff] %vm3164, %v3079
        %3171 = vst.msk [vmem:[#allocation5 + $0x30] sm:$0xff] %vm3164, %v3081
        %3172 = vst.msk [vmem:[#allocation5 + $0x38] sm:$0xff] %vm3164, %v3083
        %3173 = vst.msk [vmem:[#allocation5 + $0x40] sm:$0xff] %vm3164, %v3085
        %3174 = vst.msk [vmem:[#allocation5 + $0x48] sm:$0xff] %vm3164, %v3087
        %3175 = vst.msk [vmem:[#allocation5 + $0x50] sm:$0xff] %vm3164, %v3089
        %3176 = vst.msk [vmem:[#allocation5 + $0x58] sm:$0xff] %vm3164, %v3091
        %3177 = vst.msk [vmem:[#allocation5 + $0x60] sm:$0xff] %vm3164, %v3093
        %3178 = vst.msk [vmem:[#allocation5 + $0x68] sm:$0xff] %vm3164, %v3095
        %3179 = vst.msk [vmem:[#allocation5 + $0x70] sm:$0xff] %vm3164, %v3097
        %3180 = vst.msk [vmem:[#allocation5 + $0x78] sm:$0xff] %vm3164, %v3099
        %3181 = vst.msk [vmem:[#allocation5 + $0x80] sm:$0xff] %vm3164, %v3101
        %3182 = vst.msk [vmem:[#allocation5 + $0x88] sm:$0xff] %vm3164, %v3103
        %3183 = vst.msk [vmem:[#allocation5 + $0x90] sm:$0xff] %vm3164, %v3105
        %3184 = vst.msk [vmem:[#allocation5 + $0x98] sm:$0xff] %vm3164, %v3107
        %3185 = vst.msk [vmem:[#allocation5 + $0xa0] sm:$0xff] %vm3164, %v3109
        %3186 = vst.msk [vmem:[#allocation5 + $0xa8] sm:$0xff] %vm3164, %v3111
        %3187 = vst.msk [vmem:[#allocation5 + $0xb0] sm:$0xff] %vm3164, %v3113
        %3188 = vst.msk [vmem:[#allocation5 + $0xb8] sm:$0xff] %vm3164, %v3115
        %3189 = vst.msk [vmem:[#allocation5 + $0xc0] sm:$0xff] %vm3164, %v3117
        %3190 = vst.msk [vmem:[#allocation5 + $0xc8] sm:$0xff] %vm3164, %v3119
        %3191 = vst.msk [vmem:[#allocation5 + $0xd0] sm:$0xff] %vm3164, %v3121
        %3192 = vst.msk [vmem:[#allocation5 + $0xd8] sm:$0xff] %vm3164, %v3123
        %3193 = vst.msk [vmem:[#allocation5 + $0xe0] sm:$0xff] %vm3164, %v3125
        %3194 = vst.msk [vmem:[#allocation5 + $0xe8] sm:$0xff] %vm3164, %v3127
        %3195 = vst.msk [vmem:[#allocation5 + $0xf0] sm:$0xff] %vm3164, %v3129
        %3196 = vst.msk [vmem:[#allocation5 + $0xf8] sm:$0xff] %vm3164, %v3131
        %v3197 = vld [vmem:[%s2328 + $0x2] sm:$0xff]
        %v3198 = vld [vmem:[%s2328 + $0xa] sm:$0xff]
        %v3199 = vld [vmem:[%s2328 + $0x1a] sm:$0xff]
        %v3200 = vld [vmem:[%s2328 + $0x22] sm:$0xff]
        %v3201 = vld [vmem:[%s2328 + $0x32] sm:$0xff]
        %v3202 = vld [vmem:[%s2328 + $0x3a] sm:$0xff]
        %v3203 = vld [vmem:[%s2328 + $0x4a] sm:$0xff]
        %v3204 = vld [vmem:[%s2328 + $0x52] sm:$0xff]
        %v3205 = vld [vmem:[%s2328 + $0x62] sm:$0xff]
        %v3206 = vld [vmem:[%s2328 + $0x6a] sm:$0xff]
        %v3207 = vld [vmem:[%s2328 + $0x7a] sm:$0xff]
        %v3208 = vld [vmem:[%s2328 + $0x82] sm:$0xff]
        %v3209 = vld [vmem:[%s2328 + $0x92] sm:$0xff]
        %v3210 = vld [vmem:[%s2328 + $0x9a] sm:$0xff]
        %v3211 = vld [vmem:[%s2328 + $0xaa] sm:$0xff]
        %v3212 = vld [vmem:[%s2328 + $0xb2] sm:$0xff]
        %v3213 = vld [vmem:[%s2328 + $0xc2] sm:$0xff]
        %v3214 = vld [vmem:[%s2328 + $0xca] sm:$0xff]
        %v3215 = vld [vmem:[%s2328 + $0xda] sm:$0xff]
        %v3216 = vld [vmem:[%s2328 + $0xe2] sm:$0xff]
        %v3217 = vld [vmem:[%s2328 + $0xf2] sm:$0xff]
        %v3218 = vld [vmem:[%s2328 + $0xfa] sm:$0xff]
        %v3219 = vld [vmem:[%s2328 + $0x10a] sm:$0xff]
        %v3220 = vld [vmem:[%s2328 + $0x112] sm:$0xff]
        %v3221 = vld [vmem:[%s2328 + $0x122] sm:$0xff]
        %v3222 = vld [vmem:[%s2328 + $0x12a] sm:$0xff]
        %v3223 = vld [vmem:[%s2328 + $0x13a] sm:$0xff]
        %v3224 = vld [vmem:[%s2328 + $0x142] sm:$0xff]
        %v3225 = vld [vmem:[%s2328 + $0x152] sm:$0xff]
        %v3226 = vld [vmem:[%s2328 + $0x15a] sm:$0xff]
        %v3227 = vld [vmem:[%s2328 + $0x16a] sm:$0xff]
        %v3228 = vld [vmem:[%s2328 + $0x172] sm:$0xff]
        %3261 = vrot.lane.b32.xlu0 %v3197, 40
        %v3262 = vpop.permute.xlu0 %3261
        %3263 = vrot.lane.b32.xlu0 %v3198, 40
        %v3264 = vpop.permute.xlu0 %3263
        %3265 = vrot.lane.b32.xlu0 %v3199, 40
        %v3266 = vpop.permute.xlu0 %3265
        %3267 = vrot.lane.b32.xlu0 %v3200, 40
        %v3268 = vpop.permute.xlu0 %3267
        %3269 = vrot.lane.b32.xlu0 %v3201, 40
        %v3270 = vpop.permute.xlu0 %3269
        %3271 = vrot.lane.b32.xlu0 %v3202, 40
        %v3272 = vpop.permute.xlu0 %3271
        %3273 = vrot.lane.b32.xlu0 %v3203, 40
        %v3274 = vpop.permute.xlu0 %3273
        %3275 = vrot.lane.b32.xlu0 %v3204, 40
        %v3276 = vpop.permute.xlu0 %3275
        %3277 = vrot.lane.b32.xlu0 %v3205, 40
        %v3278 = vpop.permute.xlu0 %3277
        %3279 = vrot.lane.b32.xlu0 %v3206, 40
        %v3280 = vpop.permute.xlu0 %3279
        %3281 = vrot.lane.b32.xlu0 %v3207, 40
        %v3282 = vpop.permute.xlu0 %3281
        %3283 = vrot.lane.b32.xlu0 %v3208, 40
        %v3284 = vpop.permute.xlu0 %3283
        %3285 = vrot.lane.b32.xlu0 %v3209, 40
        %v3286 = vpop.permute.xlu0 %3285
        %3287 = vrot.lane.b32.xlu0 %v3210, 40
        %v3288 = vpop.permute.xlu0 %3287
        %3289 = vrot.lane.b32.xlu0 %v3211, 40
        %v3290 = vpop.permute.xlu0 %3289
        %3291 = vrot.lane.b32.xlu0 %v3212, 40
        %v3292 = vpop.permute.xlu0 %3291
        %3293 = vrot.lane.b32.xlu0 %v3213, 40
        %v3294 = vpop.permute.xlu0 %3293
        %3295 = vrot.lane.b32.xlu0 %v3214, 40
        %v3296 = vpop.permute.xlu0 %3295
        %3297 = vrot.lane.b32.xlu0 %v3215, 40
        %v3298 = vpop.permute.xlu0 %3297
        %3299 = vrot.lane.b32.xlu0 %v3216, 40
        %v3300 = vpop.permute.xlu0 %3299
        %3301 = vrot.lane.b32.xlu0 %v3217, 40
        %v3302 = vpop.permute.xlu0 %3301
        %3303 = vrot.lane.b32.xlu0 %v3218, 40
        %v3304 = vpop.permute.xlu0 %3303
        %3305 = vrot.lane.b32.xlu0 %v3219, 40
        %v3306 = vpop.permute.xlu0 %3305
        %3307 = vrot.lane.b32.xlu0 %v3220, 40
        %v3308 = vpop.permute.xlu0 %3307
        %3309 = vrot.lane.b32.xlu0 %v3221, 40
        %v3310 = vpop.permute.xlu0 %3309
        %3311 = vrot.lane.b32.xlu0 %v3222, 40
        %v3312 = vpop.permute.xlu0 %3311
        %3313 = vrot.lane.b32.xlu0 %v3223, 40
        %v3314 = vpop.permute.xlu0 %3313
        %3315 = vrot.lane.b32.xlu0 %v3224, 40
        %v3316 = vpop.permute.xlu0 %3315
        %3317 = vrot.lane.b32.xlu0 %v3225, 40
        %v3318 = vpop.permute.xlu0 %3317
        %3319 = vrot.lane.b32.xlu0 %v3226, 40
        %v3320 = vpop.permute.xlu0 %3319
        %3321 = vrot.lane.b32.xlu0 %v3227, 40
        %v3322 = vpop.permute.xlu0 %3321
        %3323 = vrot.lane.b32.xlu0 %v3228, 40
        %v3324 = vpop.permute.xlu0 %3323
        %vm3357 = vcmask 392512
        %3358 = vst.msk [vmem:[#allocation5] sm:$0xff] %vm3357, %v3262
        %3359 = vst.msk [vmem:[#allocation5 + $0x8] sm:$0xff] %vm3357, %v3264
        %3360 = vst.msk [vmem:[#allocation5 + $0x10] sm:$0xff] %vm3357, %v3266
        %3361 = vst.msk [vmem:[#allocation5 + $0x18] sm:$0xff] %vm3357, %v3268
        %3362 = vst.msk [vmem:[#allocation5 + $0x20] sm:$0xff] %vm3357, %v3270
        %3363 = vst.msk [vmem:[#allocation5 + $0x28] sm:$0xff] %vm3357, %v3272
        %3364 = vst.msk [vmem:[#allocation5 + $0x30] sm:$0xff] %vm3357, %v3274
        %3365 = vst.msk [vmem:[#allocation5 + $0x38] sm:$0xff] %vm3357, %v3276
        %3366 = vst.msk [vmem:[#allocation5 + $0x40] sm:$0xff] %vm3357, %v3278
        %3367 = vst.msk [vmem:[#allocation5 + $0x48] sm:$0xff] %vm3357, %v3280
        %3368 = vst.msk [vmem:[#allocation5 + $0x50] sm:$0xff] %vm3357, %v3282
        %3369 = vst.msk [vmem:[#allocation5 + $0x58] sm:$0xff] %vm3357, %v3284
        %3370 = vst.msk [vmem:[#allocation5 + $0x60] sm:$0xff] %vm3357, %v3286
        %3371 = vst.msk [vmem:[#allocation5 + $0x68] sm:$0xff] %vm3357, %v3288
        %3372 = vst.msk [vmem:[#allocation5 + $0x70] sm:$0xff] %vm3357, %v3290
        %3373 = vst.msk [vmem:[#allocation5 + $0x78] sm:$0xff] %vm3357, %v3292
        %3374 = vst.msk [vmem:[#allocation5 + $0x80] sm:$0xff] %vm3357, %v3294
        %3375 = vst.msk [vmem:[#allocation5 + $0x88] sm:$0xff] %vm3357, %v3296
        %3376 = vst.msk [vmem:[#allocation5 + $0x90] sm:$0xff] %vm3357, %v3298
        %3377 = vst.msk [vmem:[#allocation5 + $0x98] sm:$0xff] %vm3357, %v3300
        %3378 = vst.msk [vmem:[#allocation5 + $0xa0] sm:$0xff] %vm3357, %v3302
        %3379 = vst.msk [vmem:[#allocation5 + $0xa8] sm:$0xff] %vm3357, %v3304
        %3380 = vst.msk [vmem:[#allocation5 + $0xb0] sm:$0xff] %vm3357, %v3306
        %3381 = vst.msk [vmem:[#allocation5 + $0xb8] sm:$0xff] %vm3357, %v3308
        %3382 = vst.msk [vmem:[#allocation5 + $0xc0] sm:$0xff] %vm3357, %v3310
        %3383 = vst.msk [vmem:[#allocation5 + $0xc8] sm:$0xff] %vm3357, %v3312
        %3384 = vst.msk [vmem:[#allocation5 + $0xd0] sm:$0xff] %vm3357, %v3314
        %3385 = vst.msk [vmem:[#allocation5 + $0xd8] sm:$0xff] %vm3357, %v3316
        %3386 = vst.msk [vmem:[#allocation5 + $0xe0] sm:$0xff] %vm3357, %v3318
        %3387 = vst.msk [vmem:[#allocation5 + $0xe8] sm:$0xff] %vm3357, %v3320
        %3388 = vst.msk [vmem:[#allocation5 + $0xf0] sm:$0xff] %vm3357, %v3322
        %3389 = vst.msk [vmem:[#allocation5 + $0xf8] sm:$0xff] %vm3357, %v3324
        %s3390 = scalar_lea.vmem [#allocation4], 48
        %v3391 = vld [vmem:[%s3390] sm:$0xff]
        %v3392 = vld [vmem:[%s3390 + $0x8] sm:$0xff]
        %v3393 = vld [vmem:[%s3390 + $0x18] sm:$0xff]
        %v3394 = vld [vmem:[%s3390 + $0x20] sm:$0xff]
        %v3395 = vld [vmem:[%s3390 + $0x30] sm:$0xff]
        %v3396 = vld [vmem:[%s3390 + $0x38] sm:$0xff]
        %v3397 = vld [vmem:[%s3390 + $0x48] sm:$0xff]
        %v3398 = vld [vmem:[%s3390 + $0x50] sm:$0xff]
        %v3399 = vld [vmem:[%s3390 + $0x60] sm:$0xff]
        %v3400 = vld [vmem:[%s3390 + $0x68] sm:$0xff]
        %v3401 = vld [vmem:[%s3390 + $0x78] sm:$0xff]
        %v3402 = vld [vmem:[%s3390 + $0x80] sm:$0xff]
        %v3403 = vld [vmem:[%s3390 + $0x90] sm:$0xff]
        %v3404 = vld [vmem:[%s3390 + $0x98] sm:$0xff]
        %v3405 = vld [vmem:[%s3390 + $0xa8] sm:$0xff]
        %v3406 = vld [vmem:[%s3390 + $0xb0] sm:$0xff]
        %v3407 = vld [vmem:[%s3390 + $0xc0] sm:$0xff]
        %v3408 = vld [vmem:[%s3390 + $0xc8] sm:$0xff]
        %v3409 = vld [vmem:[%s3390 + $0xd8] sm:$0xff]
        %v3410 = vld [vmem:[%s3390 + $0xe0] sm:$0xff]
        %v3411 = vld [vmem:[%s3390 + $0xf0] sm:$0xff]
        %v3412 = vld [vmem:[%s3390 + $0xf8] sm:$0xff]
        %v3413 = vld [vmem:[%s3390 + $0x108] sm:$0xff]
        %v3414 = vld [vmem:[%s3390 + $0x110] sm:$0xff]
        %v3415 = vld [vmem:[%s3390 + $0x120] sm:$0xff]
        %v3416 = vld [vmem:[%s3390 + $0x128] sm:$0xff]
        %v3417 = vld [vmem:[%s3390 + $0x138] sm:$0xff]
        %v3418 = vld [vmem:[%s3390 + $0x140] sm:$0xff]
        %v3419 = vld [vmem:[%s3390 + $0x150] sm:$0xff]
        %v3420 = vld [vmem:[%s3390 + $0x158] sm:$0xff]
        %v3421 = vld [vmem:[%s3390 + $0x168] sm:$0xff]
        %v3422 = vld [vmem:[%s3390 + $0x170] sm:$0xff]
        %3455 = vrot.lane.b32.xlu0 %v3391, 48
        %v3456 = vpop.permute.xlu0 %3455
        %3457 = vrot.lane.b32.xlu0 %v3392, 48
        %v3458 = vpop.permute.xlu0 %3457
        %3459 = vrot.lane.b32.xlu0 %v3393, 48
        %v3460 = vpop.permute.xlu0 %3459
        %3461 = vrot.lane.b32.xlu0 %v3394, 48
        %v3462 = vpop.permute.xlu0 %3461
        %3463 = vrot.lane.b32.xlu0 %v3395, 48
        %v3464 = vpop.permute.xlu0 %3463
        %3465 = vrot.lane.b32.xlu0 %v3396, 48
        %v3466 = vpop.permute.xlu0 %3465
        %3467 = vrot.lane.b32.xlu0 %v3397, 48
        %v3468 = vpop.permute.xlu0 %3467
        %3469 = vrot.lane.b32.xlu0 %v3398, 48
        %v3470 = vpop.permute.xlu0 %3469
        %3471 = vrot.lane.b32.xlu0 %v3399, 48
        %v3472 = vpop.permute.xlu0 %3471
        %3473 = vrot.lane.b32.xlu0 %v3400, 48
        %v3474 = vpop.permute.xlu0 %3473
        %3475 = vrot.lane.b32.xlu0 %v3401, 48
        %v3476 = vpop.permute.xlu0 %3475
        %3477 = vrot.lane.b32.xlu0 %v3402, 48
        %v3478 = vpop.permute.xlu0 %3477
        %3479 = vrot.lane.b32.xlu0 %v3403, 48
        %v3480 = vpop.permute.xlu0 %3479
        %3481 = vrot.lane.b32.xlu0 %v3404, 48
        %v3482 = vpop.permute.xlu0 %3481
        %3483 = vrot.lane.b32.xlu0 %v3405, 48
        %v3484 = vpop.permute.xlu0 %3483
        %3485 = vrot.lane.b32.xlu0 %v3406, 48
        %v3486 = vpop.permute.xlu0 %3485
        %3487 = vrot.lane.b32.xlu0 %v3407, 48
        %v3488 = vpop.permute.xlu0 %3487
        %3489 = vrot.lane.b32.xlu0 %v3408, 48
        %v3490 = vpop.permute.xlu0 %3489
        %3491 = vrot.lane.b32.xlu0 %v3409, 48
        %v3492 = vpop.permute.xlu0 %3491
        %3493 = vrot.lane.b32.xlu0 %v3410, 48
        %v3494 = vpop.permute.xlu0 %3493
        %3495 = vrot.lane.b32.xlu0 %v3411, 48
        %v3496 = vpop.permute.xlu0 %3495
        %3497 = vrot.lane.b32.xlu0 %v3412, 48
        %v3498 = vpop.permute.xlu0 %3497
        %3499 = vrot.lane.b32.xlu0 %v3413, 48
        %v3500 = vpop.permute.xlu0 %3499
        %3501 = vrot.lane.b32.xlu0 %v3414, 48
        %v3502 = vpop.permute.xlu0 %3501
        %3503 = vrot.lane.b32.xlu0 %v3415, 48
        %v3504 = vpop.permute.xlu0 %3503
        %3505 = vrot.lane.b32.xlu0 %v3416, 48
        %v3506 = vpop.permute.xlu0 %3505
        %3507 = vrot.lane.b32.xlu0 %v3417, 48
        %v3508 = vpop.permute.xlu0 %3507
        %3509 = vrot.lane.b32.xlu0 %v3418, 48
        %v3510 = vpop.permute.xlu0 %3509
        %3511 = vrot.lane.b32.xlu0 %v3419, 48
        %v3512 = vpop.permute.xlu0 %3511
        %3513 = vrot.lane.b32.xlu0 %v3420, 48
        %v3514 = vpop.permute.xlu0 %3513
        %3515 = vrot.lane.b32.xlu0 %v3421, 48
        %v3516 = vpop.permute.xlu0 %3515
        %3517 = vrot.lane.b32.xlu0 %v3422, 48
        %v3518 = vpop.permute.xlu0 %3517
        %vm3551 = vcmask 458112
        %3552 = vst.msk [vmem:[#allocation5] sm:$0xff] %vm3551, %v3456
        %3553 = vst.msk [vmem:[#allocation5 + $0x8] sm:$0xff] %vm3551, %v3458
        %3554 = vst.msk [vmem:[#allocation5 + $0x10] sm:$0xff] %vm3551, %v3460
        %3555 = vst.msk [vmem:[#allocation5 + $0x18] sm:$0xff] %vm3551, %v3462
        %3556 = vst.msk [vmem:[#allocation5 + $0x20] sm:$0xff] %vm3551, %v3464
        %3557 = vst.msk [vmem:[#allocation5 + $0x28] sm:$0xff] %vm3551, %v3466
        %3558 = vst.msk [vmem:[#allocation5 + $0x30] sm:$0xff] %vm3551, %v3468
        %3559 = vst.msk [vmem:[#allocation5 + $0x38] sm:$0xff] %vm3551, %v3470
        %3560 = vst.msk [vmem:[#allocation5 + $0x40] sm:$0xff] %vm3551, %v3472
        %3561 = vst.msk [vmem:[#allocation5 + $0x48] sm:$0xff] %vm3551, %v3474
        %3562 = vst.msk [vmem:[#allocation5 + $0x50] sm:$0xff] %vm3551, %v3476
        %3563 = vst.msk [vmem:[#allocation5 + $0x58] sm:$0xff] %vm3551, %v3478
        %3564 = vst.msk [vmem:[#allocation5 + $0x60] sm:$0xff] %vm3551, %v3480
        %3565 = vst.msk [vmem:[#allocation5 + $0x68] sm:$0xff] %vm3551, %v3482
        %3566 = vst.msk [vmem:[#allocation5 + $0x70] sm:$0xff] %vm3551, %v3484
        %3567 = vst.msk [vmem:[#allocation5 + $0x78] sm:$0xff] %vm3551, %v3486
        %3568 = vst.msk [vmem:[#allocation5 + $0x80] sm:$0xff] %vm3551, %v3488
        %3569 = vst.msk [vmem:[#allocation5 + $0x88] sm:$0xff] %vm3551, %v3490
        %3570 = vst.msk [vmem:[#allocation5 + $0x90] sm:$0xff] %vm3551, %v3492
        %3571 = vst.msk [vmem:[#allocation5 + $0x98] sm:$0xff] %vm3551, %v3494
        %3572 = vst.msk [vmem:[#allocation5 + $0xa0] sm:$0xff] %vm3551, %v3496
        %3573 = vst.msk [vmem:[#allocation5 + $0xa8] sm:$0xff] %vm3551, %v3498
        %3574 = vst.msk [vmem:[#allocation5 + $0xb0] sm:$0xff] %vm3551, %v3500
        %3575 = vst.msk [vmem:[#allocation5 + $0xb8] sm:$0xff] %vm3551, %v3502
        %3576 = vst.msk [vmem:[#allocation5 + $0xc0] sm:$0xff] %vm3551, %v3504
        %3577 = vst.msk [vmem:[#allocation5 + $0xc8] sm:$0xff] %vm3551, %v3506
        %3578 = vst.msk [vmem:[#allocation5 + $0xd0] sm:$0xff] %vm3551, %v3508
        %3579 = vst.msk [vmem:[#allocation5 + $0xd8] sm:$0xff] %vm3551, %v3510
        %3580 = vst.msk [vmem:[#allocation5 + $0xe0] sm:$0xff] %vm3551, %v3512
        %3581 = vst.msk [vmem:[#allocation5 + $0xe8] sm:$0xff] %vm3551, %v3514
        %3582 = vst.msk [vmem:[#allocation5 + $0xf0] sm:$0xff] %vm3551, %v3516
        %3583 = vst.msk [vmem:[#allocation5 + $0xf8] sm:$0xff] %vm3551, %v3518
        %v3584 = vld [vmem:[%s3390 + $0x1] sm:$0xff]
        %v3585 = vld [vmem:[%s3390 + $0x9] sm:$0xff]
        %v3586 = vld [vmem:[%s3390 + $0x19] sm:$0xff]
        %v3587 = vld [vmem:[%s3390 + $0x21] sm:$0xff]
        %v3588 = vld [vmem:[%s3390 + $0x31] sm:$0xff]
        %v3589 = vld [vmem:[%s3390 + $0x39] sm:$0xff]
        %v3590 = vld [vmem:[%s3390 + $0x49] sm:$0xff]
        %v3591 = vld [vmem:[%s3390 + $0x51] sm:$0xff]
        %v3592 = vld [vmem:[%s3390 + $0x61] sm:$0xff]
        %v3593 = vld [vmem:[%s3390 + $0x69] sm:$0xff]
        %v3594 = vld [vmem:[%s3390 + $0x79] sm:$0xff]
        %v3595 = vld [vmem:[%s3390 + $0x81] sm:$0xff]
        %v3596 = vld [vmem:[%s3390 + $0x91] sm:$0xff]
        %v3597 = vld [vmem:[%s3390 + $0x99] sm:$0xff]
        %v3598 = vld [vmem:[%s3390 + $0xa9] sm:$0xff]
        %v3599 = vld [vmem:[%s3390 + $0xb1] sm:$0xff]
        %v3600 = vld [vmem:[%s3390 + $0xc1] sm:$0xff]
        %v3601 = vld [vmem:[%s3390 + $0xc9] sm:$0xff]
        %v3602 = vld [vmem:[%s3390 + $0xd9] sm:$0xff]
        %v3603 = vld [vmem:[%s3390 + $0xe1] sm:$0xff]
        %v3604 = vld [vmem:[%s3390 + $0xf1] sm:$0xff]
        %v3605 = vld [vmem:[%s3390 + $0xf9] sm:$0xff]
        %v3606 = vld [vmem:[%s3390 + $0x109] sm:$0xff]
        %v3607 = vld [vmem:[%s3390 + $0x111] sm:$0xff]
        %v3608 = vld [vmem:[%s3390 + $0x121] sm:$0xff]
        %v3609 = vld [vmem:[%s3390 + $0x129] sm:$0xff]
        %v3610 = vld [vmem:[%s3390 + $0x139] sm:$0xff]
        %v3611 = vld [vmem:[%s3390 + $0x141] sm:$0xff]
        %v3612 = vld [vmem:[%s3390 + $0x151] sm:$0xff]
        %v3613 = vld [vmem:[%s3390 + $0x159] sm:$0xff]
        %v3614 = vld [vmem:[%s3390 + $0x169] sm:$0xff]
        %v3615 = vld [vmem:[%s3390 + $0x171] sm:$0xff]
        %3648 = vrot.lane.b32.xlu0 %v3584, 56
        %v3649 = vpop.permute.xlu0 %3648
        %3650 = vrot.lane.b32.xlu0 %v3585, 56
        %v3651 = vpop.permute.xlu0 %3650
        %3652 = vrot.lane.b32.xlu0 %v3586, 56
        %v3653 = vpop.permute.xlu0 %3652
        %3654 = vrot.lane.b32.xlu0 %v3587, 56
        %v3655 = vpop.permute.xlu0 %3654
        %3656 = vrot.lane.b32.xlu0 %v3588, 56
        %v3657 = vpop.permute.xlu0 %3656
        %3658 = vrot.lane.b32.xlu0 %v3589, 56
        %v3659 = vpop.permute.xlu0 %3658
        %3660 = vrot.lane.b32.xlu0 %v3590, 56
        %v3661 = vpop.permute.xlu0 %3660
        %3662 = vrot.lane.b32.xlu0 %v3591, 56
        %v3663 = vpop.permute.xlu0 %3662
        %3664 = vrot.lane.b32.xlu0 %v3592, 56
        %v3665 = vpop.permute.xlu0 %3664
        %3666 = vrot.lane.b32.xlu0 %v3593, 56
        %v3667 = vpop.permute.xlu0 %3666
        %3668 = vrot.lane.b32.xlu0 %v3594, 56
        %v3669 = vpop.permute.xlu0 %3668
        %3670 = vrot.lane.b32.xlu0 %v3595, 56
        %v3671 = vpop.permute.xlu0 %3670
        %3672 = vrot.lane.b32.xlu0 %v3596, 56
        %v3673 = vpop.permute.xlu0 %3672
        %3674 = vrot.lane.b32.xlu0 %v3597, 56
        %v3675 = vpop.permute.xlu0 %3674
        %3676 = vrot.lane.b32.xlu0 %v3598, 56
        %v3677 = vpop.permute.xlu0 %3676
        %3678 = vrot.lane.b32.xlu0 %v3599, 56
        %v3679 = vpop.permute.xlu0 %3678
        %3680 = vrot.lane.b32.xlu0 %v3600, 56
        %v3681 = vpop.permute.xlu0 %3680
        %3682 = vrot.lane.b32.xlu0 %v3601, 56
        %v3683 = vpop.permute.xlu0 %3682
        %3684 = vrot.lane.b32.xlu0 %v3602, 56
        %v3685 = vpop.permute.xlu0 %3684
        %3686 = vrot.lane.b32.xlu0 %v3603, 56
        %v3687 = vpop.permute.xlu0 %3686
        %3688 = vrot.lane.b32.xlu0 %v3604, 56
        %v3689 = vpop.permute.xlu0 %3688
        %3690 = vrot.lane.b32.xlu0 %v3605, 56
        %v3691 = vpop.permute.xlu0 %3690
        %3692 = vrot.lane.b32.xlu0 %v3606, 56
        %v3693 = vpop.permute.xlu0 %3692
        %3694 = vrot.lane.b32.xlu0 %v3607, 56
        %v3695 = vpop.permute.xlu0 %3694
        %3696 = vrot.lane.b32.xlu0 %v3608, 56
        %v3697 = vpop.permute.xlu0 %3696
        %3698 = vrot.lane.b32.xlu0 %v3609, 56
        %v3699 = vpop.permute.xlu0 %3698
        %3700 = vrot.lane.b32.xlu0 %v3610, 56
        %v3701 = vpop.permute.xlu0 %3700
        %3702 = vrot.lane.b32.xlu0 %v3611, 56
        %v3703 = vpop.permute.xlu0 %3702
        %3704 = vrot.lane.b32.xlu0 %v3612, 56
        %v3705 = vpop.permute.xlu0 %3704
        %3706 = vrot.lane.b32.xlu0 %v3613, 56
        %v3707 = vpop.permute.xlu0 %3706
        %3708 = vrot.lane.b32.xlu0 %v3614, 56
        %v3709 = vpop.permute.xlu0 %3708
        %3710 = vrot.lane.b32.xlu0 %v3615, 56
        %v3711 = vpop.permute.xlu0 %3710
        %vm3744 = vcmask 523712
        %3745 = vst.msk [vmem:[#allocation5] sm:$0xff] %vm3744, %v3649
        %3746 = vst.msk [vmem:[#allocation5 + $0x8] sm:$0xff] %vm3744, %v3651
        %3747 = vst.msk [vmem:[#allocation5 + $0x10] sm:$0xff] %vm3744, %v3653
        %3748 = vst.msk [vmem:[#allocation5 + $0x18] sm:$0xff] %vm3744, %v3655
        %3749 = vst.msk [vmem:[#allocation5 + $0x20] sm:$0xff] %vm3744, %v3657
        %3750 = vst.msk [vmem:[#allocation5 + $0x28] sm:$0xff] %vm3744, %v3659
        %3751 = vst.msk [vmem:[#allocation5 + $0x30] sm:$0xff] %vm3744, %v3661
        %3752 = vst.msk [vmem:[#allocation5 + $0x38] sm:$0xff] %vm3744, %v3663
        %3753 = vst.msk [vmem:[#allocation5 + $0x40] sm:$0xff] %vm3744, %v3665
        %3754 = vst.msk [vmem:[#allocation5 + $0x48] sm:$0xff] %vm3744, %v3667
        %3755 = vst.msk [vmem:[#allocation5 + $0x50] sm:$0xff] %vm3744, %v3669
        %3756 = vst.msk [vmem:[#allocation5 + $0x58] sm:$0xff] %vm3744, %v3671
        %3757 = vst.msk [vmem:[#allocation5 + $0x60] sm:$0xff] %vm3744, %v3673
        %3758 = vst.msk [vmem:[#allocation5 + $0x68] sm:$0xff] %vm3744, %v3675
        %3759 = vst.msk [vmem:[#allocation5 + $0x70] sm:$0xff] %vm3744, %v3677
        %3760 = vst.msk [vmem:[#allocation5 + $0x78] sm:$0xff] %vm3744, %v3679
        %3761 = vst.msk [vmem:[#allocation5 + $0x80] sm:$0xff] %vm3744, %v3681
        %3762 = vst.msk [vmem:[#allocation5 + $0x88] sm:$0xff] %vm3744, %v3683
        %3763 = vst.msk [vmem:[#allocation5 + $0x90] sm:$0xff] %vm3744, %v3685
        %3764 = vst.msk [vmem:[#allocation5 + $0x98] sm:$0xff] %vm3744, %v3687
        %3765 = vst.msk [vmem:[#allocation5 + $0xa0] sm:$0xff] %vm3744, %v3689
        %3766 = vst.msk [vmem:[#allocation5 + $0xa8] sm:$0xff] %vm3744, %v3691
        %3767 = vst.msk [vmem:[#allocation5 + $0xb0] sm:$0xff] %vm3744, %v3693
        %3768 = vst.msk [vmem:[#allocation5 + $0xb8] sm:$0xff] %vm3744, %v3695
        %3769 = vst.msk [vmem:[#allocation5 + $0xc0] sm:$0xff] %vm3744, %v3697
        %3770 = vst.msk [vmem:[#allocation5 + $0xc8] sm:$0xff] %vm3744, %v3699
        %3771 = vst.msk [vmem:[#allocation5 + $0xd0] sm:$0xff] %vm3744, %v3701
        %3772 = vst.msk [vmem:[#allocation5 + $0xd8] sm:$0xff] %vm3744, %v3703
        %3773 = vst.msk [vmem:[#allocation5 + $0xe0] sm:$0xff] %vm3744, %v3705
        %3774 = vst.msk [vmem:[#allocation5 + $0xe8] sm:$0xff] %vm3744, %v3707
        %3775 = vst.msk [vmem:[#allocation5 + $0xf0] sm:$0xff] %vm3744, %v3709
        %3776 = vst.msk [vmem:[#allocation5 + $0xf8] sm:$0xff] %vm3744, %v3711
        %v3777 = vld [vmem:[%s3390 + $0x2] sm:$0xff]
        %v3778 = vld [vmem:[%s3390 + $0xa] sm:$0xff]
        %v3779 = vld [vmem:[%s3390 + $0x1a] sm:$0xff]
        %v3780 = vld [vmem:[%s3390 + $0x22] sm:$0xff]
        %v3781 = vld [vmem:[%s3390 + $0x32] sm:$0xff]
        %v3782 = vld [vmem:[%s3390 + $0x3a] sm:$0xff]
        %v3783 = vld [vmem:[%s3390 + $0x4a] sm:$0xff]
        %v3784 = vld [vmem:[%s3390 + $0x52] sm:$0xff]
        %v3785 = vld [vmem:[%s3390 + $0x62] sm:$0xff]
        %v3786 = vld [vmem:[%s3390 + $0x6a] sm:$0xff]
        %v3787 = vld [vmem:[%s3390 + $0x7a] sm:$0xff]
        %v3788 = vld [vmem:[%s3390 + $0x82] sm:$0xff]
        %v3789 = vld [vmem:[%s3390 + $0x92] sm:$0xff]
        %v3790 = vld [vmem:[%s3390 + $0x9a] sm:$0xff]
        %v3791 = vld [vmem:[%s3390 + $0xaa] sm:$0xff]
        %v3792 = vld [vmem:[%s3390 + $0xb2] sm:$0xff]
        %v3793 = vld [vmem:[%s3390 + $0xc2] sm:$0xff]
        %v3794 = vld [vmem:[%s3390 + $0xca] sm:$0xff]
        %v3795 = vld [vmem:[%s3390 + $0xda] sm:$0xff]
        %v3796 = vld [vmem:[%s3390 + $0xe2] sm:$0xff]
        %v3797 = vld [vmem:[%s3390 + $0xf2] sm:$0xff]
        %v3798 = vld [vmem:[%s3390 + $0xfa] sm:$0xff]
        %v3799 = vld [vmem:[%s3390 + $0x10a] sm:$0xff]
        %v3800 = vld [vmem:[%s3390 + $0x112] sm:$0xff]
        %v3801 = vld [vmem:[%s3390 + $0x122] sm:$0xff]
        %v3802 = vld [vmem:[%s3390 + $0x12a] sm:$0xff]
        %v3803 = vld [vmem:[%s3390 + $0x13a] sm:$0xff]
        %v3804 = vld [vmem:[%s3390 + $0x142] sm:$0xff]
        %v3805 = vld [vmem:[%s3390 + $0x152] sm:$0xff]
        %v3806 = vld [vmem:[%s3390 + $0x15a] sm:$0xff]
        %v3807 = vld [vmem:[%s3390 + $0x16a] sm:$0xff]
        %v3808 = vld [vmem:[%s3390 + $0x172] sm:$0xff]
        %3841 = vrot.lane.b32.xlu0 %v3777, 64
        %v3842 = vpop.permute.xlu0 %3841
        %3843 = vrot.lane.b32.xlu0 %v3778, 64
        %v3844 = vpop.permute.xlu0 %3843
        %3845 = vrot.lane.b32.xlu0 %v3779, 64
        %v3846 = vpop.permute.xlu0 %3845
        %3847 = vrot.lane.b32.xlu0 %v3780, 64
        %v3848 = vpop.permute.xlu0 %3847
        %3849 = vrot.lane.b32.xlu0 %v3781, 64
        %v3850 = vpop.permute.xlu0 %3849
        %3851 = vrot.lane.b32.xlu0 %v3782, 64
        %v3852 = vpop.permute.xlu0 %3851
        %3853 = vrot.lane.b32.xlu0 %v3783, 64
        %v3854 = vpop.permute.xlu0 %3853
        %3855 = vrot.lane.b32.xlu0 %v3784, 64
        %v3856 = vpop.permute.xlu0 %3855
        %3857 = vrot.lane.b32.xlu0 %v3785, 64
        %v3858 = vpop.permute.xlu0 %3857
        %3859 = vrot.lane.b32.xlu0 %v3786, 64
        %v3860 = vpop.permute.xlu0 %3859
        %3861 = vrot.lane.b32.xlu0 %v3787, 64
        %v3862 = vpop.permute.xlu0 %3861
        %3863 = vrot.lane.b32.xlu0 %v3788, 64
        %v3864 = vpop.permute.xlu0 %3863
        %3865 = vrot.lane.b32.xlu0 %v3789, 64
        %v3866 = vpop.permute.xlu0 %3865
        %3867 = vrot.lane.b32.xlu0 %v3790, 64
        %v3868 = vpop.permute.xlu0 %3867
        %3869 = vrot.lane.b32.xlu0 %v3791, 64
        %v3870 = vpop.permute.xlu0 %3869
        %3871 = vrot.lane.b32.xlu0 %v3792, 64
        %v3872 = vpop.permute.xlu0 %3871
        %3873 = vrot.lane.b32.xlu0 %v3793, 64
        %v3874 = vpop.permute.xlu0 %3873
        %3875 = vrot.lane.b32.xlu0 %v3794, 64
        %v3876 = vpop.permute.xlu0 %3875
        %3877 = vrot.lane.b32.xlu0 %v3795, 64
        %v3878 = vpop.permute.xlu0 %3877
        %3879 = vrot.lane.b32.xlu0 %v3796, 64
        %v3880 = vpop.permute.xlu0 %3879
        %3881 = vrot.lane.b32.xlu0 %v3797, 64
        %v3882 = vpop.permute.xlu0 %3881
        %3883 = vrot.lane.b32.xlu0 %v3798, 64
        %v3884 = vpop.permute.xlu0 %3883
        %3885 = vrot.lane.b32.xlu0 %v3799, 64
        %v3886 = vpop.permute.xlu0 %3885
        %3887 = vrot.lane.b32.xlu0 %v3800, 64
        %v3888 = vpop.permute.xlu0 %3887
        %3889 = vrot.lane.b32.xlu0 %v3801, 64
        %v3890 = vpop.permute.xlu0 %3889
        %3891 = vrot.lane.b32.xlu0 %v3802, 64
        %v3892 = vpop.permute.xlu0 %3891
        %3893 = vrot.lane.b32.xlu0 %v3803, 64
        %v3894 = vpop.permute.xlu0 %3893
        %3895 = vrot.lane.b32.xlu0 %v3804, 64
        %v3896 = vpop.permute.xlu0 %3895
        %3897 = vrot.lane.b32.xlu0 %v3805, 64
        %v3898 = vpop.permute.xlu0 %3897
        %3899 = vrot.lane.b32.xlu0 %v3806, 64
        %v3900 = vpop.permute.xlu0 %3899
        %3901 = vrot.lane.b32.xlu0 %v3807, 64
        %v3902 = vpop.permute.xlu0 %3901
        %3903 = vrot.lane.b32.xlu0 %v3808, 64
        %v3904 = vpop.permute.xlu0 %3903
        %vm3937 = vcmask 589312
        %3938 = vst.msk [vmem:[#allocation5] sm:$0xff] %vm3937, %v3842
        %3939 = vst.msk [vmem:[#allocation5 + $0x8] sm:$0xff] %vm3937, %v3844
        %3940 = vst.msk [vmem:[#allocation5 + $0x10] sm:$0xff] %vm3937, %v3846
        %3941 = vst.msk [vmem:[#allocation5 + $0x18] sm:$0xff] %vm3937, %v3848
        %3942 = vst.msk [vmem:[#allocation5 + $0x20] sm:$0xff] %vm3937, %v3850
        %3943 = vst.msk [vmem:[#allocation5 + $0x28] sm:$0xff] %vm3937, %v3852
        %3944 = vst.msk [vmem:[#allocation5 + $0x30] sm:$0xff] %vm3937, %v3854
        %3945 = vst.msk [vmem:[#allocation5 + $0x38] sm:$0xff] %vm3937, %v3856
        %3946 = vst.msk [vmem:[#allocation5 + $0x40] sm:$0xff] %vm3937, %v3858
        %3947 = vst.msk [vmem:[#allocation5 + $0x48] sm:$0xff] %vm3937, %v3860
        %3948 = vst.msk [vmem:[#allocation5 + $0x50] sm:$0xff] %vm3937, %v3862
        %3949 = vst.msk [vmem:[#allocation5 + $0x58] sm:$0xff] %vm3937, %v3864
        %3950 = vst.msk [vmem:[#allocation5 + $0x60] sm:$0xff] %vm3937, %v3866
        %3951 = vst.msk [vmem:[#allocation5 + $0x68] sm:$0xff] %vm3937, %v3868
        %3952 = vst.msk [vmem:[#allocation5 + $0x70] sm:$0xff] %vm3937, %v3870
        %3953 = vst.msk [vmem:[#allocation5 + $0x78] sm:$0xff] %vm3937, %v3872
        %3954 = vst.msk [vmem:[#allocation5 + $0x80] sm:$0xff] %vm3937, %v3874
        %3955 = vst.msk [vmem:[#allocation5 + $0x88] sm:$0xff] %vm3937, %v3876
        %3956 = vst.msk [vmem:[#allocation5 + $0x90] sm:$0xff] %vm3937, %v3878
        %3957 = vst.msk [vmem:[#allocation5 + $0x98] sm:$0xff] %vm3937, %v3880
        %3958 = vst.msk [vmem:[#allocation5 + $0xa0] sm:$0xff] %vm3937, %v3882
        %3959 = vst.msk [vmem:[#allocation5 + $0xa8] sm:$0xff] %vm3937, %v3884
        %3960 = vst.msk [vmem:[#allocation5 + $0xb0] sm:$0xff] %vm3937, %v3886
        %3961 = vst.msk [vmem:[#allocation5 + $0xb8] sm:$0xff] %vm3937, %v3888
        %3962 = vst.msk [vmem:[#allocation5 + $0xc0] sm:$0xff] %vm3937, %v3890
        %3963 = vst.msk [vmem:[#allocation5 + $0xc8] sm:$0xff] %vm3937, %v3892
        %3964 = vst.msk [vmem:[#allocation5 + $0xd0] sm:$0xff] %vm3937, %v3894
        %3965 = vst.msk [vmem:[#allocation5 + $0xd8] sm:$0xff] %vm3937, %v3896
        %3966 = vst.msk [vmem:[#allocation5 + $0xe0] sm:$0xff] %vm3937, %v3898
        %3967 = vst.msk [vmem:[#allocation5 + $0xe8] sm:$0xff] %vm3937, %v3900
        %3968 = vst.msk [vmem:[#allocation5 + $0xf0] sm:$0xff] %vm3937, %v3902
        %3969 = vst.msk [vmem:[#allocation5 + $0xf8] sm:$0xff] %vm3937, %v3904
        %v3970 = vld [vmem:[#allocation5] sm:$0xff]
        %v3971 = vld [vmem:[#allocation5 + $0x8] sm:$0xff]
        %v3972 = vld [vmem:[#allocation5 + $0x10] sm:$0xff]
        %v3973 = vld [vmem:[#allocation5 + $0x18] sm:$0xff]
        %v3974 = vld [vmem:[#allocation5 + $0x20] sm:$0xff]
        %v3975 = vld [vmem:[#allocation5 + $0x28] sm:$0xff]
        %v3976 = vld [vmem:[#allocation5 + $0x30] sm:$0xff]
        %v3977 = vld [vmem:[#allocation5 + $0x38] sm:$0xff]
        %v3978 = vld [vmem:[#allocation5 + $0x40] sm:$0xff]
        %v3979 = vld [vmem:[#allocation5 + $0x48] sm:$0xff]
        %v3980 = vld [vmem:[#allocation5 + $0x50] sm:$0xff]
        %v3981 = vld [vmem:[#allocation5 + $0x58] sm:$0xff]
        %v3982 = vld [vmem:[#allocation5 + $0x60] sm:$0xff]
        %v3983 = vld [vmem:[#allocation5 + $0x68] sm:$0xff]
        %v3984 = vld [vmem:[#allocation5 + $0x70] sm:$0xff]
        %v3985 = vld [vmem:[#allocation5 + $0x78] sm:$0xff]
        %v3986 = vld [vmem:[#allocation5 + $0x80] sm:$0xff]
        %v3987 = vld [vmem:[#allocation5 + $0x88] sm:$0xff]
        %v3988 = vld [vmem:[#allocation5 + $0x90] sm:$0xff]
        %v3989 = vld [vmem:[#allocation5 + $0x98] sm:$0xff]
        %v3990 = vld [vmem:[#allocation5 + $0xa0] sm:$0xff]
        %v3991 = vld [vmem:[#allocation5 + $0xa8] sm:$0xff]
        %v3992 = vld [vmem:[#allocation5 + $0xb0] sm:$0xff]
        %v3993 = vld [vmem:[#allocation5 + $0xb8] sm:$0xff]
        %v3994 = vld [vmem:[#allocation5 + $0xc0] sm:$0xff]
        %v3995 = vld [vmem:[#allocation5 + $0xc8] sm:$0xff]
        %v3996 = vld [vmem:[#allocation5 + $0xd0] sm:$0xff]
        %v3997 = vld [vmem:[#allocation5 + $0xd8] sm:$0xff]
        %v3998 = vld [vmem:[#allocation5 + $0xe0] sm:$0xff]
        %v3999 = vld [vmem:[#allocation5 + $0xe8] sm:$0xff]
        %v4000 = vld [vmem:[#allocation5 + $0xf0] sm:$0xff]
        %v4001 = vld [vmem:[#allocation5 + $0xf8] sm:$0xff]
        %v4002 = vld [vmem:[%s3] sm:$0xff]
        %v4003 = vld [vmem:[%s3 + $0x8] sm:$0xff]
        %v4004 = vld [vmem:[%s3 + $0x10] sm:$0xff]
        %v4005 = vld [vmem:[%s3 + $0x18] sm:$0xff]
        %v4006 = vld [vmem:[%s3 + $0x20] sm:$0xff]
        %v4007 = vld [vmem:[%s3 + $0x28] sm:$0xff]
        %v4008 = vld [vmem:[%s3 + $0x30] sm:$0xff]
        %v4009 = vld [vmem:[%s3 + $0x38] sm:$0xff]
        %v4010 = vld [vmem:[%s3 + $0x40] sm:$0xff]
        %v4011 = vld [vmem:[%s4] sm:$0x1]
        %v4013 = vperm.slane %v4011, 0
        %vm4015 = vcmask 588800
        %v4017 = vsel %vm4015, %v3970, 0
        %v4020 = vsel %vm4015, %v3971, 0
        %v4023 = vsel %vm4015, %v3972, 0
        %v4026 = vsel %vm4015, %v3973, 0
        %v4029 = vsel %vm4015, %v3974, 0
        %v4032 = vsel %vm4015, %v3975, 0
        %v4035 = vsel %vm4015, %v3976, 0
        %v4038 = vsel %vm4015, %v3977, 0
        %v4041 = vsel %vm4015, %v3978, 0
        %v4044 = vsel %vm4015, %v3979, 0
        %v4047 = vsel %vm4015, %v3980, 0
        %v4050 = vsel %vm4015, %v3981, 0
        %v4053 = vsel %vm4015, %v3982, 0
        %v4056 = vsel %vm4015, %v3983, 0
        %v4059 = vsel %vm4015, %v3984, 0
        %v4062 = vsel %vm4015, %v3985, 0
        %v4065 = vsel %vm4015, %v3986, 0
        %v4068 = vsel %vm4015, %v3987, 0
        %v4071 = vsel %vm4015, %v3988, 0
        %v4074 = vsel %vm4015, %v3989, 0
        %v4077 = vsel %vm4015, %v3990, 0
        %v4080 = vsel %vm4015, %v3991, 0
        %v4083 = vsel %vm4015, %v3992, 0
        %v4086 = vsel %vm4015, %v3993, 0
        %v4089 = vsel %vm4015, %v3994, 0
        %v4092 = vsel %vm4015, %v3995, 0
        %v4095 = vsel %vm4015, %v3996, 0
        %v4098 = vsel %vm4015, %v3997, 0
        %v4101 = vsel %vm4015, %v3998, 0
        %v4104 = vsel %vm4015, %v3999, 0
        %v4107 = vsel %vm4015, %v4000, 0
        %v4110 = vsel %vm4015, %v4001, 0
        %4112 = vmatpush.msra.mxu0 0.0
        %4113 = vmatpush.msra.mxu0 0.0
        %4114 = vmatpush.msra.mxu0 0.0
        %4115 = vmatpush.msra.mxu0 0.0
        %4116 = vmatpush.msra.mxu0 0.0
        %4117 = vmatpush.msra.mxu0 0.0
        %4118 = vmatpush.msra.mxu0 0.0
        %4119 = vmatpush.msra.mxu0 %v4010
        %4120 = vmatpush.msra.mxu0 %v4009
        %4121 = vmatpush.msra.mxu0 %v4008
        %4122 = vmatpush.msra.mxu0 %v4007
        %4123 = vmatpush.msra.mxu0 %v4006
        %4124 = vmatpush.msra.mxu0 %v4005
        %4125 = vmatpush.msra.mxu0 %v4004
        %4126 = vmatpush.msra.mxu0 %v4003
        %4127 = vmatpush.msra.mxu0 %v4002
        %4128 = vmatmul.f32.gmra.mxu0 %v4017
        %v4129 = vpop.f32.mrf.mxu0
        %v4130 = vadd.f32 %v4013, %v4129
        %4131 = vmatmul.f32.gmra.mxu0 %v4020
        %v4132 = vpop.f32.mrf.mxu0
        %v4133 = vadd.f32 %v4013, %v4132
        %4134 = vmatmul.f32.gmra.mxu0 %v4023
        %v4135 = vpop.f32.mrf.mxu0
        %v4136 = vadd.f32 %v4013, %v4135
        %4137 = vmatmul.f32.gmra.mxu0 %v4026
        %v4138 = vpop.f32.mrf.mxu0
        %v4139 = vadd.f32 %v4013, %v4138
        %4140 = vmatmul.f32.gmra.mxu0 %v4029
        %v4141 = vpop.f32.mrf.mxu0
        %v4142 = vadd.f32 %v4013, %v4141
        %4143 = vmatmul.f32.gmra.mxu0 %v4032
        %v4144 = vpop.f32.mrf.mxu0
        %v4145 = vadd.f32 %v4013, %v4144
        %4146 = vmatmul.f32.gmra.mxu0 %v4035
        %v4147 = vpop.f32.mrf.mxu0
        %v4148 = vadd.f32 %v4013, %v4147
        %4149 = vmatmul.f32.gmra.mxu0 %v4038
        %v4150 = vpop.f32.mrf.mxu0
        %v4151 = vadd.f32 %v4013, %v4150
        %4152 = vmatmul.f32.gmra.mxu0 %v4041
        %v4153 = vpop.f32.mrf.mxu0
        %v4154 = vadd.f32 %v4013, %v4153
        %4155 = vmatmul.f32.gmra.mxu0 %v4044
        %v4156 = vpop.f32.mrf.mxu0
        %v4157 = vadd.f32 %v4013, %v4156
        %4158 = vmatmul.f32.gmra.mxu0 %v4047
        %v4159 = vpop.f32.mrf.mxu0
        %v4160 = vadd.f32 %v4013, %v4159
        %4161 = vmatmul.f32.gmra.mxu0 %v4050
        %v4162 = vpop.f32.mrf.mxu0
        %v4163 = vadd.f32 %v4013, %v4162
        %4164 = vmatmul.f32.gmra.mxu0 %v4053
        %v4165 = vpop.f32.mrf.mxu0
        %v4166 = vadd.f32 %v4013, %v4165
        %4167 = vmatmul.f32.gmra.mxu0 %v4056
        %v4168 = vpop.f32.mrf.mxu0
        %v4169 = vadd.f32 %v4013, %v4168
        %4170 = vmatmul.f32.gmra.mxu0 %v4059
        %v4171 = vpop.f32.mrf.mxu0
        %v4172 = vadd.f32 %v4013, %v4171
        %4173 = vmatmul.f32.gmra.mxu0 %v4062
        %v4174 = vpop.f32.mrf.mxu0
        %v4175 = vadd.f32 %v4013, %v4174
        %4176 = vmatmul.f32.gmra.mxu0 %v4065
        %v4177 = vpop.f32.mrf.mxu0
        %v4178 = vadd.f32 %v4013, %v4177
        %4179 = vmatmul.f32.gmra.mxu0 %v4068
        %v4180 = vpop.f32.mrf.mxu0
        %v4181 = vadd.f32 %v4013, %v4180
        %4182 = vmatmul.f32.gmra.mxu0 %v4071
        %v4183 = vpop.f32.mrf.mxu0
        %v4184 = vadd.f32 %v4013, %v4183
        %4185 = vmatmul.f32.gmra.mxu0 %v4074
        %v4186 = vpop.f32.mrf.mxu0
        %v4187 = vadd.f32 %v4013, %v4186
        %4188 = vmatmul.f32.gmra.mxu0 %v4077
        %v4189 = vpop.f32.mrf.mxu0
        %v4190 = vadd.f32 %v4013, %v4189
        %4191 = vmatmul.f32.gmra.mxu0 %v4080
        %v4192 = vpop.f32.mrf.mxu0
        %v4193 = vadd.f32 %v4013, %v4192
        %4194 = vmatmul.f32.gmra.mxu0 %v4083
        %v4195 = vpop.f32.mrf.mxu0
        %v4196 = vadd.f32 %v4013, %v4195
        %4197 = vmatmul.f32.gmra.mxu0 %v4086
        %v4198 = vpop.f32.mrf.mxu0
        %v4199 = vadd.f32 %v4013, %v4198
        %4200 = vmatmul.f32.gmra.mxu0 %v4089
        %v4201 = vpop.f32.mrf.mxu0
        %v4202 = vadd.f32 %v4013, %v4201
        %4203 = vmatmul.f32.gmra.mxu0 %v4092
        %v4204 = vpop.f32.mrf.mxu0
        %v4205 = vadd.f32 %v4013, %v4204
        %4206 = vmatmul.f32.gmra.mxu0 %v4095
        %v4207 = vpop.f32.mrf.mxu0
        %v4208 = vadd.f32 %v4013, %v4207
        %4209 = vmatmul.f32.gmra.mxu0 %v4098
        %v4210 = vpop.f32.mrf.mxu0
        %v4211 = vadd.f32 %v4013, %v4210
        %4212 = vmatmul.f32.gmra.mxu0 %v4101
        %v4213 = vpop.f32.mrf.mxu0
        %v4214 = vadd.f32 %v4013, %v4213
        %4215 = vmatmul.f32.gmra.mxu0 %v4104
        %v4216 = vpop.f32.mrf.mxu0
        %v4217 = vadd.f32 %v4013, %v4216
        %4218 = vmatmul.f32.gmra.mxu0 %v4107
        %v4219 = vpop.f32.mrf.mxu0
        %v4220 = vadd.f32 %v4013, %v4219
        %4221 = vmatmul.f32.gmra.mxu0 %v4110
        %v4222 = vpop.f32.mrf.mxu0
        %v4223 = vadd.f32 %v4013, %v4222
        %4224 = vdwg.mxu0
        %4225 = vxpose.xlu0.b32.start [1/16] %v4130, 128
        %4226 = vxpose.xlu0.b32.cont [2/16] %v4133, 128
        %4227 = vxpose.xlu0.b32.cont [3/16] %v4136, 128
        %4228 = vxpose.xlu0.b32.cont [4/16] %v4139, 128
        %4229 = vxpose.xlu0.b32.cont [5/16] %v4142, 128
        %4230 = vxpose.xlu0.b32.cont [6/16] %v4145, 128
        %4231 = vxpose.xlu0.b32.cont [7/16] %v4148, 128
        %4232 = vxpose.xlu0.b32.cont [8/16] %v4151, 128
        %4233 = vxpose.xlu0.b32.cont [9/16] %v4154, 128
        %4234 = vxpose.xlu0.b32.cont [10/16] %v4157, 128
        %4235 = vxpose.xlu0.b32.cont [11/16] %v4160, 128
        %4236 = vxpose.xlu0.b32.cont [12/16] %v4163, 128
        %4237 = vxpose.xlu0.b32.cont [13/16] %v4166, 128
        %4238 = vxpose.xlu0.b32.cont [14/16] %v4169, 128
        %4239 = vxpose.xlu0.b32.cont [15/16] %v4172, 128
        %4240 = vxpose.xlu0.b32.end [16/16] %v4175, 128
        %v4241 = vpop.trf.xlu0
        %v4242 = vpop.trf.xlu0
        %v4243 = vpop.trf.xlu0
        %v4244 = vpop.trf.xlu0
        %v4245 = vpop.trf.xlu0
        %v4246 = vpop.trf.xlu0
        %v4247 = vpop.trf.xlu0
        %v4248 = vpop.trf.xlu0
        %v4249 = vpop.trf.xlu0
        %v4250 = vpop.trf.xlu0
        %v4251 = vpop.trf.xlu0
        %v4252 = vpop.trf.xlu0
        %v4253 = vpop.trf.xlu0
        %v4254 = vpop.trf.xlu0
        %v4255 = vpop.trf.xlu0
        %v4256 = vpop.trf.xlu0
        %4257 = vxpose.xlu0.b32.start [1/16] %v4178, 128
        %4258 = vxpose.xlu0.b32.cont [2/16] %v4181, 128
        %4259 = vxpose.xlu0.b32.cont [3/16] %v4184, 128
        %4260 = vxpose.xlu0.b32.cont [4/16] %v4187, 128
        %4261 = vxpose.xlu0.b32.cont [5/16] %v4190, 128
        %4262 = vxpose.xlu0.b32.cont [6/16] %v4193, 128
        %4263 = vxpose.xlu0.b32.cont [7/16] %v4196, 128
        %4264 = vxpose.xlu0.b32.cont [8/16] %v4199, 128
        %4265 = vxpose.xlu0.b32.cont [9/16] %v4202, 128
        %4266 = vxpose.xlu0.b32.cont [10/16] %v4205, 128
        %4267 = vxpose.xlu0.b32.cont [11/16] %v4208, 128
        %4268 = vxpose.xlu0.b32.cont [12/16] %v4211, 128
        %4269 = vxpose.xlu0.b32.cont [13/16] %v4214, 128
        %4270 = vxpose.xlu0.b32.cont [14/16] %v4217, 128
        %4271 = vxpose.xlu0.b32.cont [15/16] %v4220, 128
        %4272 = vxpose.xlu0.b32.end [16/16] %v4223, 128
        %v4273 = vpop.trf.xlu0
        %v4274 = vpop.trf.xlu0
        %v4275 = vpop.trf.xlu0
        %v4276 = vpop.trf.xlu0
        %v4277 = vpop.trf.xlu0
        %v4278 = vpop.trf.xlu0
        %v4279 = vpop.trf.xlu0
        %v4280 = vpop.trf.xlu0
        %v4281 = vpop.trf.xlu0
        %v4282 = vpop.trf.xlu0
        %v4283 = vpop.trf.xlu0
        %v4284 = vpop.trf.xlu0
        %v4285 = vpop.trf.xlu0
        %v4286 = vpop.trf.xlu0
        %v4287 = vpop.trf.xlu0
        %v4288 = vpop.trf.xlu0
        %v4291 = vrot.slane %v4273, 4
        %v4292 = vsel %vm2179, %v4241, %v4291
        %4294 = vst [vmem:[%s217] sm:$0xff] %v4292
        %s4295 = sand.u32 %s137, 1
        %s4296 = scalar_lea.sflag [#allocation7], %s4295
        %s4297 = sand.u32 %s137, 1
        %s4298 = smul.addr %s4297, 8
        %s4299 = scalar_lea.vmem [#allocation6], %s4298
        // Predicated region
        $region41: #{tpu_custom_call.1} parent=39 // pred_check
          %p4300 = pneg %p147
        $region42: #{tpu_custom_call.1} parent=39 // pred_check_branch
          %4302 = sbr.rel (%p4300) target = $region44
        $region43: #{tpu_custom_call.1} parent=39 // pred_region
          %4304 = vsyncadd %s4296, 0
          %s4305 = smul.addr %s19, 2
          %s4306 = smul.addr %s4305, 4
          %s4307 = scalar_lea.hbm %s5, %s4306
          %s4309 = sshll.u32 %s4299, 4
          %s4310 = int_to_ptr.vmem [resolvable:$true] %s4309
          %s4311 = sshll.u32 %s4307, 4
          %s4312 = int_to_ptr.hbm [resolvable:$true] %s4311
          %4314 = dma.vmem_to_hbm [thread:$0]  %s4310, 128, %s4312, %s4296
        $region44: #{tpu_custom_call.1} parent=39 // pred_fallthru
          _
      $region40: #{tpu_custom_call.1} parent=5 // pred_fallthru
        _
      %p4315 = scmp.le.s32.totalorder 2, %s14
      // Predicated region
      $region45: #{tpu_custom_call.1} parent=5 // pred_check
        %p4316 = pneg %p4315
      $region46: #{tpu_custom_call.1} parent=5 // pred_check_branch
        %4318 = sbr.rel (%p4316) target = $region48
      $region47: #{tpu_custom_call.1} parent=5 // pred_region
        %s4319 = ssub.s32 %s14, 2
        // Predicated region
        $region49: #{tpu_custom_call.1} parent=47 // pred_check
          %p4320 = pneg %p153
        $region50: #{tpu_custom_call.1} parent=47 // pred_check_branch
          %4322 = sbr.rel (%p4320) target = $region52
        $region51: #{tpu_custom_call.1} parent=47 // pred_region
          %s4323 = sand.u32 %s138, 1
          %s4324 = scalar_lea.sflag [#allocation7], %s4323
          %s4325 = sand.u32 %s138, 1
          %s4326 = smul.addr %s4325, 8
          %s4327 = scalar_lea.vmem [#allocation6], %s4326
          %4329 = dma.done %s4324, 128
        $region52: #{tpu_custom_call.1} parent=47 // pred_fallthru
          _
      $region48: #{tpu_custom_call.1} parent=5 // pred_fallthru
        _
    $region6: #{tpu_custom_call.1} parent=1 // loop_footer
      %s18 = sadd.s32 1, %s14
    $region7: #{tpu_custom_call.1} parent=1 // loop_footer_branch
      %13 = sbr.rel target = $region3
    $region8: #{tpu_custom_call.1} parent=1 // loop_exit
      _
    %4330 = vsyncpa [#allocation7], 1
    %s4331 = scalar_lea.sflag [#allocation7], 1
    %4332 = vsyncpa %s4331, 1

</llo_original>
